<compile_context>
chip_gen: v7x
topology: tpu7x:2x2x1
jax: 0.10.0
libtpu: 0.0.40
codegen_flags: <defaults>
</compile_context>

<pallas_src>
import functools

import jax
import jax.numpy as jnp
import numpy as np
from jax.experimental import pallas as pl
from jax.experimental.pallas import tpu as pltpu

LN_EPS = 1e-5


# ------------------------------------------------------- hardware-aware config
def _vmem_config():
    cap = 64 * 1024 * 1024                      # conservative default (v7x)
    try:
        info = pltpu.get_tpu_info()
        cap = int(getattr(info, "vmem_capacity_bytes", cap)) or cap
    except Exception:
        pass
    cap = max(cap, 32 * 1024 * 1024)
    # 3/4 of VMEM as the scoped limit (headroom for compiler scratch),
    # 3/8 of VMEM as the budget for the big double-buffered per-step blocks.
    return (cap * 3) // 4, (cap * 3) // 8


_VMEM_LIMIT_BYTES, _VMEM_BLOCK_BUDGET = _vmem_config()

# tri-state: None = untested, True/False = Mosaic in-kernel gather supported.
_GATHER_IN_KERNEL = None


# ---------------------------------------------------------------- math helpers
def _gelu(x):
    # exact (erf-based) GELU, matching torch.nn.GELU() default
    return 0.5 * x * (1.0 + jax.lax.erf(x * 0.7071067811865476))


def _layer_norm(x, g, b):
    mu = jnp.mean(x, axis=-1, keepdims=True)
    var = jnp.mean(jnp.square(x - mu), axis=-1, keepdims=True)
    return (x - mu) * jax.lax.rsqrt(var + LN_EPS) * g + b


def _mm(a, b, dt):
    # MXU matmul; optionally bf16 operands, always f32 accumulation.
    if dt != jnp.float32:
        a = a.astype(dt)
        b = b.astype(dt)
    return jnp.dot(a, b, preferred_element_type=jnp.float32)


def _full_spec(shape):
    n = len(shape)
    return pl.BlockSpec(shape, lambda *_: (0,) * n)


def _round_up(x, m):
    return ((x + m - 1) // m) * m


def _choose_node_tile(M, K, H, *, live_factor=12, max_tile=1024, min_steps=4):
    """Largest node tile (multiple of 8) whose live blocks fit the VMEM budget,
    capped so the parallel grid keeps >= min_steps steps (v7x has 2 TCs)."""
    per_node_bytes = live_factor * K * H * 4
    cap = _VMEM_BLOCK_BUDGET // max(per_node_bytes, 1)
    cap = max(8, min(max_tile, (cap // 8) * 8))
    steps_cap = max(8, _round_up(-(-M // min_steps), 8))
    tn = min(cap, steps_cap, _round_up(M, 8))
    Mp = _round_up(M, tn)
    return tn, Mp


def _pad_rows(x, Mp):
    M = x.shape[0]
    if Mp == M:
        return x
    pad = [(0, Mp - M)] + [(0, 0)] * (x.ndim - 1)
    return jnp.pad(x, pad)


def _gather_rows(hall, idx2d, H):
    """Gather rows of hall (Mp, H) at the flattened indices idx2d (tn, K)."""
    P = idx2d.shape[0] * idx2d.shape[1]
    idx = jnp.broadcast_to(idx2d.reshape(P, 1), (P, H))
    return jnp.take_along_axis(hall, idx, axis=0, mode="promise_in_bounds")


# ---------------------------------------------------------------- kernel 1:
# fused message MLP (pass 1) + mask/K-reduce + norm1 + FFN + norm2 + mask_V + SAE
def _enc_node_body(hV_ref, hE_ref, hVn_flat, ma_ref, mv_ref, w,
                   sae_ref, mid_ref, enc_ref, *, inv_scale, mm_dtype):
    (w1n, w1eg, b1, w2, b2, w3, b3, wdi, bdi, wdo, bdo,
     ln1g, ln1b, ln2g, ln2b, ws1, bs1, ws2, bs2) = w
    tn, K, H = hE_ref.shape
    hV = hV_ref[...]
    ma = ma_ref[...]

    # --- message MLP: W1 split into node rows + fused [edge|neighbor] rows ---
    node_t = _mm(hV, w1n[...], mm_dtype)                            # (tn, H)
    ev = jnp.concatenate([hE_ref[...].reshape(tn * K, H), hVn_flat], axis=-1)
    pre = _mm(ev, w1eg[...], mm_dtype)                              # 2H-deep MXU
    pre = pre.reshape(tn, K, H) + node_t[:, None, :] + b1[...]
    h = _gelu(pre).reshape(tn * K, H)
    h = _gelu(_mm(h, w2[...], mm_dtype) + b2[...])                  # (tn*K, H)

    # --- mask_attend + K-reduce BEFORE W3 (K-fold less MXU work for W3) ------
    hsum = jnp.sum(h.reshape(tn, K, H) * ma[:, :, None], axis=1)    # (tn, H)
    msum = jnp.sum(ma, axis=1, keepdims=True)                       # (tn, 1)
    dh = (_mm(hsum, w3[...], mm_dtype) + msum * b3[...]) * inv_scale

    # --- node update: norm1, FFN, norm2, mask_V (dropout = eval identity) ----
    x = _layer_norm(hV + dh, ln1g[...], ln1b[...])
    hf = _gelu(_mm(x, wdi[...], mm_dtype) + bdi[...])
    x = _layer_norm(x + _mm(hf, wdo[...], mm_dtype) + bdo[...],
                    ln2g[...], ln2b[...])
    x = mv_ref[...] * x
    mid_ref[...] = x

    # --- SAE head: encoded = relu(WS1(x - WS2.bias)); h_V_new = WS2(encoded) -
    enc = jnp.maximum(_mm(x - bs2[...], ws1[...], mm_dtype) + bs1[...], 0.0)
    enc_ref[...] = enc
    sae_ref[...] = _mm(enc, ws2[...], mm_dtype) + bs2[...]


def _enc_node_kernel_gather(hV_ref, hE_ref, eidx_ref, hall_ref, ma_ref, mv_ref,
                            *rest, inv_scale, mm_dtype):
    tn, K, H = hE_ref.shape
    hVn = _gather_rows(hall_ref[...], eidx_ref[...], H)
    _enc_node_body(hV_ref, hE_ref, hVn, ma_ref, mv_ref, rest[:-3], *rest[-3:],
                   inv_scale=inv_scale, mm_dtype=mm_dtype)


def _enc_node_kernel_pregather(hV_ref, hE_ref, hVn_ref, ma_ref, mv_ref,
                               *rest, inv_scale, mm_dtype):
    tn, K, H = hE_ref.shape
    hVn = hVn_ref[...].reshape(tn * K, H)
    _enc_node_body(hV_ref, hE_ref, hVn, ma_ref, mv_ref, rest[:-3], *rest[-3:],
                   inv_scale=inv_scale, mm_dtype=mm_dtype)


def encode_nodes(h_V, h_E, e_idx, mask_attend, mask_V, p, scale, mm_dtype):
    """h_V (M,H), h_E (M,K,H), e_idx (M,K) indices into the flattened node axis."""
    global _GATHER_IN_KERNEL
    M, H = h_V.shape
    K = h_E.shape[1]
    S = p["WS1_w"].shape[1]
    tn, Mp = _choose_node_tile(M, K, H)

    hV = _pad_rows(h_V, Mp)
    hE = _pad_rows(h_E, Mp)
    ma = _pad_rows(mask_attend, Mp)
    mv = _pad_rows(mask_V, Mp)
    ei = _pad_rows(e_idx, Mp)

    wd = jnp.bfloat16 if mm_dtype == jnp.bfloat16 else jnp.float32
    cast = lambda w: w.astype(wd)
    weights = (
        cast(p["W1_w"][:H]), cast(p["W1_w"][H:]), p["W1_b"].reshape(1, -1),
        cast(p["W2_w"]), p["W2_b"].reshape(1, -1),
        cast(p["W3_w"]), p["W3_b"].reshape(1, -1),
        cast(p["Wd_in"]), p["Wd_in_b"].reshape(1, -1),
        cast(p["Wd_out"]), p["Wd_out_b"].reshape(1, -1),
        p["ln1_g"].reshape(1, -1), p["ln1_b"].reshape(1, -1),
        p["ln2_g"].reshape(1, -1), p["ln2_b"].reshape(1, -1),
        cast(p["WS1_w"]), p["WS1_b"].reshape(1, -1),
        cast(p["WS2_w"]), p["WS2_b"].reshape(1, -1),
    )
    w_specs = [_full_spec(w.shape) for w in weights]

    out_shape = (jax.ShapeDtypeStruct((Mp, H), jnp.float32),
                 jax.ShapeDtypeStruct((Mp, H), jnp.float32),
                 jax.ShapeDtypeStruct((Mp, S), jnp.float32))
    out_specs = [pl.BlockSpec((tn, H), lambda i: (i, 0)),
                 pl.BlockSpec((tn, H), lambda i: (i, 0)),
                 pl.BlockSpec((tn, S), lambda i: (i, 0))]

    def call(in_kernel_gather):
        if in_kernel_gather:
            kernel = _enc_node_kernel_gather
            data = (hV, hE, ei, hV, ma, mv)
            data_specs = [pl.BlockSpec((tn, H), lambda i: (i, 0)),
                          pl.BlockSpec((tn, K, H), lambda i: (i, 0, 0)),
                          pl.BlockSpec((tn, K), lambda i: (i, 0)),
                          _full_spec((Mp, H)),
                          pl.BlockSpec((tn, K), lambda i: (i, 0)),
                          pl.BlockSpec((tn, 1), lambda i: (i, 0))]
        else:
            kernel = _enc_node_kernel_pregather
            hVn = _pad_rows(
                jnp.take(h_V, e_idx.reshape(-1), axis=0).reshape(M, K, H), Mp)
            data = (hV, hE, hVn, ma, mv)
            data_specs = [pl.BlockSpec((tn, H), lambda i: (i, 0)),
                          pl.BlockSpec((tn, K, H), lambda i: (i, 0, 0)),
                          pl.BlockSpec((tn, K, H), lambda i: (i, 0, 0)),
                          pl.BlockSpec((tn, K), lambda i: (i, 0)),
                          pl.BlockSpec((tn, 1), lambda i: (i, 0))]
        fn = pl.pallas_call(
            functools.partial(kernel, inv_scale=1.0 / float(scale),
                              mm_dtype=mm_dtype),
            out_shape=out_shape,
            grid_spec=pltpu.PrefetchScalarGridSpec(
                num_scalar_prefetch=0, grid=(Mp // tn,),
                in_specs=data_specs + w_specs, out_specs=out_specs),
            compiler_params=pltpu.CompilerParams(
                dimension_semantics=("parallel",),
                vmem_limit_bytes=_VMEM_LIMIT_BYTES))
        return fn(*data, *weights)

    if _GATHER_IN_KERNEL is not False:
        try:
            out = jax.block_until_ready(call(True))
            _GATHER_IN_KERNEL = True
            return tuple(o[:M] for o in out)
        except Exception:
            _GATHER_IN_KERNEL = False
    out = call(False)
    return tuple(o[:M] for o in out)


# ---------------------------------------------------------------- kernel 2:
# fused message MLP (pass 2, no mask) + residual + LayerNorm3 for the edges
def _edge_body(hV_ref, hE_ref, hVn_flat, w, out_ref, *, mm_dtype):
    (w1n, w1eg, b1, w2, b2, w3, b3, ln3g, ln3b) = w
    tn, K, H = hE_ref.shape
    hE = hE_ref[...]
    node_t = _mm(hV_ref[...], w1n[...], mm_dtype)
    ev = jnp.concatenate([hE.reshape(tn * K, H), hVn_flat], axis=-1)
    pre = _mm(ev, w1eg[...], mm_dtype)
    pre = pre.reshape(tn, K, H) + node_t[:, None, :] + b1[...]
    h = _gelu(pre).reshape(tn * K, H)
    h = _gelu(_mm(h, w2[...], mm_dtype) + b2[...])
    msg = (_mm(h, w3[...], mm_dtype) + b3[...]).reshape(tn, K, H)
    out_ref[...] = _layer_norm(hE + msg, ln3g[...], ln3b[...])


def _edge_kernel_gather(hV_ref, hE_ref, eidx_ref, hall_ref, *rest, mm_dtype):
    tn, K, H = hE_ref.shape
    hVn = _gather_rows(hall_ref[...], eidx_ref[...], H)
    _edge_body(hV_ref, hE_ref, hVn, rest[:-1], rest[-1], mm_dtype=mm_dtype)


def _edge_kernel_pregather(hV_ref, hE_ref, hVn_ref, *rest, mm_dtype):
    tn, K, H = hE_ref.shape
    hVn = hVn_ref[...].reshape(tn * K, H)
    _edge_body(hV_ref, hE_ref, hVn, rest[:-1], rest[-1], mm_dtype=mm_dtype)


def update_edges(h_V_mid, h_E, e_idx, p, mm_dtype):
    global _GATHER_IN_KERNEL
    M, H = h_V_mid.shape
    K = h_E.shape[1]
    tn, Mp = _choose_node_tile(M, K, H)

    hV = _pad_rows(h_V_mid, Mp)
    hE = _pad_rows(h_E, Mp)
    ei = _pad_rows(e_idx, Mp)

    wd = jnp.bfloat16 if mm_dtype == jnp.bfloat16 else jnp.float32
    cast = lambda w: w.astype(wd)
    weights = (
        cast(p["W11_w"][:H]), cast(p["W11_w"][H:]), p["W11_b"].reshape(1, -1),
        cast(p["W12_w"]), p["W12_b"].reshape(1, -1),
        cast(p["W13_w"]), p["W13_b"].reshape(1, -1),
        p["ln3_g"].reshape(1, -1), p["ln3_b"].reshape(1, -1),
    )
    w_specs = [_full_spec(w.shape) for w in weights]
    out_shape = jax.ShapeDtypeStruct((Mp, K, H), jnp.float32)
    out_spec = pl.BlockSpec((tn, K, H), lambda i: (i, 0, 0))

    def call(in_kernel_gather):
        if in_kernel_gather:
            kernel = _edge_kernel_gather
            data = (hV, hE, ei, hV)
            data_specs = [pl.BlockSpec((tn, H), lambda i: (i, 0)),
                          pl.BlockSpec((tn, K, H), lambda i: (i, 0, 0)),
                          pl.BlockSpec((tn, K), lambda i: (i, 0)),
                          _full_spec((Mp, H))]
        else:
            kernel = _edge_kernel_pregather
            hVn = _pad_rows(
                jnp.take(h_V_mid, e_idx.reshape(-1), axis=0).reshape(M, K, H),
                Mp)
            data = (hV, hE, hVn)
            data_specs = [pl.BlockSpec((tn, H), lambda i: (i, 0)),
                          pl.BlockSpec((tn, K, H), lambda i: (i, 0, 0)),
                          pl.BlockSpec((tn, K, H), lambda i: (i, 0, 0))]
        fn = pl.pallas_call(
            functools.partial(kernel, mm_dtype=mm_dtype),
            out_shape=out_shape,
            grid_spec=pltpu.PrefetchScalarGridSpec(
                num_scalar_prefetch=0, grid=(Mp // tn,),
                in_specs=data_specs + w_specs, out_specs=out_spec),
            compiler_params=pltpu.CompilerParams(
                dimension_semantics=("parallel",),
                vmem_limit_bytes=_VMEM_LIMIT_BYTES))
        return fn(*data, *weights)

    if _GATHER_IN_KERNEL is not False:
        try:
            out = jax.block_until_ready(call(True))
            _GATHER_IN_KERNEL = True
            return out[:M]
        except Exception:
            _GATHER_IN_KERNEL = False
    return call(False)[:M]


# ---------------------------------------------------------------- JAX glue
def gather_nodes(nodes, neighbor_idx):
    # nodes [B, N, C], neighbor_idx [B, N, K] -> [B, N, K, C] (torch.gather sem.)
    B, N, C = nodes.shape
    K = neighbor_idx.shape[2]
    idx = jnp.broadcast_to(neighbor_idx.reshape(B, N * K, 1), (B, N * K, C))
    gathered = jnp.take_along_axis(nodes, idx, axis=1)
    return gathered.reshape(B, N, K, C)


def enc_layer_forward(p, h_V, h_E, E_idx, mask_V=None, mask_attend=None,
                      scale=30.0, mm_dtype=jnp.bfloat16):
    B, N, H = h_V.shape
    K = E_idx.shape[2]
    S = p["WS1_w"].shape[1]
    M = B * N
    if mask_V is None:
        mask_V = jnp.ones((B, N), jnp.float32)
    if mask_attend is None:
        mask_attend = jnp.ones((B, N, K), jnp.float32)

    # flatten batch; offset neighbor indices into the flattened node axis
    e_idx = (E_idx + (jnp.arange(B, dtype=E_idx.dtype) * N)[:, None, None])
    e_idx = e_idx.reshape(M, K)
    hV_flat = h_V.reshape(M, H)
    hE_flat = h_E.reshape(M, K, H)

    # ---- fused message pass 1 + node update + SAE head
    hV_sae, hV_mid, encoded = encode_nodes(
        hV_flat, hE_flat, e_idx, mask_attend.reshape(M, K),
        mask_V.reshape(M, 1), p, scale, mm_dtype)

    # ---- fused message pass 2 + edge residual / LayerNorm3
    h_E_new = update_edges(hV_mid, hE_flat, e_idx, p, mm_dtype)

    return (hV_sae.reshape(B, N, H), h_E_new.reshape(B, N, K, H),
            hV_mid.reshape(B, N, H), encoded.reshape(B, N, S))


# ---------------------------------------------------------------- params
def init_params(key, H, num_in):
    keys = jax.random.split(key, 10)

    def lin(k, din, dout):
        # torch.nn.Linear default init; weights stored [in, out] (pre-transposed)
        k1, k2 = jax.random.split(k)
        bound = 1.0 / np.sqrt(din)
        w = jax.random.uniform(k1, (din, dout), jnp.float32, -bound, bound)
        b = jax.random.uniform(k2, (dout,), jnp.float32, -bound, bound)
        return w, b

    p = {}
    p["W1_w"], p["W1_b"] = lin(keys[0], H + num_in, H)
    p["W2_w"], p["W2_b"] = lin(keys[1], H, H)
    p["W3_w"], p["W3_b"] = lin(keys[2], H, H)
    p["W11_w"], p["W11_b"] = lin(keys[3], H + num_in, H)
    p["W12_w"], p["W12_b"] = lin(keys[4], H, H)
    p["W13_w"], p["W13_b"] = lin(keys[5], H, H)
    p["Wd_in"], p["Wd_in_b"] = lin(keys[6], H, 4 * H)
    p["Wd_out"], p["Wd_out_b"] = lin(keys[7], 4 * H, H)
    p["WS1_w"], p["WS1_b"] = lin(keys[8], H, 8 * H)
    p["WS2_w"], p["WS2_b"] = lin(keys[9], 8 * H, H)
    for i in (1, 2, 3):
        p[f"ln{i}_g"] = jnp.ones((H,), jnp.float32)
        p[f"ln{i}_b"] = jnp.zeros((H,), jnp.float32)
    return p


# ---------------------------------------------------------------- reference
def reference_forward(p, h_V, h_E, E_idx, mask_V, mask_attend, scale=30.0):
    B, N, H = h_V.shape
    K = E_idx.shape[2]
    lin = lambda x, w, b: x @ w + b
    h_EV = jnp.concatenate([jnp.broadcast_to(h_V[:, :, None, :], (B, N, K, H)),
                            h_E, gather_nodes(h_V, E_idx)], -1)
    hm = lin(_gelu(lin(_gelu(lin(h_EV, p["W1_w"], p["W1_b"])),
                       p["W2_w"], p["W2_b"])), p["W3_w"], p["W3_b"])
    hm = mask_attend[..., None] * hm
    dh = jnp.sum(hm, -2) / scale
    hV = _layer_norm(h_V + dh, p["ln1_g"], p["ln1_b"])
    dh = lin(_gelu(lin(hV, p["Wd_in"], p["Wd_in_b"])), p["Wd_out"], p["Wd_out_b"])
    hV = _layer_norm(hV + dh, p["ln2_g"], p["ln2_b"])
    hV = mask_V[..., None] * hV
    h_EV = jnp.concatenate([jnp.broadcast_to(hV[:, :, None, :], (B, N, K, H)),
                            h_E, gather_nodes(hV, E_idx)], -1)
    hm2 = lin(_gelu(lin(_gelu(lin(h_EV, p["W11_w"], p["W11_b"])),
                        p["W12_w"], p["W12_b"])), p["W13_w"], p["W13_b"])
    hE = _layer_norm(h_E + hm2, p["ln3_g"], p["ln3_b"])
    enc = jnp.maximum(lin(hV - p["WS2_b"], p["WS1_w"], p["WS1_b"]), 0.0)
    hV_new = lin(enc, p["WS2_w"], p["WS2_b"])
    return hV_new, hE, hV, enc


# ---------------------------------------------------------------- main
if __name__ == "__main__":
    H = 128          # ProteinMPNN hidden_dim (lane-dense outputs)
    num_in = 2 * H   # edge features (H) + gathered node features (H)
    B, N, K = 2, 16, 8

    key = jax.random.PRNGKey(0)
    kp, kv, ke, ki, km1, km2 = jax.random.split(key, 6)
    params = init_params(kp, H, num_in)

    h_V = jax.random.normal(kv, (B, N, H), jnp.float32)
    h_E = jax.random.normal(ke, (B, N, K, H), jnp.float32)
    E_idx = jax.random.randint(ki, (B, N, K), 0, N, jnp.int32)
    mask_V = (jax.random.uniform(km1, (B, N)) > 0.2).astype(jnp.float32)
    mask_attend = (jax.random.uniform(km2, (B, N, K)) > 0.2).astype(jnp.float32)

    refs = reference_forward(params, h_V, h_E, E_idx, mask_V, mask_attend)

    # exact-math check: f32 matmul path vs. f32 reference, tight tolerance
    outs = jax.block_until_ready(enc_layer_forward(
        params, h_V, h_E, E_idx, mask_V, mask_attend, mm_dtype=jnp.float32))
    for o, r in zip(outs, refs):
        np.testing.assert_allclose(np.asarray(o), np.asarray(r),
                                   rtol=5e-4, atol=5e-4)

    # default fast path: bf16 MXU operands with f32 accumulation
    outs = jax.block_until_ready(enc_layer_forward(
        params, h_V, h_E, E_idx, mask_V, mask_attend))
    for o, r in zip(outs, refs):
        np.testing.assert_allclose(np.asarray(o), np.asarray(r),
                                   rtol=8e-2, atol=8e-2)

    print("KERNEL_OK")
</pallas_src>

<mosaic_0001>
module attributes {stable_mosaic.version = 11 : i64} {
  func.func @_enc_node_kernel_gather(%arg0: i32, %arg1: memref<8x128xf32, #tpu.memory_space<vmem>>, %arg2: memref<8x8x128xf32, #tpu.memory_space<vmem>>, %arg3: memref<8x8xi32, #tpu.memory_space<vmem>>, %arg4: memref<32x128xf32, #tpu.memory_space<vmem>>, %arg5: memref<8x8xf32, #tpu.memory_space<vmem>>, %arg6: memref<8x1xf32, #tpu.memory_space<vmem>>, %arg7: memref<128x128xf32, #tpu.memory_space<vmem>>, %arg8: memref<256x128xf32, #tpu.memory_space<vmem>>, %arg9: memref<1x128xf32, #tpu.memory_space<vmem>>, %arg10: memref<128x128xf32, #tpu.memory_space<vmem>>, %arg11: memref<1x128xf32, #tpu.memory_space<vmem>>, %arg12: memref<128x128xf32, #tpu.memory_space<vmem>>, %arg13: memref<1x128xf32, #tpu.memory_space<vmem>>, %arg14: memref<128x512xf32, #tpu.memory_space<vmem>>, %arg15: memref<1x512xf32, #tpu.memory_space<vmem>>, %arg16: memref<512x128xf32, #tpu.memory_space<vmem>>, %arg17: memref<1x128xf32, #tpu.memory_space<vmem>>, %arg18: memref<1x128xf32, #tpu.memory_space<vmem>>, %arg19: memref<1x128xf32, #tpu.memory_space<vmem>>, %arg20: memref<1x128xf32, #tpu.memory_space<vmem>>, %arg21: memref<1x128xf32, #tpu.memory_space<vmem>>, %arg22: memref<128x1024xf32, #tpu.memory_space<vmem>>, %arg23: memref<1x1024xf32, #tpu.memory_space<vmem>>, %arg24: memref<1024x128xf32, #tpu.memory_space<vmem>>, %arg25: memref<1x128xf32, #tpu.memory_space<vmem>>, %arg26: memref<8x128xf32, #tpu.memory_space<vmem>>, %arg27: memref<8x128xf32, #tpu.memory_space<vmem>>, %arg28: memref<8x1024xf32, #tpu.memory_space<vmem>>) attributes {dimension_semantics = [#tpu.dimension_semantics<parallel>], iteration_bounds = array<i64: 4>, scalar_prefetch = 0 : i64, scratch_operands = 0 : i64, tpu.core_type = #tpu.core_type<tc>, window_params = [{transform_indices = @transform_0, window_bounds = array<i64: 8, 128>}, {transform_indices = @transform_1, window_bounds = array<i64: 8, 8, 128>}, {transform_indices = @transform_2, window_bounds = array<i64: 8, 8>}, {pipeline_mode = #tpu.pipeline_mode<synchronous>, transform_indices = @transform_3, window_bounds = array<i64: 32, 128>}, {transform_indices = @transform_4, window_bounds = array<i64: 8, 8>}, {transform_indices = @transform_5, window_bounds = array<i64: 8, 1>}, {pipeline_mode = #tpu.pipeline_mode<synchronous>, transform_indices = @transform_6, window_bounds = array<i64: 128, 128>}, {pipeline_mode = #tpu.pipeline_mode<synchronous>, transform_indices = @transform_7, window_bounds = array<i64: 256, 128>}, {pipeline_mode = #tpu.pipeline_mode<synchronous>, transform_indices = @transform_8, window_bounds = array<i64: 1, 128>}, {pipeline_mode = #tpu.pipeline_mode<synchronous>, transform_indices = @transform_9, window_bounds = array<i64: 128, 128>}, {pipeline_mode = #tpu.pipeline_mode<synchronous>, transform_indices = @transform_10, window_bounds = array<i64: 1, 128>}, {pipeline_mode = #tpu.pipeline_mode<synchronous>, transform_indices = @transform_11, window_bounds = array<i64: 128, 128>}, {pipeline_mode = #tpu.pipeline_mode<synchronous>, transform_indices = @transform_12, window_bounds = array<i64: 1, 128>}, {pipeline_mode = #tpu.pipeline_mode<synchronous>, transform_indices = @transform_13, window_bounds = array<i64: 128, 512>}, {pipeline_mode = #tpu.pipeline_mode<synchronous>, transform_indices = @transform_14, window_bounds = array<i64: 1, 512>}, {pipeline_mode = #tpu.pipeline_mode<synchronous>, transform_indices = @transform_15, window_bounds = array<i64: 512, 128>}, {pipeline_mode = #tpu.pipeline_mode<synchronous>, transform_indices = @transform_16, window_bounds = array<i64: 1, 128>}, {pipeline_mode = #tpu.pipeline_mode<synchronous>, transform_indices = @transform_17, window_bounds = array<i64: 1, 128>}, {pipeline_mode = #tpu.pipeline_mode<synchronous>, transform_indices = @transform_18, window_bounds = array<i64: 1, 128>}, {pipeline_mode = #tpu.pipeline_mode<synchronous>, transform_indices = @transform_19, window_bounds = array<i64: 1, 128>}, {pipeline_mode = #tpu.pipeline_mode<synchronous>, transform_indices = @transform_20, window_bounds = array<i64: 1, 128>}, {pipeline_mode = #tpu.pipeline_mode<synchronous>, transform_indices = @transform_21, window_bounds = array<i64: 128, 1024>}, {pipeline_mode = #tpu.pipeline_mode<synchronous>, transform_indices = @transform_22, window_bounds = array<i64: 1, 1024>}, {pipeline_mode = #tpu.pipeline_mode<synchronous>, transform_indices = @transform_23, window_bounds = array<i64: 1024, 128>}, {pipeline_mode = #tpu.pipeline_mode<synchronous>, transform_indices = @transform_24, window_bounds = array<i64: 1, 128>}, {transform_indices = @transform_25, window_bounds = array<i64: 8, 128>}, {transform_indices = @transform_26, window_bounds = array<i64: 8, 128>}, {transform_indices = @transform_27, window_bounds = array<i64: 8, 1024>}]} {
    %c0 = arith.constant 0 : index
    %c0_0 = arith.constant 0 : index
    %0 = vector.load %arg4[%c0, %c0_0] : memref<32x128xf32, #tpu.memory_space<vmem>>, vector<32x128xf32>
    %c0_1 = arith.constant 0 : index
    %c0_2 = arith.constant 0 : index
    %1 = vector.load %arg3[%c0_1, %c0_2] : memref<8x8xi32, #tpu.memory_space<vmem>>, vector<8x8xi32>
    %2 = vector.shape_cast %1 : vector<8x8xi32> to vector<64x1xi32>
    %3 = vector.shape_cast %2 : vector<64x1xi32> to vector<64x1xi32>
    %4 = vector.broadcast %3 : vector<64x1xi32> to vector<64x128xi32>
    %5 = vector.shape_cast %4 : vector<64x128xi32> to vector<64x128x1xi32>
    %6 = vector.shape_cast %5 : vector<64x128x1xi32> to vector<64x128xi32>
    %7 = tpu.dynamic_gather %0[%6] in [0] : vector<32x128xf32>, vector<64x128xi32> -> vector<64x128xf32>
    %c0_3 = arith.constant 0 : index
    %c0_4 = arith.constant 0 : index
    %8 = vector.load %arg1[%c0_3, %c0_4] : memref<8x128xf32, #tpu.memory_space<vmem>>, vector<8x128xf32>
    %c0_5 = arith.constant 0 : index
    %c0_6 = arith.constant 0 : index
    %9 = vector.load %arg5[%c0_5, %c0_6] : memref<8x8xf32, #tpu.memory_space<vmem>>, vector<8x8xf32>
    %c0_7 = arith.constant 0 : index
    %c0_8 = arith.constant 0 : index
    %10 = vector.load %arg7[%c0_7, %c0_8] : memref<128x128xf32, #tpu.memory_space<vmem>>, vector<128x128xf32>
    %cst = arith.constant dense<0.000000e+00> : vector<8x128xf32>
    %11 = tpu.matmul %8, %10, %cst {dimension_numbers = #tpu.dot_dimension_numbers<[1], [0], [0], [1], [0, 0, 1, 1], [], []>} : vector<8x128xf32>, vector<128x128xf32>, vector<8x128xf32> -> vector<8x128xf32>
    %c0_9 = arith.constant 0 : index
    %c0_10 = arith.constant 0 : index
    %c0_11 = arith.constant 0 : index
    %12 = vector.load %arg2[%c0_9, %c0_10, %c0_11] : memref<8x8x128xf32, #tpu.memory_space<vmem>>, vector<8x8x128xf32>
    %13 = vector.shape_cast %12 : vector<8x8x128xf32> to vector<64x128xf32>
    %14 = tpu.concatenate %13, %7 in 1 : vector<64x128xf32>, vector<64x128xf32> -> vector<64x256xf32>
    %c0_12 = arith.constant 0 : index
    %c0_13 = arith.constant 0 : index
    %15 = vector.load %arg8[%c0_12, %c0_13] : memref<256x128xf32, #tpu.memory_space<vmem>>, vector<256x128xf32>
    %cst_14 = arith.constant dense<0.000000e+00> : vector<64x128xf32>
    %16 = tpu.matmul %14, %15, %cst_14 {dimension_numbers = #tpu.dot_dimension_numbers<[1], [0], [0], [1], [0, 0, 1, 1], [], []>} : vector<64x256xf32>, vector<256x128xf32>, vector<64x128xf32> -> vector<64x128xf32>
    %17 = vector.shape_cast %16 : vector<64x128xf32> to vector<8x8x128xf32>
    %18 = vector.shape_cast %11 : vector<8x128xf32> to vector<8x1x128xf32>
    %19 = vector.broadcast %18 : vector<8x1x128xf32> to vector<8x8x128xf32>
    %20 = arith.addf %17, %19 : vector<8x8x128xf32>
    %c0_15 = arith.constant 0 : index
    %c0_16 = arith.constant 0 : index
    %21 = vector.load %arg9[%c0_15, %c0_16] : memref<1x128xf32, #tpu.memory_space<vmem>>, vector<1x128xf32>
    %22 = vector.shape_cast %21 : vector<1x128xf32> to vector<1x1x128xf32>
    %23 = vector.broadcast %22 : vector<1x1x128xf32> to vector<8x8x128xf32>
    %24 = arith.addf %20, %23 : vector<8x8x128xf32>
    %cst_17 = arith.constant 5.000000e-01 : f32
    %25 = vector.broadcast %cst_17 : f32 to vector<8x8x128xf32>
    %26 = arith.mulf %25, %24 : vector<8x8x128xf32>
    %cst_18 = arith.constant 0.707106769 : f32
    %27 = vector.broadcast %cst_18 : f32 to vector<8x8x128xf32>
    %28 = arith.mulf %24, %27 : vector<8x8x128xf32>
    %29 = math.erf %28 : vector<8x8x128xf32>
    %cst_19 = arith.constant 1.000000e+00 : f32
    %30 = vector.broadcast %cst_19 : f32 to vector<8x8x128xf32>
    %31 = arith.addf %30, %29 : vector<8x8x128xf32>
    %32 = arith.mulf %26, %31 : vector<8x8x128xf32>
    %33 = vector.shape_cast %32 : vector<8x8x128xf32> to vector<64x128xf32>
    %c0_20 = arith.constant 0 : index
    %c0_21 = arith.constant 0 : index
    %34 = vector.load %arg10[%c0_20, %c0_21] : memref<128x128xf32, #tpu.memory_space<vmem>>, vector<128x128xf32>
    %cst_22 = arith.constant dense<0.000000e+00> : vector<64x128xf32>
    %35 = tpu.matmul %33, %34, %cst_22 {dimension_numbers = #tpu.dot_dimension_numbers<[1], [0], [0], [1], [0, 0, 1, 1], [], []>} : vector<64x128xf32>, vector<128x128xf32>, vector<64x128xf32> -> vector<64x128xf32>
    %c0_23 = arith.constant 0 : index
    %c0_24 = arith.constant 0 : index
    %36 = vector.load %arg11[%c0_23, %c0_24] : memref<1x128xf32, #tpu.memory_space<vmem>>, vector<1x128xf32>
    %37 = vector.broadcast %36 : vector<1x128xf32> to vector<64x128xf32>
    %38 = arith.addf %35, %37 : vector<64x128xf32>
    %cst_25 = arith.constant 5.000000e-01 : f32
    %39 = vector.broadcast %cst_25 : f32 to vector<64x128xf32>
    %40 = arith.mulf %39, %38 : vector<64x128xf32>
    %cst_26 = arith.constant 0.707106769 : f32
    %41 = vector.broadcast %cst_26 : f32 to vector<64x128xf32>
    %42 = arith.mulf %38, %41 : vector<64x128xf32>
    %43 = math.erf %42 : vector<64x128xf32>
    %cst_27 = arith.constant 1.000000e+00 : f32
    %44 = vector.broadcast %cst_27 : f32 to vector<64x128xf32>
    %45 = arith.addf %44, %43 : vector<64x128xf32>
    %46 = arith.mulf %40, %45 : vector<64x128xf32>
    %47 = vector.shape_cast %46 : vector<64x128xf32> to vector<8x8x128xf32>
    %48 = vector.shape_cast %9 : vector<8x8xf32> to vector<8x8x1xf32>
    %49 = vector.broadcast %48 : vector<8x8x1xf32> to vector<8x8x128xf32>
    %50 = arith.mulf %47, %49 : vector<8x8x128xf32>
    %cst_28 = arith.constant dense<0.000000e+00> : vector<8x128xf32>
    %51 = vector.multi_reduction <add>, %50, %cst_28 [1] : vector<8x8x128xf32> to vector<8x128xf32>
    %cst_29 = arith.constant dense<0.000000e+00> : vector<8xf32>
    %52 = vector.multi_reduction <add>, %9, %cst_29 [1] : vector<8x8xf32> to vector<8xf32>
    %53 = vector.shape_cast %52 : vector<8xf32> to vector<8x1xf32>
    %c0_30 = arith.constant 0 : index
    %c0_31 = arith.constant 0 : index
    %54 = vector.load %arg12[%c0_30, %c0_31] : memref<128x128xf32, #tpu.memory_space<vmem>>, vector<128x128xf32>
    %cst_32 = arith.constant dense<0.000000e+00> : vector<8x128xf32>
    %55 = tpu.matmul %51, %54, %cst_32 {dimension_numbers = #tpu.dot_dimension_numbers<[1], [0], [0], [1], [0, 0, 1, 1], [], []>} : vector<8x128xf32>, vector<128x128xf32>, vector<8x128xf32> -> vector<8x128xf32>
    %c0_33 = arith.constant 0 : index
    %c0_34 = arith.constant 0 : index
    %56 = vector.load %arg13[%c0_33, %c0_34] : memref<1x128xf32, #tpu.memory_space<vmem>>, vector<1x128xf32>
    %57 = vector.broadcast %53 : vector<8x1xf32> to vector<8x128xf32>
    %58 = vector.broadcast %56 : vector<1x128xf32> to vector<8x128xf32>
    %59 = arith.mulf %57, %58 : vector<8x128xf32>
    %60 = arith.addf %55, %59 : vector<8x128xf32>
    %cst_35 = arith.constant 0.0333333351 : f32
    %61 = vector.broadcast %cst_35 : f32 to vector<8x128xf32>
    %62 = arith.mulf %60, %61 : vector<8x128xf32>
    %63 = arith.addf %8, %62 : vector<8x128xf32>
    %c0_36 = arith.constant 0 : index
    %c0_37 = arith.constant 0 : index
    %64 = vector.load %arg18[%c0_36, %c0_37] : memref<1x128xf32, #tpu.memory_space<vmem>>, vector<1x128xf32>
    %c0_38 = arith.constant 0 : index
    %c0_39 = arith.constant 0 : index
    %65 = vector.load %arg19[%c0_38, %c0_39] : memref<1x128xf32, #tpu.memory_space<vmem>>, vector<1x128xf32>
    %cst_40 = arith.constant dense<0.000000e+00> : vector<8xf32>
    %66 = vector.multi_reduction <add>, %63, %cst_40 [1] : vector<8x128xf32> to vector<8xf32>
    %67 = vector.shape_cast %66 : vector<8xf32> to vector<8x1xf32>
    %cst_41 = arith.constant 1.280000e+02 : f32
    %68 = vector.broadcast %cst_41 : f32 to vector<8x1xf32>
    %69 = arith.divf %67, %68 : vector<8x1xf32>
    %70 = vector.broadcast %69 : vector<8x1xf32> to vector<8x128xf32>
    %71 = arith.subf %63, %70 : vector<8x128xf32>
    %72 = arith.mulf %71, %71 : vector<8x128xf32>
    %cst_42 = arith.constant dense<0.000000e+00> : vector<8xf32>
    %73 = vector.multi_reduction <add>, %72, %cst_42 [1] : vector<8x128xf32> to vector<8xf32>
    %74 = vector.shape_cast %73 : vector<8xf32> to vector<8x1xf32>
    %cst_43 = arith.constant 1.280000e+02 : f32
    %75 = vector.broadcast %cst_43 : f32 to vector<8x1xf32>
    %76 = arith.divf %74, %75 : vector<8x1xf32>
    %77 = vector.broadcast %69 : vector<8x1xf32> to vector<8x128xf32>
    %78 = arith.subf %63, %77 : vector<8x128xf32>
    %cst_44 = arith.constant 9.99999974E-6 : f32
    %79 = vector.broadcast %cst_44 : f32 to vector<8x1xf32>
    %80 = arith.addf %76, %79 : vector<8x1xf32>
    %81 = math.rsqrt %80 : vector<8x1xf32>
    %82 = vector.broadcast %81 : vector<8x1xf32> to vector<8x128xf32>
    %83 = arith.mulf %78, %82 : vector<8x128xf32>
    %84 = vector.broadcast %64 : vector<1x128xf32> to vector<8x128xf32>
    %85 = arith.mulf %83, %84 : vector<8x128xf32>
    %86 = vector.broadcast %65 : vector<1x128xf32> to vector<8x128xf32>
    %87 = arith.addf %85, %86 : vector<8x128xf32>
    %c0_45 = arith.constant 0 : index
    %c0_46 = arith.constant 0 : index
    %88 = vector.load %arg14[%c0_45, %c0_46] : memref<128x512xf32, #tpu.memory_space<vmem>>, vector<128x512xf32>
    %cst_47 = arith.constant dense<0.000000e+00> : vector<8x512xf32>
    %89 = tpu.matmul %87, %88, %cst_47 {dimension_numbers = #tpu.dot_dimension_numbers<[1], [0], [0], [1], [0, 0, 1, 1], [], []>} : vector<8x128xf32>, vector<128x512xf32>, vector<8x512xf32> -> vector<8x512xf32>
    %c0_48 = arith.constant 0 : index
    %c0_49 = arith.constant 0 : index
    %90 = vector.load %arg15[%c0_48, %c0_49] : memref<1x512xf32, #tpu.memory_space<vmem>>, vector<1x512xf32>
    %91 = vector.broadcast %90 : vector<1x512xf32> to vector<8x512xf32>
    %92 = arith.addf %89, %91 : vector<8x512xf32>
    %cst_50 = arith.constant 5.000000e-01 : f32
    %93 = vector.broadcast %cst_50 : f32 to vector<8x512xf32>
    %94 = arith.mulf %93, %92 : vector<8x512xf32>
    %cst_51 = arith.constant 0.707106769 : f32
    %95 = vector.broadcast %cst_51 : f32 to vector<8x512xf32>
    %96 = arith.mulf %92, %95 : vector<8x512xf32>
    %97 = math.erf %96 : vector<8x512xf32>
    %cst_52 = arith.constant 1.000000e+00 : f32
    %98 = vector.broadcast %cst_52 : f32 to vector<8x512xf32>
    %99 = arith.addf %98, %97 : vector<8x512xf32>
    %100 = arith.mulf %94, %99 : vector<8x512xf32>
    %c0_53 = arith.constant 0 : index
    %c0_54 = arith.constant 0 : index
    %101 = vector.load %arg16[%c0_53, %c0_54] : memref<512x128xf32, #tpu.memory_space<vmem>>, vector<512x128xf32>
    %cst_55 = arith.constant dense<0.000000e+00> : vector<8x128xf32>
    %102 = tpu.matmul %100, %101, %cst_55 {dimension_numbers = #tpu.dot_dimension_numbers<[1], [0], [0], [1], [0, 0, 1, 1], [], []>} : vector<8x512xf32>, vector<512x128xf32>, vector<8x128xf32> -> vector<8x128xf32>
    %103 = arith.addf %87, %102 : vector<8x128xf32>
    %c0_56 = arith.constant 0 : index
    %c0_57 = arith.constant 0 : index
    %104 = vector.load %arg17[%c0_56, %c0_57] : memref<1x128xf32, #tpu.memory_space<vmem>>, vector<1x128xf32>
    %105 = vector.broadcast %104 : vector<1x128xf32> to vector<8x128xf32>
    %106 = arith.addf %103, %105 : vector<8x128xf32>
    %c0_58 = arith.constant 0 : index
    %c0_59 = arith.constant 0 : index
    %107 = vector.load %arg20[%c0_58, %c0_59] : memref<1x128xf32, #tpu.memory_space<vmem>>, vector<1x128xf32>
    %c0_60 = arith.constant 0 : index
    %c0_61 = arith.constant 0 : index
    %108 = vector.load %arg21[%c0_60, %c0_61] : memref<1x128xf32, #tpu.memory_space<vmem>>, vector<1x128xf32>
    %cst_62 = arith.constant dense<0.000000e+00> : vector<8xf32>
    %109 = vector.multi_reduction <add>, %106, %cst_62 [1] : vector<8x128xf32> to vector<8xf32>
    %110 = vector.shape_cast %109 : vector<8xf32> to vector<8x1xf32>
    %cst_63 = arith.constant 1.280000e+02 : f32
    %111 = vector.broadcast %cst_63 : f32 to vector<8x1xf32>
    %112 = arith.divf %110, %111 : vector<8x1xf32>
    %113 = vector.broadcast %112 : vector<8x1xf32> to vector<8x128xf32>
    %114 = arith.subf %106, %113 : vector<8x128xf32>
    %115 = arith.mulf %114, %114 : vector<8x128xf32>
    %cst_64 = arith.constant dense<0.000000e+00> : vector<8xf32>
    %116 = vector.multi_reduction <add>, %115, %cst_64 [1] : vector<8x128xf32> to vector<8xf32>
    %117 = vector.shape_cast %116 : vector<8xf32> to vector<8x1xf32>
    %cst_65 = arith.constant 1.280000e+02 : f32
    %118 = vector.broadcast %cst_65 : f32 to vector<8x1xf32>
    %119 = arith.divf %117, %118 : vector<8x1xf32>
    %120 = vector.broadcast %112 : vector<8x1xf32> to vector<8x128xf32>
    %121 = arith.subf %106, %120 : vector<8x128xf32>
    %cst_66 = arith.constant 9.99999974E-6 : f32
    %122 = vector.broadcast %cst_66 : f32 to vector<8x1xf32>
    %123 = arith.addf %119, %122 : vector<8x1xf32>
    %124 = math.rsqrt %123 : vector<8x1xf32>
    %125 = vector.broadcast %124 : vector<8x1xf32> to vector<8x128xf32>
    %126 = arith.mulf %121, %125 : vector<8x128xf32>
    %127 = vector.broadcast %107 : vector<1x128xf32> to vector<8x128xf32>
    %128 = arith.mulf %126, %127 : vector<8x128xf32>
    %129 = vector.broadcast %108 : vector<1x128xf32> to vector<8x128xf32>
    %130 = arith.addf %128, %129 : vector<8x128xf32>
    %c0_67 = arith.constant 0 : index
    %c0_68 = arith.constant 0 : index
    %131 = vector.load %arg6[%c0_67, %c0_68] : memref<8x1xf32, #tpu.memory_space<vmem>>, vector<8x1xf32>
    %132 = vector.broadcast %131 : vector<8x1xf32> to vector<8x128xf32>
    %133 = arith.mulf %132, %130 : vector<8x128xf32>
    %c0_69 = arith.constant 0 : index
    %c0_70 = arith.constant 0 : index
    %134 = vector.load %arg27[%c0_69, %c0_70] : memref<8x128xf32, #tpu.memory_space<vmem>>, vector<8x128xf32>
    tpu.vector_store %arg27[%c0_69, %c0_70], %133 {strides = array<i32>} : memref<8x128xf32, #tpu.memory_space<vmem>>, vector<8x128xf32>,
    %c0_71 = arith.constant 0 : index
    %c0_72 = arith.constant 0 : index
    %135 = vector.load %arg25[%c0_71, %c0_72] : memref<1x128xf32, #tpu.memory_space<vmem>>, vector<1x128xf32>
    %136 = vector.broadcast %135 : vector<1x128xf32> to vector<8x128xf32>
    %137 = arith.subf %133, %136 : vector<8x128xf32>
    %c0_73 = arith.constant 0 : index
    %c0_74 = arith.constant 0 : index
    %138 = vector.load %arg22[%c0_73, %c0_74] : memref<128x1024xf32, #tpu.memory_space<vmem>>, vector<128x1024xf32>
    %cst_75 = arith.constant dense<0.000000e+00> : vector<8x1024xf32>
    %139 = tpu.matmul %137, %138, %cst_75 {dimension_numbers = #tpu.dot_dimension_numbers<[1], [0], [0], [1], [0, 0, 1, 1], [], []>} : vector<8x128xf32>, vector<128x1024xf32>, vector<8x1024xf32> -> vector<8x1024xf32>
    %c0_76 = arith.constant 0 : index
    %c0_77 = arith.constant 0 : index
    %140 = vector.load %arg23[%c0_76, %c0_77] : memref<1x1024xf32, #tpu.memory_space<vmem>>, vector<1x1024xf32>
    %141 = vector.broadcast %140 : vector<1x1024xf32> to vector<8x1024xf32>
    %142 = arith.addf %139, %141 : vector<8x1024xf32>
    %cst_78 = arith.constant 0.000000e+00 : f32
    %143 = vector.broadcast %cst_78 : f32 to vector<8x1024xf32>
    %144 = arith.maximumf %142, %143 : vector<8x1024xf32>
    %c0_79 = arith.constant 0 : index
    %c0_80 = arith.constant 0 : index
    %145 = vector.load %arg28[%c0_79, %c0_80] : memref<8x1024xf32, #tpu.memory_space<vmem>>, vector<8x1024xf32>
    tpu.vector_store %arg28[%c0_79, %c0_80], %144 {strides = array<i32>} : memref<8x1024xf32, #tpu.memory_space<vmem>>, vector<8x1024xf32>,
    %c0_81 = arith.constant 0 : index
    %c0_82 = arith.constant 0 : index
    %146 = vector.load %arg24[%c0_81, %c0_82] : memref<1024x128xf32, #tpu.memory_space<vmem>>, vector<1024x128xf32>
    %cst_83 = arith.constant dense<0.000000e+00> : vector<8x128xf32>
    %147 = tpu.matmul %144, %146, %cst_83 {dimension_numbers = #tpu.dot_dimension_numbers<[1], [0], [0], [1], [0, 0, 1, 1], [], []>} : vector<8x1024xf32>, vector<1024x128xf32>, vector<8x128xf32> -> vector<8x128xf32>
    %c0_84 = arith.constant 0 : index
    %c0_85 = arith.constant 0 : index
    %148 = vector.load %arg25[%c0_84, %c0_85] : memref<1x128xf32, #tpu.memory_space<vmem>>, vector<1x128xf32>
    %149 = vector.broadcast %148 : vector<1x128xf32> to vector<8x128xf32>
    %150 = arith.addf %147, %149 : vector<8x128xf32>
    %c0_86 = arith.constant 0 : index
    %c0_87 = arith.constant 0 : index
    %151 = vector.load %arg26[%c0_86, %c0_87] : memref<8x128xf32, #tpu.memory_space<vmem>>, vector<8x128xf32>
    tpu.vector_store %arg26[%c0_86, %c0_87], %150 {strides = array<i32>} : memref<8x128xf32, #tpu.memory_space<vmem>>, vector<8x128xf32>,
    return
  }
  func.func @transform_0(%arg0: i32) -> (i32, i32) {
    %c0_i32 = arith.constant 0 : i32
    %c0_i32_0 = arith.constant 0 : i32
    return %arg0, %c0_i32 : i32, i32
  }
  func.func @transform_1(%arg0: i32) -> (i32, i32, i32) {
    %c0_i32 = arith.constant 0 : i32
    %c0_i32_0 = arith.constant 0 : i32
    %c0_i32_1 = arith.constant 0 : i32
    return %arg0, %c0_i32, %c0_i32_0 : i32, i32, i32
  }
  func.func @transform_2(%arg0: i32) -> (i32, i32) {
    %c0_i32 = arith.constant 0 : i32
    %c0_i32_0 = arith.constant 0 : i32
    return %arg0, %c0_i32 : i32, i32
  }
  func.func @transform_3(%arg0: i32) -> (i32, i32) {
    %c0_i32 = arith.constant 0 : i32
    %c0_i32_0 = arith.constant 0 : i32
    %c0_i32_1 = arith.constant 0 : i32
    return %c0_i32, %c0_i32_0 : i32, i32
  }
  func.func @transform_4(%arg0: i32) -> (i32, i32) {
    %c0_i32 = arith.constant 0 : i32
    %c0_i32_0 = arith.constant 0 : i32
    return %arg0, %c0_i32 : i32, i32
  }
  func.func @transform_5(%arg0: i32) -> (i32, i32) {
    %c0_i32 = arith.constant 0 : i32
    %c0_i32_0 = arith.constant 0 : i32
    return %arg0, %c0_i32 : i32, i32
  }
  func.func @transform_6(%arg0: i32) -> (i32, i32) {
    %c0_i32 = arith.constant 0 : i32
    %c0_i32_0 = arith.constant 0 : i32
    %c0_i32_1 = arith.constant 0 : i32
    return %c0_i32, %c0_i32_0 : i32, i32
  }
  func.func @transform_7(%arg0: i32) -> (i32, i32) {
    %c0_i32 = arith.constant 0 : i32
    %c0_i32_0 = arith.constant 0 : i32
    %c0_i32_1 = arith.constant 0 : i32
    return %c0_i32, %c0_i32_0 : i32, i32
  }
  func.func @transform_8(%arg0: i32) -> (i32, i32) {
    %c0_i32 = arith.constant 0 : i32
    %c0_i32_0 = arith.constant 0 : i32
    %c0_i32_1 = arith.constant 0 : i32
    return %c0_i32, %c0_i32_0 : i32, i32
  }
  func.func @transform_9(%arg0: i32) -> (i32, i32) {
    %c0_i32 = arith.constant 0 : i32
    %c0_i32_0 = arith.constant 0 : i32
    %c0_i32_1 = arith.constant 0 : i32
    return %c0_i32, %c0_i32_0 : i32, i32
  }
  func.func @transform_10(%arg0: i32) -> (i32, i32) {
    %c0_i32 = arith.constant 0 : i32
    %c0_i32_0 = arith.constant 0 : i32
    %c0_i32_1 = arith.constant 0 : i32
    return %c0_i32, %c0_i32_0 : i32, i32
  }
  func.func @transform_11(%arg0: i32) -> (i32, i32) {
    %c0_i32 = arith.constant 0 : i32
    %c0_i32_0 = arith.constant 0 : i32
    %c0_i32_1 = arith.constant 0 : i32
    return %c0_i32, %c0_i32_0 : i32, i32
  }
  func.func @transform_12(%arg0: i32) -> (i32, i32) {
    %c0_i32 = arith.constant 0 : i32
    %c0_i32_0 = arith.constant 0 : i32
    %c0_i32_1 = arith.constant 0 : i32
    return %c0_i32, %c0_i32_0 : i32, i32
  }
  func.func @transform_13(%arg0: i32) -> (i32, i32) {
    %c0_i32 = arith.constant 0 : i32
    %c0_i32_0 = arith.constant 0 : i32
    %c0_i32_1 = arith.constant 0 : i32
    return %c0_i32, %c0_i32_0 : i32, i32
  }
  func.func @transform_14(%arg0: i32) -> (i32, i32) {
    %c0_i32 = arith.constant 0 : i32
    %c0_i32_0 = arith.constant 0 : i32
    %c0_i32_1 = arith.constant 0 : i32
    return %c0_i32, %c0_i32_0 : i32, i32
  }
  func.func @transform_15(%arg0: i32) -> (i32, i32) {
    %c0_i32 = arith.constant 0 : i32
    %c0_i32_0 = arith.constant 0 : i32
    %c0_i32_1 = arith.constant 0 : i32
    return %c0_i32, %c0_i32_0 : i32, i32
  }
  func.func @transform_16(%arg0: i32) -> (i32, i32) {
    %c0_i32 = arith.constant 0 : i32
    %c0_i32_0 = arith.constant 0 : i32
    %c0_i32_1 = arith.constant 0 : i32
    return %c0_i32, %c0_i32_0 : i32, i32
  }
  func.func @transform_17(%arg0: i32) -> (i32, i32) {
    %c0_i32 = arith.constant 0 : i32
    %c0_i32_0 = arith.constant 0 : i32
    %c0_i32_1 = arith.constant 0 : i32
    return %c0_i32, %c0_i32_0 : i32, i32
  }
  func.func @transform_18(%arg0: i32) -> (i32, i32) {
    %c0_i32 = arith.constant 0 : i32
    %c0_i32_0 = arith.constant 0 : i32
    %c0_i32_1 = arith.constant 0 : i32
    return %c0_i32, %c0_i32_0 : i32, i32
  }
  func.func @transform_19(%arg0: i32) -> (i32, i32) {
    %c0_i32 = arith.constant 0 : i32
    %c0_i32_0 = arith.constant 0 : i32
    %c0_i32_1 = arith.constant 0 : i32
    return %c0_i32, %c0_i32_0 : i32, i32
  }
  func.func @transform_20(%arg0: i32) -> (i32, i32) {
    %c0_i32 = arith.constant 0 : i32
    %c0_i32_0 = arith.constant 0 : i32
    %c0_i32_1 = arith.constant 0 : i32
    return %c0_i32, %c0_i32_0 : i32, i32
  }
  func.func @transform_21(%arg0: i32) -> (i32, i32) {
    %c0_i32 = arith.constant 0 : i32
    %c0_i32_0 = arith.constant 0 : i32
    %c0_i32_1 = arith.constant 0 : i32
    return %c0_i32, %c0_i32_0 : i32, i32
  }
  func.func @transform_22(%arg0: i32) -> (i32, i32) {
    %c0_i32 = arith.constant 0 : i32
    %c0_i32_0 = arith.constant 0 : i32
    %c0_i32_1 = arith.constant 0 : i32
    return %c0_i32, %c0_i32_0 : i32, i32
  }
  func.func @transform_23(%arg0: i32) -> (i32, i32) {
    %c0_i32 = arith.constant 0 : i32
    %c0_i32_0 = arith.constant 0 : i32
    %c0_i32_1 = arith.constant 0 : i32
    return %c0_i32, %c0_i32_0 : i32, i32
  }
  func.func @transform_24(%arg0: i32) -> (i32, i32) {
    %c0_i32 = arith.constant 0 : i32
    %c0_i32_0 = arith.constant 0 : i32
    %c0_i32_1 = arith.constant 0 : i32
    return %c0_i32, %c0_i32_0 : i32, i32
  }
  func.func @transform_25(%arg0: i32) -> (i32, i32) {
    %c0_i32 = arith.constant 0 : i32
    %c0_i32_0 = arith.constant 0 : i32
    return %arg0, %c0_i32 : i32, i32
  }
  func.func @transform_26(%arg0: i32) -> (i32, i32) {
    %c0_i32 = arith.constant 0 : i32
    %c0_i32_0 = arith.constant 0 : i32
    return %arg0, %c0_i32 : i32, i32
  }
  func.func @transform_27(%arg0: i32) -> (i32, i32) {
    %c0_i32 = arith.constant 0 : i32
    %c0_i32_0 = arith.constant 0 : i32
    return %arg0, %c0_i32 : i32, i32
  }
}

module attributes {stable_mosaic.version = 11 : i64} {
  func.func @_enc_node_kernel_pregather(%arg0: i32, %arg1: memref<8x128xf32, #tpu.memory_space<vmem>>, %arg2: memref<8x8x128xf32, #tpu.memory_space<vmem>>, %arg3: memref<8x8x128xf32, #tpu.memory_space<vmem>>, %arg4: memref<8x8xf32, #tpu.memory_space<vmem>>, %arg5: memref<8x1xf32, #tpu.memory_space<vmem>>, %arg6: memref<128x128xf32, #tpu.memory_space<vmem>>, %arg7: memref<256x128xf32, #tpu.memory_space<vmem>>, %arg8: memref<1x128xf32, #tpu.memory_space<vmem>>, %arg9: memref<128x128xf32, #tpu.memory_space<vmem>>, %arg10: memref<1x128xf32, #tpu.memory_space<vmem>>, %arg11: memref<128x128xf32, #tpu.memory_space<vmem>>, %arg12: memref<1x128xf32, #tpu.memory_space<vmem>>, %arg13: memref<128x512xf32, #tpu.memory_space<vmem>>, %arg14: memref<1x512xf32, #tpu.memory_space<vmem>>, %arg15: memref<512x128xf32, #tpu.memory_space<vmem>>, %arg16: memref<1x128xf32, #tpu.memory_space<vmem>>, %arg17: memref<1x128xf32, #tpu.memory_space<vmem>>, %arg18: memref<1x128xf32, #tpu.memory_space<vmem>>, %arg19: memref<1x128xf32, #tpu.memory_space<vmem>>, %arg20: memref<1x128xf32, #tpu.memory_space<vmem>>, %arg21: memref<128x1024xf32, #tpu.memory_space<vmem>>, %arg22: memref<1x1024xf32, #tpu.memory_space<vmem>>, %arg23: memref<1024x128xf32, #tpu.memory_space<vmem>>, %arg24: memref<1x128xf32, #tpu.memory_space<vmem>>, %arg25: memref<8x128xf32, #tpu.memory_space<vmem>>, %arg26: memref<8x128xf32, #tpu.memory_space<vmem>>, %arg27: memref<8x1024xf32, #tpu.memory_space<vmem>>) attributes {dimension_semantics = [#tpu.dimension_semantics<parallel>], iteration_bounds = array<i64: 4>, scalar_prefetch = 0 : i64, scratch_operands = 0 : i64, tpu.core_type = #tpu.core_type<tc>, window_params = [{transform_indices = @transform_0, window_bounds = array<i64: 8, 128>}, {transform_indices = @transform_1, window_bounds = array<i64: 8, 8, 128>}, {transform_indices = @transform_2, window_bounds = array<i64: 8, 8, 128>}, {transform_indices = @transform_3, window_bounds = array<i64: 8, 8>}, {transform_indices = @transform_4, window_bounds = array<i64: 8, 1>}, {pipeline_mode = #tpu.pipeline_mode<synchronous>, transform_indices = @transform_5, window_bounds = array<i64: 128, 128>}, {pipeline_mode = #tpu.pipeline_mode<synchronous>, transform_indices = @transform_6, window_bounds = array<i64: 256, 128>}, {pipeline_mode = #tpu.pipeline_mode<synchronous>, transform_indices = @transform_7, window_bounds = array<i64: 1, 128>}, {pipeline_mode = #tpu.pipeline_mode<synchronous>, transform_indices = @transform_8, window_bounds = array<i64: 128, 128>}, {pipeline_mode = #tpu.pipeline_mode<synchronous>, transform_indices = @transform_9, window_bounds = array<i64: 1, 128>}, {pipeline_mode = #tpu.pipeline_mode<synchronous>, transform_indices = @transform_10, window_bounds = array<i64: 128, 128>}, {pipeline_mode = #tpu.pipeline_mode<synchronous>, transform_indices = @transform_11, window_bounds = array<i64: 1, 128>}, {pipeline_mode = #tpu.pipeline_mode<synchronous>, transform_indices = @transform_12, window_bounds = array<i64: 128, 512>}, {pipeline_mode = #tpu.pipeline_mode<synchronous>, transform_indices = @transform_13, window_bounds = array<i64: 1, 512>}, {pipeline_mode = #tpu.pipeline_mode<synchronous>, transform_indices = @transform_14, window_bounds = array<i64: 512, 128>}, {pipeline_mode = #tpu.pipeline_mode<synchronous>, transform_indices = @transform_15, window_bounds = array<i64: 1, 128>}, {pipeline_mode = #tpu.pipeline_mode<synchronous>, transform_indices = @transform_16, window_bounds = array<i64: 1, 128>}, {pipeline_mode = #tpu.pipeline_mode<synchronous>, transform_indices = @transform_17, window_bounds = array<i64: 1, 128>}, {pipeline_mode = #tpu.pipeline_mode<synchronous>, transform_indices = @transform_18, window_bounds = array<i64: 1, 128>}, {pipeline_mode = #tpu.pipeline_mode<synchronous>, transform_indices = @transform_19, window_bounds = array<i64: 1, 128>}, {pipeline_mode = #tpu.pipeline_mode<synchronous>, transform_indices = @transform_20, window_bounds = array<i64: 128, 1024>}, {pipeline_mode = #tpu.pipeline_mode<synchronous>, transform_indices = @transform_21, window_bounds = array<i64: 1, 1024>}, {pipeline_mode = #tpu.pipeline_mode<synchronous>, transform_indices = @transform_22, window_bounds = array<i64: 1024, 128>}, {pipeline_mode = #tpu.pipeline_mode<synchronous>, transform_indices = @transform_23, window_bounds = array<i64: 1, 128>}, {transform_indices = @transform_24, window_bounds = array<i64: 8, 128>}, {transform_indices = @transform_25, window_bounds = array<i64: 8, 128>}, {transform_indices = @transform_26, window_bounds = array<i64: 8, 1024>}]} {
    %c0 = arith.constant 0 : index
    %c0_0 = arith.constant 0 : index
    %c0_1 = arith.constant 0 : index
    %0 = vector.load %arg3[%c0, %c0_0, %c0_1] : memref<8x8x128xf32, #tpu.memory_space<vmem>>, vector<8x8x128xf32>
    %1 = vector.shape_cast %0 : vector<8x8x128xf32> to vector<64x128xf32>
    %c0_2 = arith.constant 0 : index
    %c0_3 = arith.constant 0 : index
    %2 = vector.load %arg1[%c0_2, %c0_3] : memref<8x128xf32, #tpu.memory_space<vmem>>, vector<8x128xf32>
    %c0_4 = arith.constant 0 : index
    %c0_5 = arith.constant 0 : index
    %3 = vector.load %arg4[%c0_4, %c0_5] : memref<8x8xf32, #tpu.memory_space<vmem>>, vector<8x8xf32>
    %c0_6 = arith.constant 0 : index
    %c0_7 = arith.constant 0 : index
    %4 = vector.load %arg6[%c0_6, %c0_7] : memref<128x128xf32, #tpu.memory_space<vmem>>, vector<128x128xf32>
    %cst = arith.constant dense<0.000000e+00> : vector<8x128xf32>
    %5 = tpu.matmul %2, %4, %cst {dimension_numbers = #tpu.dot_dimension_numbers<[1], [0], [0], [1], [0, 0, 1, 1], [], []>} : vector<8x128xf32>, vector<128x128xf32>, vector<8x128xf32> -> vector<8x128xf32>
    %c0_8 = arith.constant 0 : index
    %c0_9 = arith.constant 0 : index
    %c0_10 = arith.constant 0 : index
    %6 = vector.load %arg2[%c0_8, %c0_9, %c0_10] : memref<8x8x128xf32, #tpu.memory_space<vmem>>, vector<8x8x128xf32>
    %7 = vector.shape_cast %6 : vector<8x8x128xf32> to vector<64x128xf32>
    %8 = tpu.concatenate %7, %1 in 1 : vector<64x128xf32>, vector<64x128xf32> -> vector<64x256xf32>
    %c0_11 = arith.constant 0 : index
    %c0_12 = arith.constant 0 : index
    %9 = vector.load %arg7[%c0_11, %c0_12] : memref<256x128xf32, #tpu.memory_space<vmem>>, vector<256x128xf32>
    %cst_13 = arith.constant dense<0.000000e+00> : vector<64x128xf32>
    %10 = tpu.matmul %8, %9, %cst_13 {dimension_numbers = #tpu.dot_dimension_numbers<[1], [0], [0], [1], [0, 0, 1, 1], [], []>} : vector<64x256xf32>, vector<256x128xf32>, vector<64x128xf32> -> vector<64x128xf32>
    %11 = vector.shape_cast %10 : vector<64x128xf32> to vector<8x8x128xf32>
    %12 = vector.shape_cast %5 : vector<8x128xf32> to vector<8x1x128xf32>
    %13 = vector.broadcast %12 : vector<8x1x128xf32> to vector<8x8x128xf32>
    %14 = arith.addf %11, %13 : vector<8x8x128xf32>
    %c0_14 = arith.constant 0 : index
    %c0_15 = arith.constant 0 : index
    %15 = vector.load %arg8[%c0_14, %c0_15] : memref<1x128xf32, #tpu.memory_space<vmem>>, vector<1x128xf32>
    %16 = vector.shape_cast %15 : vector<1x128xf32> to vector<1x1x128xf32>
    %17 = vector.broadcast %16 : vector<1x1x128xf32> to vector<8x8x128xf32>
    %18 = arith.addf %14, %17 : vector<8x8x128xf32>
    %cst_16 = arith.constant 5.000000e-01 : f32
    %19 = vector.broadcast %cst_16 : f32 to vector<8x8x128xf32>
    %20 = arith.mulf %19, %18 : vector<8x8x128xf32>
    %cst_17 = arith.constant 0.707106769 : f32
    %21 = vector.broadcast %cst_17 : f32 to vector<8x8x128xf32>
    %22 = arith.mulf %18, %21 : vector<8x8x128xf32>
    %23 = math.erf %22 : vector<8x8x128xf32>
    %cst_18 = arith.constant 1.000000e+00 : f32
    %24 = vector.broadcast %cst_18 : f32 to vector<8x8x128xf32>
    %25 = arith.addf %24, %23 : vector<8x8x128xf32>
    %26 = arith.mulf %20, %25 : vector<8x8x128xf32>
    %27 = vector.shape_cast %26 : vector<8x8x128xf32> to vector<64x128xf32>
    %c0_19 = arith.constant 0 : index
    %c0_20 = arith.constant 0 : index
    %28 = vector.load %arg9[%c0_19, %c0_20] : memref<128x128xf32, #tpu.memory_space<vmem>>, vector<128x128xf32>
    %cst_21 = arith.constant dense<0.000000e+00> : vector<64x128xf32>
    %29 = tpu.matmul %27, %28, %cst_21 {dimension_numbers = #tpu.dot_dimension_numbers<[1], [0], [0], [1], [0, 0, 1, 1], [], []>} : vector<64x128xf32>, vector<128x128xf32>, vector<64x128xf32> -> vector<64x128xf32>
    %c0_22 = arith.constant 0 : index
    %c0_23 = arith.constant 0 : index
    %30 = vector.load %arg10[%c0_22, %c0_23] : memref<1x128xf32, #tpu.memory_space<vmem>>, vector<1x128xf32>
    %31 = vector.broadcast %30 : vector<1x128xf32> to vector<64x128xf32>
    %32 = arith.addf %29, %31 : vector<64x128xf32>
    %cst_24 = arith.constant 5.000000e-01 : f32
    %33 = vector.broadcast %cst_24 : f32 to vector<64x128xf32>
    %34 = arith.mulf %33, %32 : vector<64x128xf32>
    %cst_25 = arith.constant 0.707106769 : f32
    %35 = vector.broadcast %cst_25 : f32 to vector<64x128xf32>
    %36 = arith.mulf %32, %35 : vector<64x128xf32>
    %37 = math.erf %36 : vector<64x128xf32>
    %cst_26 = arith.constant 1.000000e+00 : f32
    %38 = vector.broadcast %cst_26 : f32 to vector<64x128xf32>
    %39 = arith.addf %38, %37 : vector<64x128xf32>
    %40 = arith.mulf %34, %39 : vector<64x128xf32>
    %41 = vector.shape_cast %40 : vector<64x128xf32> to vector<8x8x128xf32>
    %42 = vector.shape_cast %3 : vector<8x8xf32> to vector<8x8x1xf32>
    %43 = vector.broadcast %42 : vector<8x8x1xf32> to vector<8x8x128xf32>
    %44 = arith.mulf %41, %43 : vector<8x8x128xf32>
    %cst_27 = arith.constant dense<0.000000e+00> : vector<8x128xf32>
    %45 = vector.multi_reduction <add>, %44, %cst_27 [1] : vector<8x8x128xf32> to vector<8x128xf32>
    %cst_28 = arith.constant dense<0.000000e+00> : vector<8xf32>
    %46 = vector.multi_reduction <add>, %3, %cst_28 [1] : vector<8x8xf32> to vector<8xf32>
    %47 = vector.shape_cast %46 : vector<8xf32> to vector<8x1xf32>
    %c0_29 = arith.constant 0 : index
    %c0_30 = arith.constant 0 : index
    %48 = vector.load %arg11[%c0_29, %c0_30] : memref<128x128xf32, #tpu.memory_space<vmem>>, vector<128x128xf32>
    %cst_31 = arith.constant dense<0.000000e+00> : vector<8x128xf32>
    %49 = tpu.matmul %45, %48, %cst_31 {dimension_numbers = #tpu.dot_dimension_numbers<[1], [0], [0], [1], [0, 0, 1, 1], [], []>} : vector<8x128xf32>, vector<128x128xf32>, vector<8x128xf32> -> vector<8x128xf32>
    %c0_32 = arith.constant 0 : index
    %c0_33 = arith.constant 0 : index
    %50 = vector.load %arg12[%c0_32, %c0_33] : memref<1x128xf32, #tpu.memory_space<vmem>>, vector<1x128xf32>
    %51 = vector.broadcast %47 : vector<8x1xf32> to vector<8x128xf32>
    %52 = vector.broadcast %50 : vector<1x128xf32> to vector<8x128xf32>
    %53 = arith.mulf %51, %52 : vector<8x128xf32>
    %54 = arith.addf %49, %53 : vector<8x128xf32>
    %cst_34 = arith.constant 0.0333333351 : f32
    %55 = vector.broadcast %cst_34 : f32 to vector<8x128xf32>
    %56 = arith.mulf %54, %55 : vector<8x128xf32>
    %57 = arith.addf %2, %56 : vector<8x128xf32>
    %c0_35 = arith.constant 0 : index
    %c0_36 = arith.constant 0 : index
    %58 = vector.load %arg17[%c0_35, %c0_36] : memref<1x128xf32, #tpu.memory_space<vmem>>, vector<1x128xf32>
    %c0_37 = arith.constant 0 : index
    %c0_38 = arith.constant 0 : index
    %59 = vector.load %arg18[%c0_37, %c0_38] : memref<1x128xf32, #tpu.memory_space<vmem>>, vector<1x128xf32>
    %cst_39 = arith.constant dense<0.000000e+00> : vector<8xf32>
    %60 = vector.multi_reduction <add>, %57, %cst_39 [1] : vector<8x128xf32> to vector<8xf32>
    %61 = vector.shape_cast %60 : vector<8xf32> to vector<8x1xf32>
    %cst_40 = arith.constant 1.280000e+02 : f32
    %62 = vector.broadcast %cst_40 : f32 to vector<8x1xf32>
    %63 = arith.divf %61, %62 : vector<8x1xf32>
    %64 = vector.broadcast %63 : vector<8x1xf32> to vector<8x128xf32>
    %65 = arith.subf %57, %64 : vector<8x128xf32>
    %66 = arith.mulf %65, %65 : vector<8x128xf32>
    %cst_41 = arith.constant dense<0.000000e+00> : vector<8xf32>
    %67 = vector.multi_reduction <add>, %66, %cst_41 [1] : vector<8x128xf32> to vector<8xf32>
    %68 = vector.shape_cast %67 : vector<8xf32> to vector<8x1xf32>
    %cst_42 = arith.constant 1.280000e+02 : f32
    %69 = vector.broadcast %cst_42 : f32 to vector<8x1xf32>
    %70 = arith.divf %68, %69 : vector<8x1xf32>
    %71 = vector.broadcast %63 : vector<8x1xf32> to vector<8x128xf32>
    %72 = arith.subf %57, %71 : vector<8x128xf32>
    %cst_43 = arith.constant 9.99999974E-6 : f32
    %73 = vector.broadcast %cst_43 : f32 to vector<8x1xf32>
    %74 = arith.addf %70, %73 : vector<8x1xf32>
    %75 = math.rsqrt %74 : vector<8x1xf32>
    %76 = vector.broadcast %75 : vector<8x1xf32> to vector<8x128xf32>
    %77 = arith.mulf %72, %76 : vector<8x128xf32>
    %78 = vector.broadcast %58 : vector<1x128xf32> to vector<8x128xf32>
    %79 = arith.mulf %77, %78 : vector<8x128xf32>
    %80 = vector.broadcast %59 : vector<1x128xf32> to vector<8x128xf32>
    %81 = arith.addf %79, %80 : vector<8x128xf32>
    %c0_44 = arith.constant 0 : index
    %c0_45 = arith.constant 0 : index
    %82 = vector.load %arg13[%c0_44, %c0_45] : memref<128x512xf32, #tpu.memory_space<vmem>>, vector<128x512xf32>
    %cst_46 = arith.constant dense<0.000000e+00> : vector<8x512xf32>
    %83 = tpu.matmul %81, %82, %cst_46 {dimension_numbers = #tpu.dot_dimension_numbers<[1], [0], [0], [1], [0, 0, 1, 1], [], []>} : vector<8x128xf32>, vector<128x512xf32>, vector<8x512xf32> -> vector<8x512xf32>
    %c0_47 = arith.constant 0 : index
    %c0_48 = arith.constant 0 : index
    %84 = vector.load %arg14[%c0_47, %c0_48] : memref<1x512xf32, #tpu.memory_space<vmem>>, vector<1x512xf32>
    %85 = vector.broadcast %84 : vector<1x512xf32> to vector<8x512xf32>
    %86 = arith.addf %83, %85 : vector<8x512xf32>
    %cst_49 = arith.constant 5.000000e-01 : f32
    %87 = vector.broadcast %cst_49 : f32 to vector<8x512xf32>
    %88 = arith.mulf %87, %86 : vector<8x512xf32>
    %cst_50 = arith.constant 0.707106769 : f32
    %89 = vector.broadcast %cst_50 : f32 to vector<8x512xf32>
    %90 = arith.mulf %86, %89 : vector<8x512xf32>
    %91 = math.erf %90 : vector<8x512xf32>
    %cst_51 = arith.constant 1.000000e+00 : f32
    %92 = vector.broadcast %cst_51 : f32 to vector<8x512xf32>
    %93 = arith.addf %92, %91 : vector<8x512xf32>
    %94 = arith.mulf %88, %93 : vector<8x512xf32>
    %c0_52 = arith.constant 0 : index
    %c0_53 = arith.constant 0 : index
    %95 = vector.load %arg15[%c0_52, %c0_53] : memref<512x128xf32, #tpu.memory_space<vmem>>, vector<512x128xf32>
    %cst_54 = arith.constant dense<0.000000e+00> : vector<8x128xf32>
    %96 = tpu.matmul %94, %95, %cst_54 {dimension_numbers = #tpu.dot_dimension_numbers<[1], [0], [0], [1], [0, 0, 1, 1], [], []>} : vector<8x512xf32>, vector<512x128xf32>, vector<8x128xf32> -> vector<8x128xf32>
    %97 = arith.addf %81, %96 : vector<8x128xf32>
    %c0_55 = arith.constant 0 : index
    %c0_56 = arith.constant 0 : index
    %98 = vector.load %arg16[%c0_55, %c0_56] : memref<1x128xf32, #tpu.memory_space<vmem>>, vector<1x128xf32>
    %99 = vector.broadcast %98 : vector<1x128xf32> to vector<8x128xf32>
    %100 = arith.addf %97, %99 : vector<8x128xf32>
    %c0_57 = arith.constant 0 : index
    %c0_58 = arith.constant 0 : index
    %101 = vector.load %arg19[%c0_57, %c0_58] : memref<1x128xf32, #tpu.memory_space<vmem>>, vector<1x128xf32>
    %c0_59 = arith.constant 0 : index
    %c0_60 = arith.constant 0 : index
    %102 = vector.load %arg20[%c0_59, %c0_60] : memref<1x128xf32, #tpu.memory_space<vmem>>, vector<1x128xf32>
    %cst_61 = arith.constant dense<0.000000e+00> : vector<8xf32>
    %103 = vector.multi_reduction <add>, %100, %cst_61 [1] : vector<8x128xf32> to vector<8xf32>
    %104 = vector.shape_cast %103 : vector<8xf32> to vector<8x1xf32>
    %cst_62 = arith.constant 1.280000e+02 : f32
    %105 = vector.broadcast %cst_62 : f32 to vector<8x1xf32>
    %106 = arith.divf %104, %105 : vector<8x1xf32>
    %107 = vector.broadcast %106 : vector<8x1xf32> to vector<8x128xf32>
    %108 = arith.subf %100, %107 : vector<8x128xf32>
    %109 = arith.mulf %108, %108 : vector<8x128xf32>
    %cst_63 = arith.constant dense<0.000000e+00> : vector<8xf32>
    %110 = vector.multi_reduction <add>, %109, %cst_63 [1] : vector<8x128xf32> to vector<8xf32>
    %111 = vector.shape_cast %110 : vector<8xf32> to vector<8x1xf32>
    %cst_64 = arith.constant 1.280000e+02 : f32
    %112 = vector.broadcast %cst_64 : f32 to vector<8x1xf32>
    %113 = arith.divf %111, %112 : vector<8x1xf32>
    %114 = vector.broadcast %106 : vector<8x1xf32> to vector<8x128xf32>
    %115 = arith.subf %100, %114 : vector<8x128xf32>
    %cst_65 = arith.constant 9.99999974E-6 : f32
    %116 = vector.broadcast %cst_65 : f32 to vector<8x1xf32>
    %117 = arith.addf %113, %116 : vector<8x1xf32>
    %118 = math.rsqrt %117 : vector<8x1xf32>
    %119 = vector.broadcast %118 : vector<8x1xf32> to vector<8x128xf32>
    %120 = arith.mulf %115, %119 : vector<8x128xf32>
    %121 = vector.broadcast %101 : vector<1x128xf32> to vector<8x128xf32>
    %122 = arith.mulf %120, %121 : vector<8x128xf32>
    %123 = vector.broadcast %102 : vector<1x128xf32> to vector<8x128xf32>
    %124 = arith.addf %122, %123 : vector<8x128xf32>
    %c0_66 = arith.constant 0 : index
    %c0_67 = arith.constant 0 : index
    %125 = vector.load %arg5[%c0_66, %c0_67] : memref<8x1xf32, #tpu.memory_space<vmem>>, vector<8x1xf32>
    %126 = vector.broadcast %125 : vector<8x1xf32> to vector<8x128xf32>
    %127 = arith.mulf %126, %124 : vector<8x128xf32>
    %c0_68 = arith.constant 0 : index
    %c0_69 = arith.constant 0 : index
    %128 = vector.load %arg26[%c0_68, %c0_69] : memref<8x128xf32, #tpu.memory_space<vmem>>, vector<8x128xf32>
    tpu.vector_store %arg26[%c0_68, %c0_69], %127 {strides = array<i32>} : memref<8x128xf32, #tpu.memory_space<vmem>>, vector<8x128xf32>,
    %c0_70 = arith.constant 0 : index
    %c0_71 = arith.constant 0 : index
    %129 = vector.load %arg24[%c0_70, %c0_71] : memref<1x128xf32, #tpu.memory_space<vmem>>, vector<1x128xf32>
    %130 = vector.broadcast %129 : vector<1x128xf32> to vector<8x128xf32>
    %131 = arith.subf %127, %130 : vector<8x128xf32>
    %c0_72 = arith.constant 0 : index
    %c0_73 = arith.constant 0 : index
    %132 = vector.load %arg21[%c0_72, %c0_73] : memref<128x1024xf32, #tpu.memory_space<vmem>>, vector<128x1024xf32>
    %cst_74 = arith.constant dense<0.000000e+00> : vector<8x1024xf32>
    %133 = tpu.matmul %131, %132, %cst_74 {dimension_numbers = #tpu.dot_dimension_numbers<[1], [0], [0], [1], [0, 0, 1, 1], [], []>} : vector<8x128xf32>, vector<128x1024xf32>, vector<8x1024xf32> -> vector<8x1024xf32>
    %c0_75 = arith.constant 0 : index
    %c0_76 = arith.constant 0 : index
    %134 = vector.load %arg22[%c0_75, %c0_76] : memref<1x1024xf32, #tpu.memory_space<vmem>>, vector<1x1024xf32>
    %135 = vector.broadcast %134 : vector<1x1024xf32> to vector<8x1024xf32>
    %136 = arith.addf %133, %135 : vector<8x1024xf32>
    %cst_77 = arith.constant 0.000000e+00 : f32
    %137 = vector.broadcast %cst_77 : f32 to vector<8x1024xf32>
    %138 = arith.maximumf %136, %137 : vector<8x1024xf32>
    %c0_78 = arith.constant 0 : index
    %c0_79 = arith.constant 0 : index
    %139 = vector.load %arg27[%c0_78, %c0_79] : memref<8x1024xf32, #tpu.memory_space<vmem>>, vector<8x1024xf32>
    tpu.vector_store %arg27[%c0_78, %c0_79], %138 {strides = array<i32>} : memref<8x1024xf32, #tpu.memory_space<vmem>>, vector<8x1024xf32>,
    %c0_80 = arith.constant 0 : index
    %c0_81 = arith.constant 0 : index
    %140 = vector.load %arg23[%c0_80, %c0_81] : memref<1024x128xf32, #tpu.memory_space<vmem>>, vector<1024x128xf32>
    %cst_82 = arith.constant dense<0.000000e+00> : vector<8x128xf32>
    %141 = tpu.matmul %138, %140, %cst_82 {dimension_numbers = #tpu.dot_dimension_numbers<[1], [0], [0], [1], [0, 0, 1, 1], [], []>} : vector<8x1024xf32>, vector<1024x128xf32>, vector<8x128xf32> -> vector<8x128xf32>
    %c0_83 = arith.constant 0 : index
    %c0_84 = arith.constant 0 : index
    %142 = vector.load %arg24[%c0_83, %c0_84] : memref<1x128xf32, #tpu.memory_space<vmem>>, vector<1x128xf32>
    %143 = vector.broadcast %142 : vector<1x128xf32> to vector<8x128xf32>
    %144 = arith.addf %141, %143 : vector<8x128xf32>
    %c0_85 = arith.constant 0 : index
    %c0_86 = arith.constant 0 : index
    %145 = vector.load %arg25[%c0_85, %c0_86] : memref<8x128xf32, #tpu.memory_space<vmem>>, vector<8x128xf32>
    tpu.vector_store %arg25[%c0_85, %c0_86], %144 {strides = array<i32>} : memref<8x128xf32, #tpu.memory_space<vmem>>, vector<8x128xf32>,
    return
  }
  func.func @transform_0(%arg0: i32) -> (i32, i32) {
    %c0_i32 = arith.constant 0 : i32
    %c0_i32_0 = arith.constant 0 : i32
    return %arg0, %c0_i32 : i32, i32
  }
  func.func @transform_1(%arg0: i32) -> (i32, i32, i32) {
    %c0_i32 = arith.constant 0 : i32
    %c0_i32_0 = arith.constant 0 : i32
    %c0_i32_1 = arith.constant 0 : i32
    return %arg0, %c0_i32, %c0_i32_0 : i32, i32, i32
  }
  func.func @transform_2(%arg0: i32) -> (i32, i32, i32) {
    %c0_i32 = arith.constant 0 : i32
    %c0_i32_0 = arith.constant 0 : i32
    %c0_i32_1 = arith.constant 0 : i32
    return %arg0, %c0_i32, %c0_i32_0 : i32, i32, i32
  }
  func.func @transform_3(%arg0: i32) -> (i32, i32) {
    %c0_i32 = arith.constant 0 : i32
    %c0_i32_0 = arith.constant 0 : i32
    return %arg0, %c0_i32 : i32, i32
  }
  func.func @transform_4(%arg0: i32) -> (i32, i32) {
    %c0_i32 = arith.constant 0 : i32
    %c0_i32_0 = arith.constant 0 : i32
    return %arg0, %c0_i32 : i32, i32
  }
  func.func @transform_5(%arg0: i32) -> (i32, i32) {
    %c0_i32 = arith.constant 0 : i32
    %c0_i32_0 = arith.constant 0 : i32
    %c0_i32_1 = arith.constant 0 : i32
    return %c0_i32, %c0_i32_0 : i32, i32
  }
  func.func @transform_6(%arg0: i32) -> (i32, i32) {
    %c0_i32 = arith.constant 0 : i32
    %c0_i32_0 = arith.constant 0 : i32
    %c0_i32_1 = arith.constant 0 : i32
    return %c0_i32, %c0_i32_0 : i32, i32
  }
  func.func @transform_7(%arg0: i32) -> (i32, i32) {
    %c0_i32 = arith.constant 0 : i32
    %c0_i32_0 = arith.constant 0 : i32
    %c0_i32_1 = arith.constant 0 : i32
    return %c0_i32, %c0_i32_0 : i32, i32
  }
  func.func @transform_8(%arg0: i32) -> (i32, i32) {
    %c0_i32 = arith.constant 0 : i32
    %c0_i32_0 = arith.constant 0 : i32
    %c0_i32_1 = arith.constant 0 : i32
    return %c0_i32, %c0_i32_0 : i32, i32
  }
  func.func @transform_9(%arg0: i32) -> (i32, i32) {
    %c0_i32 = arith.constant 0 : i32
    %c0_i32_0 = arith.constant 0 : i32
    %c0_i32_1 = arith.constant 0 : i32
    return %c0_i32, %c0_i32_0 : i32, i32
  }
  func.func @transform_10(%arg0: i32) -> (i32, i32) {
    %c0_i32 = arith.constant 0 : i32
    %c0_i32_0 = arith.constant 0 : i32
    %c0_i32_1 = arith.constant 0 : i32
    return %c0_i32, %c0_i32_0 : i32, i32
  }
  func.func @transform_11(%arg0: i32) -> (i32, i32) {
    %c0_i32 = arith.constant 0 : i32
    %c0_i32_0 = arith.constant 0 : i32
    %c0_i32_1 = arith.constant 0 : i32
    return %c0_i32, %c0_i32_0 : i32, i32
  }
  func.func @transform_12(%arg0: i32) -> (i32, i32) {
    %c0_i32 = arith.constant 0 : i32
    %c0_i32_0 = arith.constant 0 : i32
    %c0_i32_1 = arith.constant 0 : i32
    return %c0_i32, %c0_i32_0 : i32, i32
  }
  func.func @transform_13(%arg0: i32) -> (i32, i32) {
    %c0_i32 = arith.constant 0 : i32
    %c0_i32_0 = arith.constant 0 : i32
    %c0_i32_1 = arith.constant 0 : i32
    return %c0_i32, %c0_i32_0 : i32, i32
  }
  func.func @transform_14(%arg0: i32) -> (i32, i32) {
    %c0_i32 = arith.constant 0 : i32
    %c0_i32_0 = arith.constant 0 : i32
    %c0_i32_1 = arith.constant 0 : i32
    return %c0_i32, %c0_i32_0 : i32, i32
  }
  func.func @transform_15(%arg0: i32) -> (i32, i32) {
    %c0_i32 = arith.constant 0 : i32
    %c0_i32_0 = arith.constant 0 : i32
    %c0_i32_1 = arith.constant 0 : i32
    return %c0_i32, %c0_i32_0 : i32, i32
  }
  func.func @transform_16(%arg0: i32) -> (i32, i32) {
    %c0_i32 = arith.constant 0 : i32
    %c0_i32_0 = arith.constant 0 : i32
    %c0_i32_1 = arith.constant 0 : i32
    return %c0_i32, %c0_i32_0 : i32, i32
  }
  func.func @transform_17(%arg0: i32) -> (i32, i32) {
    %c0_i32 = arith.constant 0 : i32
    %c0_i32_0 = arith.constant 0 : i32
    %c0_i32_1 = arith.constant 0 : i32
    return %c0_i32, %c0_i32_0 : i32, i32
  }
  func.func @transform_18(%arg0: i32) -> (i32, i32) {
    %c0_i32 = arith.constant 0 : i32
    %c0_i32_0 = arith.constant 0 : i32
    %c0_i32_1 = arith.constant 0 : i32
    return %c0_i32, %c0_i32_0 : i32, i32
  }
  func.func @transform_19(%arg0: i32) -> (i32, i32) {
    %c0_i32 = arith.constant 0 : i32
    %c0_i32_0 = arith.constant 0 : i32
    %c0_i32_1 = arith.constant 0 : i32
    return %c0_i32, %c0_i32_0 : i32, i32
  }
  func.func @transform_20(%arg0: i32) -> (i32, i32) {
    %c0_i32 = arith.constant 0 : i32
    %c0_i32_0 = arith.constant 0 : i32
    %c0_i32_1 = arith.constant 0 : i32
    return %c0_i32, %c0_i32_0 : i32, i32
  }
  func.func @transform_21(%arg0: i32) -> (i32, i32) {
    %c0_i32 = arith.constant 0 : i32
    %c0_i32_0 = arith.constant 0 : i32
    %c0_i32_1 = arith.constant 0 : i32
    return %c0_i32, %c0_i32_0 : i32, i32
  }
  func.func @transform_22(%arg0: i32) -> (i32, i32) {
    %c0_i32 = arith.constant 0 : i32
    %c0_i32_0 = arith.constant 0 : i32
    %c0_i32_1 = arith.constant 0 : i32
    return %c0_i32, %c0_i32_0 : i32, i32
  }
  func.func @transform_23(%arg0: i32) -> (i32, i32) {
    %c0_i32 = arith.constant 0 : i32
    %c0_i32_0 = arith.constant 0 : i32
    %c0_i32_1 = arith.constant 0 : i32
    return %c0_i32, %c0_i32_0 : i32, i32
  }
  func.func @transform_24(%arg0: i32) -> (i32, i32) {
    %c0_i32 = arith.constant 0 : i32
    %c0_i32_0 = arith.constant 0 : i32
    return %arg0, %c0_i32 : i32, i32
  }
  func.func @transform_25(%arg0: i32) -> (i32, i32) {
    %c0_i32 = arith.constant 0 : i32
    %c0_i32_0 = arith.constant 0 : i32
    return %arg0, %c0_i32 : i32, i32
  }
  func.func @transform_26(%arg0: i32) -> (i32, i32) {
    %c0_i32 = arith.constant 0 : i32
    %c0_i32_0 = arith.constant 0 : i32
    return %arg0, %c0_i32 : i32, i32
  }
}

</mosaic_0001>

<llo_original>
// kernel: tpu_custom_call.1
$region0: #{tpu_custom_call.1}
  #allocation0 [shape = 'u32[]', space=smem, size = 0x4, offset = 0x4, fixed_abs, tag = 'smem constant byte address 0x4 - core index']
  #allocation1 [shape = 'u32[144,128]{1,0:T(1,128)}', space=vmem, size = 0x12000, scoped, tag = 'internal scratch']
  %s0 = inlined_call_operand.vmem [shape: f32[32,128], index: 0, kind: input, shape index: {}]
  %s1 = inlined_call_operand.hbm [shape: f32[32,8,128], index: 1, kind: input, shape index: {}]
  %s2 = inlined_call_operand.hbm [shape: f32[32,8,128], index: 2, kind: input, shape index: {}]
  %s3 = inlined_call_operand.vmem [shape: f32[32,8], index: 3, kind: input, shape index: {}]
  %s4 = inlined_call_operand.vmem [shape: f32[32,1], index: 4, kind: input, shape index: {}]
  %s5 = inlined_call_operand.hbm [shape: f32[128,128], index: 5, kind: input, shape index: {}]
  %s6 = inlined_call_operand.hbm [shape: f32[256,128], index: 6, kind: input, shape index: {}]
  %s7 = inlined_call_operand.vmem [shape: f32[1,128], index: 7, kind: input, shape index: {}]
  %s8 = inlined_call_operand.hbm [shape: f32[128,128], index: 8, kind: input, shape index: {}]
  %s9 = inlined_call_operand.vmem [shape: f32[1,128], index: 9, kind: input, shape index: {}]
  %s10 = inlined_call_operand.hbm [shape: f32[128,128], index: 10, kind: input, shape index: {}]
  %s11 = inlined_call_operand.vmem [shape: f32[1,128], index: 11, kind: input, shape index: {}]
  %s12 = inlined_call_operand.hbm [shape: f32[128,512], index: 12, kind: input, shape index: {}]
  %s13 = inlined_call_operand.vmem [shape: f32[1,512], index: 13, kind: input, shape index: {}]
  %s14 = inlined_call_operand.hbm [shape: f32[512,128], index: 14, kind: input, shape index: {}]
  %s15 = inlined_call_operand.vmem [shape: f32[1,128], index: 15, kind: input, shape index: {}]
  %s16 = inlined_call_operand.vmem [shape: f32[1,128], index: 16, kind: input, shape index: {}]
  %s17 = inlined_call_operand.vmem [shape: f32[1,128], index: 17, kind: input, shape index: {}]
  %s18 = inlined_call_operand.vmem [shape: f32[1,128], index: 18, kind: input, shape index: {}]
  %s19 = inlined_call_operand.vmem [shape: f32[1,128], index: 19, kind: input, shape index: {}]
  %s20 = inlined_call_operand.hbm [shape: f32[128,1024], index: 20, kind: input, shape index: {}]
  %s21 = inlined_call_operand.vmem [shape: f32[1,1024], index: 21, kind: input, shape index: {}]
  %s22 = inlined_call_operand.hbm [shape: f32[1024,128], index: 22, kind: input, shape index: {}]
  %s23 = inlined_call_operand.vmem [shape: f32[1,128], index: 23, kind: input, shape index: {}]
  %s24 = inlined_call_operand.hbm [shape: f32[32,128], index: 24, kind: output, shape index: {0}]
  %s25 = inlined_call_operand.hbm [shape: f32[32,128], index: 25, kind: output, shape index: {1}]
  %s26 = inlined_call_operand.hbm [shape: f32[32,1024], index: 26, kind: output, shape index: {2}]
  %27 = xla_tuple %s24, %s25, %s26
  %s28 = sld [smem:[#allocation0]]
  $region185: #{tpu_custom_call.1} parent=0
    _
  %s30 = ssub.s32 1, %s28
  %s31 = scalar_select 0, %s30, %s28
  $region1: #{tpu_custom_call.1} parent=0
    #allocation2 [shape = 'u8[65536]{0}', space=vmem, size = 0x10000, scoped, tag = 'input window, operand 1']
    #allocation3 [shape = 's32[2]{0}', space=sflag, size = 0x8, scoped, tag = 'scoped memory for tpu_custom_call.1']
    #allocation4 [shape = 's32[2]{0}', space=sflag, size = 0x8, scoped, tag = 'scoped memory for tpu_custom_call.1']
    #allocation5 [shape = 'u8[65536]{0}', space=vmem, size = 0x10000, scoped, tag = 'input window, operand 2']
    #allocation6 [shape = 's32[2]{0}', space=sflag, size = 0x8, scoped, tag = 'scoped memory for tpu_custom_call.1']
    #allocation7 [shape = 'u8[65536]{0}', space=vmem, size = 0x10000, scoped, tag = 'input window, operand 5, single buffered']
    #allocation8 [shape = 'u8[131072]{0}', space=vmem, size = 0x20000, scoped, tag = 'input window, operand 6, single buffered']
    #allocation9 [shape = 's32[1]{0}', space=sflag, size = 0x4, scoped, tag = 'scoped memory for tpu_custom_call.1']
    #allocation10 [shape = 'u8[65536]{0}', space=vmem, size = 0x10000, scoped, tag = 'input window, operand 8, single buffered']
    #allocation11 [shape = 'u8[65536]{0}', space=vmem, size = 0x10000, scoped, tag = 'input window, operand 10, single buffered']
    #allocation12 [shape = 's32[1]{0}', space=sflag, size = 0x4, scoped, tag = 'scoped memory for tpu_custom_call.1']
    #allocation13 [shape = 'u8[262144]{0}', space=vmem, size = 0x40000, scoped, tag = 'input window, operand 12, single buffered']
    #allocation14 [shape = 'u8[262144]{0}', space=vmem, size = 0x40000, scoped, tag = 'input window, operand 14, single buffered']
    #allocation15 [shape = 's32[1]{0}', space=sflag, size = 0x4, scoped, tag = 'scoped memory for tpu_custom_call.1']
    #allocation16 [shape = 'u8[524288]{0}', space=vmem, size = 0x80000, scoped, tag = 'input window, operand 20, single buffered']
    #allocation17 [shape = 'u8[524288]{0}', space=vmem, size = 0x80000, scoped, tag = 'input window, operand 22, single buffered']
    #allocation18 [shape = 's32[1]{0}', space=sflag, size = 0x4, scoped, tag = 'scoped memory for tpu_custom_call.1']
    #allocation19 [shape = 'u8[8192]{0}', space=vmem, size = 0x2000, scoped, tag = 'output window, operand 0']
    #allocation20 [shape = 'u8[8192]{0}', space=vmem, size = 0x2000, scoped, tag = 'output window, operand 1']
    #allocation21 [shape = 's32[2]{0}', space=sflag, size = 0x8, scoped, tag = 'scoped memory for tpu_custom_call.1']
    #allocation22 [shape = 'u8[65536]{0}', space=vmem, size = 0x10000, scoped, tag = 'output window, operand 2']
    %32 = vsyncpa [#allocation3], 0
    %s33 = scalar_lea.sflag [#allocation3], 1
    %34 = vsyncpa %s33, 0
    %35 = vsyncpa [#allocation6], 0
    %s36 = scalar_lea.sflag [#allocation6], 1
    %37 = vsyncpa %s36, 0
    %38 = vsyncpa [#allocation9], 0
    %39 = vsyncpa [#allocation12], 0
    %40 = vsyncpa [#allocation15], 0
    %41 = vsyncpa [#allocation18], 0
    %42 = vsyncpa [#allocation4], 0
    %s43 = scalar_lea.sflag [#allocation4], 1
    %44 = vsyncpa %s43, 0
    %45 = vsyncpa [#allocation21], 0
    %s46 = scalar_lea.sflag [#allocation21], 1
    %47 = vsyncpa %s46, 0
    loop: start=0, step=1, limit=6
    $region2: #{tpu_custom_call.1} parent=1 // loop_pre_header
      _
    $region3: #{tpu_custom_call.1} parent=1 // loop_header
      %s49 = sphi 0, %s53
      %p50 = scmp.ge.s32.totalorder %s49, 6
      %s59 = sphi 0, %s61
      %s62 = sphi 0, %s59
      %s63 = sphi 0, %s62
      %s79 = sphi 0, %s63
      %s85 = sphi 0, %s87
      %s88 = sphi 0, %s85
      %s89 = sphi 0, %s88
      %s105 = sphi 0, %s89
      %s111 = sphi 0, %s113
      %s114 = sphi 0, %s111
      %s115 = sphi 0, %s114
      %s131 = sphi 0, %s115
      %s137 = sphi 0, %s139
      %s140 = sphi 0, %s137
      %s141 = sphi 0, %s140
      %s157 = sphi 0, %s141
      %s163 = sphi 0, %s165
      %s166 = sphi 0, %s163
      %s167 = sphi 0, %s166
      %s183 = sphi 0, %s167
      %s187 = sphi 0, %s187
      %s189 = sphi 0, %s187
      %s190 = sphi 0, %s189
      %s204 = sphi 0, %s190
      %s208 = sphi 0, %s208
      %s210 = sphi 0, %s208
      %s211 = sphi 0, %s210
      %s225 = sphi 0, %s211
      %s229 = sphi 0, %s229
      %s231 = sphi 0, %s229
      %s232 = sphi 0, %s231
      %s246 = sphi 0, %s232
      %s250 = sphi 0, %s250
      %s252 = sphi 0, %s250
      %s253 = sphi 0, %s252
      %s267 = sphi 0, %s253
      %s271 = sphi 0, %s271
      %s273 = sphi 0, %s271
      %s274 = sphi 0, %s273
      %s288 = sphi 0, %s274
      %s292 = sphi 0, %s292
      %s294 = sphi 0, %s292
      %s295 = sphi 0, %s294
      %s309 = sphi 0, %s295
      %s313 = sphi 0, %s313
      %s315 = sphi 0, %s313
      %s316 = sphi 0, %s315
      %s330 = sphi 0, %s316
      %s334 = sphi 0, %s334
      %s336 = sphi 0, %s334
      %s337 = sphi 0, %s336
      %s351 = sphi 0, %s337
      %s355 = sphi 0, %s355
      %s357 = sphi 0, %s355
      %s358 = sphi 0, %s357
      %s372 = sphi 0, %s358
      %s376 = sphi 0, %s376
      %s378 = sphi 0, %s376
      %s379 = sphi 0, %s378
      %s393 = sphi 0, %s379
      %s397 = sphi 0, %s397
      %s399 = sphi 0, %s397
      %s400 = sphi 0, %s399
      %s414 = sphi 0, %s400
      %s418 = sphi 0, %s418
      %s420 = sphi 0, %s418
      %s421 = sphi 0, %s420
      %s435 = sphi 0, %s421
      %s439 = sphi 0, %s439
      %s441 = sphi 0, %s439
      %s442 = sphi 0, %s441
      %s456 = sphi 0, %s442
      %s460 = sphi 0, %s460
      %s462 = sphi 0, %s460
      %s463 = sphi 0, %s462
      %s477 = sphi 0, %s463
      %s481 = sphi 0, %s481
      %s483 = sphi 0, %s481
      %s484 = sphi 0, %s483
      %s498 = sphi 0, %s484
      %s502 = sphi 0, %s502
      %s504 = sphi 0, %s502
      %s505 = sphi 0, %s504
      %s519 = sphi 0, %s505
      %s523 = sphi 0, %s523
      %s525 = sphi 0, %s523
      %s526 = sphi 0, %s525
      %s540 = sphi 0, %s526
      %s544 = sphi 0, %s544
      %s546 = sphi 0, %s544
      %s547 = sphi 0, %s546
      %s561 = sphi 0, %s547
      %s565 = sphi 0, %s565
      %s567 = sphi 0, %s565
      %s568 = sphi 0, %s567
      %s582 = sphi 0, %s568
      %s588 = sphi 0, %s590
      %s591 = sphi 0, %s588
      %s592 = sphi 0, %s591
      %s608 = sphi 0, %s592
      %s614 = sphi 0, %s616
      %s617 = sphi 0, %s614
      %s618 = sphi 0, %s617
      %s634 = sphi 0, %s618
      %s640 = sphi 0, %s642
      %s643 = sphi 0, %s640
      %s644 = sphi 0, %s643
      %s660 = sphi 0, %s644
    $region4: #{tpu_custom_call.1} parent=1 // loop_header_branch
      %52 = sbr.rel (%p50) target = $region8
    $region5: #{tpu_custom_call.1} parent=1 // loop_body
      %s54 = ssub.s32 %s49, 1
      %s55 = ssub.s32 %s49, 2
      %s56 = sadd.s32 %s49, 1
      %s57 = ssub.s32 %s49, %s56
      %p58 = scmp.eq.s32.totalorder %s57, 0
      %s60 = sadd.s32 %s59, 1
      %s61 = scalar_select %p58, %s59, %s60
      %p64 = pneg %p58
      %p65 = scmp.eq.s32.totalorder %s49, 3
      %p66 = por %p64, %p65
      %p67 = scmp.ne.s32.totalorder %s59, %s62
      %p68 = scmp.eq.s32.totalorder %s49, 0
      %p69 = por %p67, %p68
      %p70 = scmp.ne.s32.totalorder %s59, %s62
      %p71 = scmp.eq.s32.totalorder %s54, 3
      %p72 = por %p70, %p71
      %p73 = scmp.ne.s32.totalorder %s62, %s63
      %p74 = scmp.eq.s32.totalorder %s54, 0
      %p75 = por %p73, %p74
      %p76 = scmp.ne.s32.totalorder %s62, %s63
      %p77 = scmp.eq.s32.totalorder %s55, 3
      %p78 = por %p76, %p77
      %p80 = scmp.ne.s32.totalorder %s63, %s79
      %p81 = scmp.eq.s32.totalorder %s55, 0
      %p82 = por %p80, %p81
      %s83 = ssub.s32 %s49, %s56
      %p84 = scmp.eq.s32.totalorder %s83, 0
      %s86 = sadd.s32 %s85, 1
      %s87 = scalar_select %p84, %s85, %s86
      %p90 = pneg %p84
      %p91 = scmp.eq.s32.totalorder %s49, 3
      %p92 = por %p90, %p91
      %p93 = scmp.ne.s32.totalorder %s85, %s88
      %p94 = scmp.eq.s32.totalorder %s49, 0
      %p95 = por %p93, %p94
      %p96 = scmp.ne.s32.totalorder %s85, %s88
      %p97 = scmp.eq.s32.totalorder %s54, 3
      %p98 = por %p96, %p97
      %p99 = scmp.ne.s32.totalorder %s88, %s89
      %p100 = scmp.eq.s32.totalorder %s54, 0
      %p101 = por %p99, %p100
      %p102 = scmp.ne.s32.totalorder %s88, %s89
      %p103 = scmp.eq.s32.totalorder %s55, 3
      %p104 = por %p102, %p103
      %p106 = scmp.ne.s32.totalorder %s89, %s105
      %p107 = scmp.eq.s32.totalorder %s55, 0
      %p108 = por %p106, %p107
      %s109 = ssub.s32 %s49, %s56
      %p110 = scmp.eq.s32.totalorder %s109, 0
      %s112 = sadd.s32 %s111, 1
      %s113 = scalar_select %p110, %s111, %s112
      %p116 = pneg %p110
      %p117 = scmp.eq.s32.totalorder %s49, 3
      %p118 = por %p116, %p117
      %p119 = scmp.ne.s32.totalorder %s111, %s114
      %p120 = scmp.eq.s32.totalorder %s49, 0
      %p121 = por %p119, %p120
      %p122 = scmp.ne.s32.totalorder %s111, %s114
      %p123 = scmp.eq.s32.totalorder %s54, 3
      %p124 = por %p122, %p123
      %p125 = scmp.ne.s32.totalorder %s114, %s115
      %p126 = scmp.eq.s32.totalorder %s54, 0
      %p127 = por %p125, %p126
      %p128 = scmp.ne.s32.totalorder %s114, %s115
      %p129 = scmp.eq.s32.totalorder %s55, 3
      %p130 = por %p128, %p129
      %p132 = scmp.ne.s32.totalorder %s115, %s131
      %p133 = scmp.eq.s32.totalorder %s55, 0
      %p134 = por %p132, %p133
      %s135 = ssub.s32 %s49, %s56
      %p136 = scmp.eq.s32.totalorder %s135, 0
      %s138 = sadd.s32 %s137, 1
      %s139 = scalar_select %p136, %s137, %s138
      %p142 = pneg %p136
      %p143 = scmp.eq.s32.totalorder %s49, 3
      %p144 = por %p142, %p143
      %p145 = scmp.ne.s32.totalorder %s137, %s140
      %p146 = scmp.eq.s32.totalorder %s49, 0
      %p147 = por %p145, %p146
      %p148 = scmp.ne.s32.totalorder %s137, %s140
      %p149 = scmp.eq.s32.totalorder %s54, 3
      %p150 = por %p148, %p149
      %p151 = scmp.ne.s32.totalorder %s140, %s141
      %p152 = scmp.eq.s32.totalorder %s54, 0
      %p153 = por %p151, %p152
      %p154 = scmp.ne.s32.totalorder %s140, %s141
      %p155 = scmp.eq.s32.totalorder %s55, 3
      %p156 = por %p154, %p155
      %p158 = scmp.ne.s32.totalorder %s141, %s157
      %p159 = scmp.eq.s32.totalorder %s55, 0
      %p160 = por %p158, %p159
      %s161 = ssub.s32 %s49, %s56
      %p162 = scmp.eq.s32.totalorder %s161, 0
      %s164 = sadd.s32 %s163, 1
      %s165 = scalar_select %p162, %s163, %s164
      %p168 = pneg %p162
      %p169 = scmp.eq.s32.totalorder %s49, 3
      %p170 = por %p168, %p169
      %p171 = scmp.ne.s32.totalorder %s163, %s166
      %p172 = scmp.eq.s32.totalorder %s49, 0
      %p173 = por %p171, %p172
      %p174 = scmp.ne.s32.totalorder %s163, %s166
      %p175 = scmp.eq.s32.totalorder %s54, 3
      %p176 = por %p174, %p175
      %p177 = scmp.ne.s32.totalorder %s166, %s167
      %p178 = scmp.eq.s32.totalorder %s54, 0
      %p179 = por %p177, %p178
      %p180 = scmp.ne.s32.totalorder %s166, %s167
      %p181 = scmp.eq.s32.totalorder %s55, 3
      %p182 = por %p180, %p181
      %p184 = scmp.ne.s32.totalorder %s167, %s183
      %p185 = scmp.eq.s32.totalorder %s55, 0
      %p186 = por %p184, %p185
      %s188 = sadd.s32 %s187, 1
      %p191 = scmp.eq.s32.totalorder %s49, 3
      %p192 = scmp.ne.s32.totalorder %s187, %s189
      %p193 = scmp.eq.s32.totalorder %s49, 0
      %p194 = por %p192, %p193
      %p195 = scmp.ne.s32.totalorder %s187, %s189
      %p196 = scmp.eq.s32.totalorder %s54, 3
      %p197 = por %p195, %p196
      %p198 = scmp.ne.s32.totalorder %s189, %s190
      %p199 = scmp.eq.s32.totalorder %s54, 0
      %p200 = por %p198, %p199
      %p201 = scmp.ne.s32.totalorder %s189, %s190
      %p202 = scmp.eq.s32.totalorder %s55, 3
      %p203 = por %p201, %p202
      %p205 = scmp.ne.s32.totalorder %s190, %s204
      %p206 = scmp.eq.s32.totalorder %s55, 0
      %p207 = por %p205, %p206
      %s209 = sadd.s32 %s208, 1
      %p212 = scmp.eq.s32.totalorder %s49, 3
      %p213 = scmp.ne.s32.totalorder %s208, %s210
      %p214 = scmp.eq.s32.totalorder %s49, 0
      %p215 = por %p213, %p214
      %p216 = scmp.ne.s32.totalorder %s208, %s210
      %p217 = scmp.eq.s32.totalorder %s54, 3
      %p218 = por %p216, %p217
      %p219 = scmp.ne.s32.totalorder %s210, %s211
      %p220 = scmp.eq.s32.totalorder %s54, 0
      %p221 = por %p219, %p220
      %p222 = scmp.ne.s32.totalorder %s210, %s211
      %p223 = scmp.eq.s32.totalorder %s55, 3
      %p224 = por %p222, %p223
      %p226 = scmp.ne.s32.totalorder %s211, %s225
      %p227 = scmp.eq.s32.totalorder %s55, 0
      %p228 = por %p226, %p227
      %s230 = sadd.s32 %s229, 1
      %p233 = scmp.eq.s32.totalorder %s49, 3
      %p234 = scmp.ne.s32.totalorder %s229, %s231
      %p235 = scmp.eq.s32.totalorder %s49, 0
      %p236 = por %p234, %p235
      %p237 = scmp.ne.s32.totalorder %s229, %s231
      %p238 = scmp.eq.s32.totalorder %s54, 3
      %p239 = por %p237, %p238
      %p240 = scmp.ne.s32.totalorder %s231, %s232
      %p241 = scmp.eq.s32.totalorder %s54, 0
      %p242 = por %p240, %p241
      %p243 = scmp.ne.s32.totalorder %s231, %s232
      %p244 = scmp.eq.s32.totalorder %s55, 3
      %p245 = por %p243, %p244
      %p247 = scmp.ne.s32.totalorder %s232, %s246
      %p248 = scmp.eq.s32.totalorder %s55, 0
      %p249 = por %p247, %p248
      %s251 = sadd.s32 %s250, 1
      %p254 = scmp.eq.s32.totalorder %s49, 3
      %p255 = scmp.ne.s32.totalorder %s250, %s252
      %p256 = scmp.eq.s32.totalorder %s49, 0
      %p257 = por %p255, %p256
      %p258 = scmp.ne.s32.totalorder %s250, %s252
      %p259 = scmp.eq.s32.totalorder %s54, 3
      %p260 = por %p258, %p259
      %p261 = scmp.ne.s32.totalorder %s252, %s253
      %p262 = scmp.eq.s32.totalorder %s54, 0
      %p263 = por %p261, %p262
      %p264 = scmp.ne.s32.totalorder %s252, %s253
      %p265 = scmp.eq.s32.totalorder %s55, 3
      %p266 = por %p264, %p265
      %p268 = scmp.ne.s32.totalorder %s253, %s267
      %p269 = scmp.eq.s32.totalorder %s55, 0
      %p270 = por %p268, %p269
      %s272 = sadd.s32 %s271, 1
      %p275 = scmp.eq.s32.totalorder %s49, 3
      %p276 = scmp.ne.s32.totalorder %s271, %s273
      %p277 = scmp.eq.s32.totalorder %s49, 0
      %p278 = por %p276, %p277
      %p279 = scmp.ne.s32.totalorder %s271, %s273
      %p280 = scmp.eq.s32.totalorder %s54, 3
      %p281 = por %p279, %p280
      %p282 = scmp.ne.s32.totalorder %s273, %s274
      %p283 = scmp.eq.s32.totalorder %s54, 0
      %p284 = por %p282, %p283
      %p285 = scmp.ne.s32.totalorder %s273, %s274
      %p286 = scmp.eq.s32.totalorder %s55, 3
      %p287 = por %p285, %p286
      %p289 = scmp.ne.s32.totalorder %s274, %s288
      %p290 = scmp.eq.s32.totalorder %s55, 0
      %p291 = por %p289, %p290
      %s293 = sadd.s32 %s292, 1
      %p296 = scmp.eq.s32.totalorder %s49, 3
      %p297 = scmp.ne.s32.totalorder %s292, %s294
      %p298 = scmp.eq.s32.totalorder %s49, 0
      %p299 = por %p297, %p298
      %p300 = scmp.ne.s32.totalorder %s292, %s294
      %p301 = scmp.eq.s32.totalorder %s54, 3
      %p302 = por %p300, %p301
      %p303 = scmp.ne.s32.totalorder %s294, %s295
      %p304 = scmp.eq.s32.totalorder %s54, 0
      %p305 = por %p303, %p304
      %p306 = scmp.ne.s32.totalorder %s294, %s295
      %p307 = scmp.eq.s32.totalorder %s55, 3
      %p308 = por %p306, %p307
      %p310 = scmp.ne.s32.totalorder %s295, %s309
      %p311 = scmp.eq.s32.totalorder %s55, 0
      %p312 = por %p310, %p311
      %s314 = sadd.s32 %s313, 1
      %p317 = scmp.eq.s32.totalorder %s49, 3
      %p318 = scmp.ne.s32.totalorder %s313, %s315
      %p319 = scmp.eq.s32.totalorder %s49, 0
      %p320 = por %p318, %p319
      %p321 = scmp.ne.s32.totalorder %s313, %s315
      %p322 = scmp.eq.s32.totalorder %s54, 3
      %p323 = por %p321, %p322
      %p324 = scmp.ne.s32.totalorder %s315, %s316
      %p325 = scmp.eq.s32.totalorder %s54, 0
      %p326 = por %p324, %p325
      %p327 = scmp.ne.s32.totalorder %s315, %s316
      %p328 = scmp.eq.s32.totalorder %s55, 3
      %p329 = por %p327, %p328
      %p331 = scmp.ne.s32.totalorder %s316, %s330
      %p332 = scmp.eq.s32.totalorder %s55, 0
      %p333 = por %p331, %p332
      %s335 = sadd.s32 %s334, 1
      %p338 = scmp.eq.s32.totalorder %s49, 3
      %p339 = scmp.ne.s32.totalorder %s334, %s336
      %p340 = scmp.eq.s32.totalorder %s49, 0
      %p341 = por %p339, %p340
      %p342 = scmp.ne.s32.totalorder %s334, %s336
      %p343 = scmp.eq.s32.totalorder %s54, 3
      %p344 = por %p342, %p343
      %p345 = scmp.ne.s32.totalorder %s336, %s337
      %p346 = scmp.eq.s32.totalorder %s54, 0
      %p347 = por %p345, %p346
      %p348 = scmp.ne.s32.totalorder %s336, %s337
      %p349 = scmp.eq.s32.totalorder %s55, 3
      %p350 = por %p348, %p349
      %p352 = scmp.ne.s32.totalorder %s337, %s351
      %p353 = scmp.eq.s32.totalorder %s55, 0
      %p354 = por %p352, %p353
      %s356 = sadd.s32 %s355, 1
      %p359 = scmp.eq.s32.totalorder %s49, 3
      %p360 = scmp.ne.s32.totalorder %s355, %s357
      %p361 = scmp.eq.s32.totalorder %s49, 0
      %p362 = por %p360, %p361
      %p363 = scmp.ne.s32.totalorder %s355, %s357
      %p364 = scmp.eq.s32.totalorder %s54, 3
      %p365 = por %p363, %p364
      %p366 = scmp.ne.s32.totalorder %s357, %s358
      %p367 = scmp.eq.s32.totalorder %s54, 0
      %p368 = por %p366, %p367
      %p369 = scmp.ne.s32.totalorder %s357, %s358
      %p370 = scmp.eq.s32.totalorder %s55, 3
      %p371 = por %p369, %p370
      %p373 = scmp.ne.s32.totalorder %s358, %s372
      %p374 = scmp.eq.s32.totalorder %s55, 0
      %p375 = por %p373, %p374
      %s377 = sadd.s32 %s376, 1
      %p380 = scmp.eq.s32.totalorder %s49, 3
      %p381 = scmp.ne.s32.totalorder %s376, %s378
      %p382 = scmp.eq.s32.totalorder %s49, 0
      %p383 = por %p381, %p382
      %p384 = scmp.ne.s32.totalorder %s376, %s378
      %p385 = scmp.eq.s32.totalorder %s54, 3
      %p386 = por %p384, %p385
      %p387 = scmp.ne.s32.totalorder %s378, %s379
      %p388 = scmp.eq.s32.totalorder %s54, 0
      %p389 = por %p387, %p388
      %p390 = scmp.ne.s32.totalorder %s378, %s379
      %p391 = scmp.eq.s32.totalorder %s55, 3
      %p392 = por %p390, %p391
      %p394 = scmp.ne.s32.totalorder %s379, %s393
      %p395 = scmp.eq.s32.totalorder %s55, 0
      %p396 = por %p394, %p395
      %s398 = sadd.s32 %s397, 1
      %p401 = scmp.eq.s32.totalorder %s49, 3
      %p402 = scmp.ne.s32.totalorder %s397, %s399
      %p403 = scmp.eq.s32.totalorder %s49, 0
      %p404 = por %p402, %p403
      %p405 = scmp.ne.s32.totalorder %s397, %s399
      %p406 = scmp.eq.s32.totalorder %s54, 3
      %p407 = por %p405, %p406
      %p408 = scmp.ne.s32.totalorder %s399, %s400
      %p409 = scmp.eq.s32.totalorder %s54, 0
      %p410 = por %p408, %p409
      %p411 = scmp.ne.s32.totalorder %s399, %s400
      %p412 = scmp.eq.s32.totalorder %s55, 3
      %p413 = por %p411, %p412
      %p415 = scmp.ne.s32.totalorder %s400, %s414
      %p416 = scmp.eq.s32.totalorder %s55, 0
      %p417 = por %p415, %p416
      %s419 = sadd.s32 %s418, 1
      %p422 = scmp.eq.s32.totalorder %s49, 3
      %p423 = scmp.ne.s32.totalorder %s418, %s420
      %p424 = scmp.eq.s32.totalorder %s49, 0
      %p425 = por %p423, %p424
      %p426 = scmp.ne.s32.totalorder %s418, %s420
      %p427 = scmp.eq.s32.totalorder %s54, 3
      %p428 = por %p426, %p427
      %p429 = scmp.ne.s32.totalorder %s420, %s421
      %p430 = scmp.eq.s32.totalorder %s54, 0
      %p431 = por %p429, %p430
      %p432 = scmp.ne.s32.totalorder %s420, %s421
      %p433 = scmp.eq.s32.totalorder %s55, 3
      %p434 = por %p432, %p433
      %p436 = scmp.ne.s32.totalorder %s421, %s435
      %p437 = scmp.eq.s32.totalorder %s55, 0
      %p438 = por %p436, %p437
      %s440 = sadd.s32 %s439, 1
      %p443 = scmp.eq.s32.totalorder %s49, 3
      %p444 = scmp.ne.s32.totalorder %s439, %s441
      %p445 = scmp.eq.s32.totalorder %s49, 0
      %p446 = por %p444, %p445
      %p447 = scmp.ne.s32.totalorder %s439, %s441
      %p448 = scmp.eq.s32.totalorder %s54, 3
      %p449 = por %p447, %p448
      %p450 = scmp.ne.s32.totalorder %s441, %s442
      %p451 = scmp.eq.s32.totalorder %s54, 0
      %p452 = por %p450, %p451
      %p453 = scmp.ne.s32.totalorder %s441, %s442
      %p454 = scmp.eq.s32.totalorder %s55, 3
      %p455 = por %p453, %p454
      %p457 = scmp.ne.s32.totalorder %s442, %s456
      %p458 = scmp.eq.s32.totalorder %s55, 0
      %p459 = por %p457, %p458
      %s461 = sadd.s32 %s460, 1
      %p464 = scmp.eq.s32.totalorder %s49, 3
      %p465 = scmp.ne.s32.totalorder %s460, %s462
      %p466 = scmp.eq.s32.totalorder %s49, 0
      %p467 = por %p465, %p466
      %p468 = scmp.ne.s32.totalorder %s460, %s462
      %p469 = scmp.eq.s32.totalorder %s54, 3
      %p470 = por %p468, %p469
      %p471 = scmp.ne.s32.totalorder %s462, %s463
      %p472 = scmp.eq.s32.totalorder %s54, 0
      %p473 = por %p471, %p472
      %p474 = scmp.ne.s32.totalorder %s462, %s463
      %p475 = scmp.eq.s32.totalorder %s55, 3
      %p476 = por %p474, %p475
      %p478 = scmp.ne.s32.totalorder %s463, %s477
      %p479 = scmp.eq.s32.totalorder %s55, 0
      %p480 = por %p478, %p479
      %s482 = sadd.s32 %s481, 1
      %p485 = scmp.eq.s32.totalorder %s49, 3
      %p486 = scmp.ne.s32.totalorder %s481, %s483
      %p487 = scmp.eq.s32.totalorder %s49, 0
      %p488 = por %p486, %p487
      %p489 = scmp.ne.s32.totalorder %s481, %s483
      %p490 = scmp.eq.s32.totalorder %s54, 3
      %p491 = por %p489, %p490
      %p492 = scmp.ne.s32.totalorder %s483, %s484
      %p493 = scmp.eq.s32.totalorder %s54, 0
      %p494 = por %p492, %p493
      %p495 = scmp.ne.s32.totalorder %s483, %s484
      %p496 = scmp.eq.s32.totalorder %s55, 3
      %p497 = por %p495, %p496
      %p499 = scmp.ne.s32.totalorder %s484, %s498
      %p500 = scmp.eq.s32.totalorder %s55, 0
      %p501 = por %p499, %p500
      %s503 = sadd.s32 %s502, 1
      %p506 = scmp.eq.s32.totalorder %s49, 3
      %p507 = scmp.ne.s32.totalorder %s502, %s504
      %p508 = scmp.eq.s32.totalorder %s49, 0
      %p509 = por %p507, %p508
      %p510 = scmp.ne.s32.totalorder %s502, %s504
      %p511 = scmp.eq.s32.totalorder %s54, 3
      %p512 = por %p510, %p511
      %p513 = scmp.ne.s32.totalorder %s504, %s505
      %p514 = scmp.eq.s32.totalorder %s54, 0
      %p515 = por %p513, %p514
      %p516 = scmp.ne.s32.totalorder %s504, %s505
      %p517 = scmp.eq.s32.totalorder %s55, 3
      %p518 = por %p516, %p517
      %p520 = scmp.ne.s32.totalorder %s505, %s519
      %p521 = scmp.eq.s32.totalorder %s55, 0
      %p522 = por %p520, %p521
      %s524 = sadd.s32 %s523, 1
      %p527 = scmp.eq.s32.totalorder %s49, 3
      %p528 = scmp.ne.s32.totalorder %s523, %s525
      %p529 = scmp.eq.s32.totalorder %s49, 0
      %p530 = por %p528, %p529
      %p531 = scmp.ne.s32.totalorder %s523, %s525
      %p532 = scmp.eq.s32.totalorder %s54, 3
      %p533 = por %p531, %p532
      %p534 = scmp.ne.s32.totalorder %s525, %s526
      %p535 = scmp.eq.s32.totalorder %s54, 0
      %p536 = por %p534, %p535
      %p537 = scmp.ne.s32.totalorder %s525, %s526
      %p538 = scmp.eq.s32.totalorder %s55, 3
      %p539 = por %p537, %p538
      %p541 = scmp.ne.s32.totalorder %s526, %s540
      %p542 = scmp.eq.s32.totalorder %s55, 0
      %p543 = por %p541, %p542
      %s545 = sadd.s32 %s544, 1
      %p548 = scmp.eq.s32.totalorder %s49, 3
      %p549 = scmp.ne.s32.totalorder %s544, %s546
      %p550 = scmp.eq.s32.totalorder %s49, 0
      %p551 = por %p549, %p550
      %p552 = scmp.ne.s32.totalorder %s544, %s546
      %p553 = scmp.eq.s32.totalorder %s54, 3
      %p554 = por %p552, %p553
      %p555 = scmp.ne.s32.totalorder %s546, %s547
      %p556 = scmp.eq.s32.totalorder %s54, 0
      %p557 = por %p555, %p556
      %p558 = scmp.ne.s32.totalorder %s546, %s547
      %p559 = scmp.eq.s32.totalorder %s55, 3
      %p560 = por %p558, %p559
      %p562 = scmp.ne.s32.totalorder %s547, %s561
      %p563 = scmp.eq.s32.totalorder %s55, 0
      %p564 = por %p562, %p563
      %s566 = sadd.s32 %s565, 1
      %p569 = scmp.eq.s32.totalorder %s49, 3
      %p570 = scmp.ne.s32.totalorder %s565, %s567
      %p571 = scmp.eq.s32.totalorder %s49, 0
      %p572 = por %p570, %p571
      %p573 = scmp.ne.s32.totalorder %s565, %s567
      %p574 = scmp.eq.s32.totalorder %s54, 3
      %p575 = por %p573, %p574
      %p576 = scmp.ne.s32.totalorder %s567, %s568
      %p577 = scmp.eq.s32.totalorder %s54, 0
      %p578 = por %p576, %p577
      %p579 = scmp.ne.s32.totalorder %s567, %s568
      %p580 = scmp.eq.s32.totalorder %s55, 3
      %p581 = por %p579, %p580
      %p583 = scmp.ne.s32.totalorder %s568, %s582
      %p584 = scmp.eq.s32.totalorder %s55, 0
      %p585 = por %p583, %p584
      %s586 = ssub.s32 %s49, %s56
      %p587 = scmp.eq.s32.totalorder %s586, 0
      %s589 = sadd.s32 %s588, 1
      %s590 = scalar_select %p587, %s588, %s589
      %p593 = pneg %p587
      %p594 = scmp.eq.s32.totalorder %s49, 3
      %p595 = por %p593, %p594
      %p596 = scmp.ne.s32.totalorder %s588, %s591
      %p597 = scmp.eq.s32.totalorder %s49, 0
      %p598 = por %p596, %p597
      %p599 = scmp.ne.s32.totalorder %s588, %s591
      %p600 = scmp.eq.s32.totalorder %s54, 3
      %p601 = por %p599, %p600
      %p602 = scmp.ne.s32.totalorder %s591, %s592
      %p603 = scmp.eq.s32.totalorder %s54, 0
      %p604 = por %p602, %p603
      %p605 = scmp.ne.s32.totalorder %s591, %s592
      %p606 = scmp.eq.s32.totalorder %s55, 3
      %p607 = por %p605, %p606
      %p609 = scmp.ne.s32.totalorder %s592, %s608
      %p610 = scmp.eq.s32.totalorder %s55, 0
      %p611 = por %p609, %p610
      %s612 = ssub.s32 %s49, %s56
      %p613 = scmp.eq.s32.totalorder %s612, 0
      %s615 = sadd.s32 %s614, 1
      %s616 = scalar_select %p613, %s614, %s615
      %p619 = pneg %p613
      %p620 = scmp.eq.s32.totalorder %s49, 3
      %p621 = por %p619, %p620
      %p622 = scmp.ne.s32.totalorder %s614, %s617
      %p623 = scmp.eq.s32.totalorder %s49, 0
      %p624 = por %p622, %p623
      %p625 = scmp.ne.s32.totalorder %s614, %s617
      %p626 = scmp.eq.s32.totalorder %s54, 3
      %p627 = por %p625, %p626
      %p628 = scmp.ne.s32.totalorder %s617, %s618
      %p629 = scmp.eq.s32.totalorder %s54, 0
      %p630 = por %p628, %p629
      %p631 = scmp.ne.s32.totalorder %s617, %s618
      %p632 = scmp.eq.s32.totalorder %s55, 3
      %p633 = por %p631, %p632
      %p635 = scmp.ne.s32.totalorder %s618, %s634
      %p636 = scmp.eq.s32.totalorder %s55, 0
      %p637 = por %p635, %p636
      %s638 = ssub.s32 %s49, %s56
      %p639 = scmp.eq.s32.totalorder %s638, 0
      %s641 = sadd.s32 %s640, 1
      %s642 = scalar_select %p639, %s640, %s641
      %p645 = pneg %p639
      %p646 = scmp.eq.s32.totalorder %s49, 3
      %p647 = por %p645, %p646
      %p648 = scmp.ne.s32.totalorder %s640, %s643
      %p649 = scmp.eq.s32.totalorder %s49, 0
      %p650 = por %p648, %p649
      %p651 = scmp.ne.s32.totalorder %s640, %s643
      %p652 = scmp.eq.s32.totalorder %s54, 3
      %p653 = por %p651, %p652
      %p654 = scmp.ne.s32.totalorder %s643, %s644
      %p655 = scmp.eq.s32.totalorder %s54, 0
      %p656 = por %p654, %p655
      %p657 = scmp.ne.s32.totalorder %s643, %s644
      %p658 = scmp.eq.s32.totalorder %s55, 3
      %p659 = por %p657, %p658
      %p661 = scmp.ne.s32.totalorder %s644, %s660
      %p662 = scmp.eq.s32.totalorder %s55, 0
      %p663 = por %p661, %p662
      %p664 = scmp.le.s32.totalorder 1, %s49
      %p665 = scmp.lt.s32.totalorder %s49, 5
      %p666 = pnand %p664, %p665
      %p667 = pneg %p666
      // Predicated region
      $region9: #{tpu_custom_call.1} parent=5 // pred_check
        _
      $region10: #{tpu_custom_call.1} parent=5 // pred_check_branch
        %669 = sbr.rel (%p666) target = $region12
      $region11: #{tpu_custom_call.1} parent=5 // pred_region
        %s670 = ssub.s32 %s49, 1
        // Predicated region
        $region13: #{tpu_custom_call.1} parent=11 // pred_check
          %p671 = pneg %p200
        $region14: #{tpu_custom_call.1} parent=11 // pred_check_branch
          %673 = sbr.rel (%p671) target = $region16
        $region15: #{tpu_custom_call.1} parent=11 // pred_region
          %s675 = ssub.s32 2048, 2048
          %676 = vsyncadd [#allocation6], %s675
          %s677 = sshll.u32 [#allocation7], 4
          %s678 = int_to_ptr.vmem [resolvable:$true] %s677
          %683 = dma.hbm_to_vmem [thread:$0]  %s5, 2048, %s678, [#allocation6], 128, 128, 8
        $region16: #{tpu_custom_call.1} parent=11 // pred_fallthru
          _
        // Predicated region
        $region17: #{tpu_custom_call.1} parent=11 // pred_check
          %p684 = pneg %p221
        $region18: #{tpu_custom_call.1} parent=11 // pred_check_branch
          %686 = sbr.rel (%p684) target = $region20
        $region19: #{tpu_custom_call.1} parent=11 // pred_region
          %s688 = ssub.s32 4096, 4096
          %689 = vsyncadd [#allocation9], %s688
          %s690 = sshll.u32 [#allocation8], 4
          %s691 = int_to_ptr.vmem [resolvable:$true] %s690
          %696 = dma.hbm_to_vmem [thread:$0]  %s6, 4096, %s691, [#allocation9], 128, 128, 8
        $region20: #{tpu_custom_call.1} parent=11 // pred_fallthru
          _
        // Predicated region
        $region21: #{tpu_custom_call.1} parent=11 // pred_check
          %p697 = pneg %p242
        $region22: #{tpu_custom_call.1} parent=11 // pred_check_branch
          %699 = sbr.rel (%p697) target = $region24
        $region23: #{tpu_custom_call.1} parent=11 // pred_region
          _
        $region24: #{tpu_custom_call.1} parent=11 // pred_fallthru
          _
        // Predicated region
        $region25: #{tpu_custom_call.1} parent=11 // pred_check
          %p700 = pneg %p263
        $region26: #{tpu_custom_call.1} parent=11 // pred_check_branch
          %702 = sbr.rel (%p700) target = $region28
        $region27: #{tpu_custom_call.1} parent=11 // pred_region
          %s704 = ssub.s32 2048, 2048
          %705 = vsyncadd [#allocation9], %s704
          %s706 = sshll.u32 [#allocation10], 4
          %s707 = int_to_ptr.vmem [resolvable:$true] %s706
          %712 = dma.hbm_to_vmem [thread:$0]  %s8, 2048, %s707, [#allocation9], 128, 128, 8
        $region28: #{tpu_custom_call.1} parent=11 // pred_fallthru
          _
        // Predicated region
        $region29: #{tpu_custom_call.1} parent=11 // pred_check
          %p713 = pneg %p284
        $region30: #{tpu_custom_call.1} parent=11 // pred_check_branch
          %715 = sbr.rel (%p713) target = $region32
        $region31: #{tpu_custom_call.1} parent=11 // pred_region
          _
        $region32: #{tpu_custom_call.1} parent=11 // pred_fallthru
          _
        // Predicated region
        $region33: #{tpu_custom_call.1} parent=11 // pred_check
          %p716 = pneg %p305
        $region34: #{tpu_custom_call.1} parent=11 // pred_check_branch
          %718 = sbr.rel (%p716) target = $region36
        $region35: #{tpu_custom_call.1} parent=11 // pred_region
          %s720 = ssub.s32 2048, 2048
          %721 = vsyncadd [#allocation12], %s720
          %s722 = sshll.u32 [#allocation11], 4
          %s723 = int_to_ptr.vmem [resolvable:$true] %s722
          %728 = dma.hbm_to_vmem [thread:$0]  %s10, 2048, %s723, [#allocation12], 128, 128, 8
        $region36: #{tpu_custom_call.1} parent=11 // pred_fallthru
          _
        // Predicated region
        $region37: #{tpu_custom_call.1} parent=11 // pred_check
          %p729 = pneg %p326
        $region38: #{tpu_custom_call.1} parent=11 // pred_check_branch
          %731 = sbr.rel (%p729) target = $region40
        $region39: #{tpu_custom_call.1} parent=11 // pred_region
          _
        $region40: #{tpu_custom_call.1} parent=11 // pred_fallthru
          _
        // Predicated region
        $region41: #{tpu_custom_call.1} parent=11 // pred_check
          %p732 = pneg %p347
        $region42: #{tpu_custom_call.1} parent=11 // pred_check_branch
          %734 = sbr.rel (%p732) target = $region44
        $region43: #{tpu_custom_call.1} parent=11 // pred_region
          %s736 = ssub.s32 8192, 8192
          %737 = vsyncadd [#allocation12], %s736
          %s738 = sshll.u32 [#allocation13], 4
          %s739 = int_to_ptr.vmem [resolvable:$true] %s738
          %744 = dma.hbm_to_vmem [thread:$0]  %s12, 8192, %s739, [#allocation12], 512, 512, 32
        $region44: #{tpu_custom_call.1} parent=11 // pred_fallthru
          _
        // Predicated region
        $region45: #{tpu_custom_call.1} parent=11 // pred_check
          %p745 = pneg %p368
        $region46: #{tpu_custom_call.1} parent=11 // pred_check_branch
          %747 = sbr.rel (%p745) target = $region48
        $region47: #{tpu_custom_call.1} parent=11 // pred_region
          _
        $region48: #{tpu_custom_call.1} parent=11 // pred_fallthru
          _
        // Predicated region
        $region49: #{tpu_custom_call.1} parent=11 // pred_check
          %p748 = pneg %p389
        $region50: #{tpu_custom_call.1} parent=11 // pred_check_branch
          %750 = sbr.rel (%p748) target = $region52
        $region51: #{tpu_custom_call.1} parent=11 // pred_region
          %s752 = ssub.s32 8192, 8192
          %753 = vsyncadd [#allocation15], %s752
          %s754 = sshll.u32 [#allocation14], 4
          %s755 = int_to_ptr.vmem [resolvable:$true] %s754
          %760 = dma.hbm_to_vmem [thread:$0]  %s14, 8192, %s755, [#allocation15], 128, 128, 8
        $region52: #{tpu_custom_call.1} parent=11 // pred_fallthru
          _
        // Predicated region
        $region53: #{tpu_custom_call.1} parent=11 // pred_check
          %p761 = pneg %p410
        $region54: #{tpu_custom_call.1} parent=11 // pred_check_branch
          %763 = sbr.rel (%p761) target = $region56
        $region55: #{tpu_custom_call.1} parent=11 // pred_region
          _
        $region56: #{tpu_custom_call.1} parent=11 // pred_fallthru
          _
        // Predicated region
        $region57: #{tpu_custom_call.1} parent=11 // pred_check
          %p764 = pneg %p431
        $region58: #{tpu_custom_call.1} parent=11 // pred_check_branch
          %766 = sbr.rel (%p764) target = $region60
        $region59: #{tpu_custom_call.1} parent=11 // pred_region
          _
        $region60: #{tpu_custom_call.1} parent=11 // pred_fallthru
          _
        // Predicated region
        $region61: #{tpu_custom_call.1} parent=11 // pred_check
          %p767 = pneg %p452
        $region62: #{tpu_custom_call.1} parent=11 // pred_check_branch
          %769 = sbr.rel (%p767) target = $region64
        $region63: #{tpu_custom_call.1} parent=11 // pred_region
          _
        $region64: #{tpu_custom_call.1} parent=11 // pred_fallthru
          _
        // Predicated region
        $region65: #{tpu_custom_call.1} parent=11 // pred_check
          %p770 = pneg %p473
        $region66: #{tpu_custom_call.1} parent=11 // pred_check_branch
          %772 = sbr.rel (%p770) target = $region68
        $region67: #{tpu_custom_call.1} parent=11 // pred_region
          _
        $region68: #{tpu_custom_call.1} parent=11 // pred_fallthru
          _
        // Predicated region
        $region69: #{tpu_custom_call.1} parent=11 // pred_check
          %p773 = pneg %p494
        $region70: #{tpu_custom_call.1} parent=11 // pred_check_branch
          %775 = sbr.rel (%p773) target = $region72
        $region71: #{tpu_custom_call.1} parent=11 // pred_region
          _
        $region72: #{tpu_custom_call.1} parent=11 // pred_fallthru
          _
        // Predicated region
        $region73: #{tpu_custom_call.1} parent=11 // pred_check
          %p776 = pneg %p515
        $region74: #{tpu_custom_call.1} parent=11 // pred_check_branch
          %778 = sbr.rel (%p776) target = $region76
        $region75: #{tpu_custom_call.1} parent=11 // pred_region
          %s780 = ssub.s32 16384, 16384
          %781 = vsyncadd [#allocation15], %s780
          %s782 = sshll.u32 [#allocation16], 4
          %s783 = int_to_ptr.vmem [resolvable:$true] %s782
          %788 = dma.hbm_to_vmem [thread:$0]  %s20, 16384, %s783, [#allocation15], 1024, 1024, 64
        $region76: #{tpu_custom_call.1} parent=11 // pred_fallthru
          _
        // Predicated region
        $region77: #{tpu_custom_call.1} parent=11 // pred_check
          %p789 = pneg %p536
        $region78: #{tpu_custom_call.1} parent=11 // pred_check_branch
          %791 = sbr.rel (%p789) target = $region80
        $region79: #{tpu_custom_call.1} parent=11 // pred_region
          _
        $region80: #{tpu_custom_call.1} parent=11 // pred_fallthru
          _
        // Predicated region
        $region81: #{tpu_custom_call.1} parent=11 // pred_check
          %p792 = pneg %p557
        $region82: #{tpu_custom_call.1} parent=11 // pred_check_branch
          %794 = sbr.rel (%p792) target = $region84
        $region83: #{tpu_custom_call.1} parent=11 // pred_region
          %s796 = ssub.s32 16384, 16384
          %797 = vsyncadd [#allocation18], %s796
          %s798 = sshll.u32 [#allocation17], 4
          %s799 = int_to_ptr.vmem [resolvable:$true] %s798
          %804 = dma.hbm_to_vmem [thread:$0]  %s22, 16384, %s799, [#allocation18], 128, 128, 8
        $region84: #{tpu_custom_call.1} parent=11 // pred_fallthru
          _
        // Predicated region
        $region85: #{tpu_custom_call.1} parent=11 // pred_check
          %p805 = pneg %p578
        $region86: #{tpu_custom_call.1} parent=11 // pred_check_branch
          %807 = sbr.rel (%p805) target = $region88
        $region87: #{tpu_custom_call.1} parent=11 // pred_region
          _
        $region88: #{tpu_custom_call.1} parent=11 // pred_fallthru
          _
      $region12: #{tpu_custom_call.1} parent=5 // pred_fallthru
        _
      %p808 = scmp.lt.s32.totalorder %s49, 4
      // Predicated region
      $region89: #{tpu_custom_call.1} parent=5 // pred_check
        %p809 = pneg %p808
      $region90: #{tpu_custom_call.1} parent=5 // pred_check_branch
        %811 = sbr.rel (%p809) target = $region92
      $region91: #{tpu_custom_call.1} parent=5 // pred_region
        // Predicated region
        $region93: #{tpu_custom_call.1} parent=91 // pred_check
          %p812 = pneg %p69
        $region94: #{tpu_custom_call.1} parent=91 // pred_check_branch
          %814 = sbr.rel (%p812) target = $region96
        $region95: #{tpu_custom_call.1} parent=91 // pred_region
          %p815 = scmp.lt.s32.totalorder %s49, 3
          %s816 = scalar_select %p815, %s49, 3
          %s817 = smul.addr %s816, 8
          %s818 = scalar_lea.vmem %s0, %s817
        $region96: #{tpu_custom_call.1} parent=91 // pred_fallthru
          _
        // Predicated region
        $region97: #{tpu_custom_call.1} parent=91 // pred_check
          %p819 = pneg %p95
        $region98: #{tpu_custom_call.1} parent=91 // pred_check_branch
          %821 = sbr.rel (%p819) target = $region100
        $region99: #{tpu_custom_call.1} parent=91 // pred_region
          %s822 = sand.u32 %s85, 1
          %s823 = scalar_lea.sflag [#allocation3], %s822
          %s824 = sand.u32 %s85, 1
          %s825 = smul.addr %s824, 64
          %s826 = scalar_lea.vmem [#allocation2], %s825
          %s827 = smul.u32 8, %s49
          %s829 = ssub.s32 1024, 1024
          %830 = vsyncadd %s823, %s829
          %s831 = smul.addr %s827, 128
          %s832 = scalar_lea.hbm %s1, %s831
          %s833 = sshll.u32 %s826, 4
          %s834 = int_to_ptr.vmem [resolvable:$true] %s833
          %839 = dma.hbm_to_vmem [thread:$0]  %s832, 1024, %s834, %s823, 128, 128, 8
        $region100: #{tpu_custom_call.1} parent=91 // pred_fallthru
          _
        // Predicated region
        $region101: #{tpu_custom_call.1} parent=91 // pred_check
          %p840 = pneg %p121
        $region102: #{tpu_custom_call.1} parent=91 // pred_check_branch
          %842 = sbr.rel (%p840) target = $region104
        $region103: #{tpu_custom_call.1} parent=91 // pred_region
          %s843 = sand.u32 %s49, 1
          %s844 = scalar_lea.sflag [#allocation6], %s843
          %s845 = sand.u32 %s111, 1
          %s846 = smul.addr %s845, 64
          %s847 = scalar_lea.vmem [#allocation5], %s846
          %s848 = smul.u32 8, %s49
          %s850 = ssub.s32 1024, 1024
          %851 = vsyncadd %s844, %s850
          %s852 = smul.addr %s848, 128
          %s853 = scalar_lea.hbm %s2, %s852
          %s854 = sshll.u32 %s847, 4
          %s855 = int_to_ptr.vmem [resolvable:$true] %s854
          %860 = dma.hbm_to_vmem [thread:$0]  %s853, 1024, %s855, %s844, 128, 128, 8
        $region104: #{tpu_custom_call.1} parent=91 // pred_fallthru
          _
        // Predicated region
        $region105: #{tpu_custom_call.1} parent=91 // pred_check
          %p861 = pneg %p147
        $region106: #{tpu_custom_call.1} parent=91 // pred_check_branch
          %863 = sbr.rel (%p861) target = $region108
        $region107: #{tpu_custom_call.1} parent=91 // pred_region
          %p864 = scmp.lt.s32.totalorder %s49, 3
          %s865 = scalar_select %p864, %s49, 3
          %s866 = smul.addr %s865, 8
          %s867 = scalar_lea.vmem %s3, %s866
        $region108: #{tpu_custom_call.1} parent=91 // pred_fallthru
          _
        // Predicated region
        $region109: #{tpu_custom_call.1} parent=91 // pred_check
          %p868 = pneg %p173
        $region110: #{tpu_custom_call.1} parent=91 // pred_check_branch
          %870 = sbr.rel (%p868) target = $region112
        $region111: #{tpu_custom_call.1} parent=91 // pred_region
          %p871 = scmp.lt.s32.totalorder %s49, 3
          %s872 = scalar_select %p871, %s49, 3
          %s873 = smul.addr %s872, 8
          %s874 = scalar_lea.vmem %s4, %s873
        $region112: #{tpu_custom_call.1} parent=91 // pred_fallthru
          _
      $region92: #{tpu_custom_call.1} parent=5 // pred_fallthru
        _
      %p875 = scmp.le.s32.totalorder 1, %s49
      %p876 = scmp.lt.s32.totalorder %s49, 5
      %p877 = pnand %p875, %p876
      %p878 = pneg %p877
      // Predicated region
      $region113: #{tpu_custom_call.1} parent=5 // pred_check
        _
      $region114: #{tpu_custom_call.1} parent=5 // pred_check_branch
        %880 = sbr.rel (%p877) target = $region116
      $region115: #{tpu_custom_call.1} parent=5 // pred_region
        %s881 = ssub.s32 %s49, 1
        %s882 = sand.u32 %s88, 1
        %s883 = scalar_lea.sflag [#allocation3], %s882
        %s884 = sand.u32 %s88, 1
        %s885 = smul.addr %s884, 64
        %s886 = scalar_lea.vmem [#allocation2], %s885
        // Predicated region
        $region117: #{tpu_custom_call.1} parent=115 // pred_check
          %p887 = pneg %p101
        $region118: #{tpu_custom_call.1} parent=115 // pred_check_branch
          %889 = sbr.rel (%p887) target = $region120
        $region119: #{tpu_custom_call.1} parent=115 // pred_region
          %890 = dma.done %s883, 1024
        $region120: #{tpu_custom_call.1} parent=115 // pred_fallthru
          _
        %s891 = sand.u32 %s54, 1
        %s892 = scalar_lea.sflag [#allocation6], %s891
        %s893 = sand.u32 %s114, 1
        %s894 = smul.addr %s893, 64
        %s895 = scalar_lea.vmem [#allocation5], %s894
        // Predicated region
        $region121: #{tpu_custom_call.1} parent=115 // pred_check
          %p896 = pneg %p127
        $region122: #{tpu_custom_call.1} parent=115 // pred_check_branch
          %898 = sbr.rel (%p896) target = $region124
        $region123: #{tpu_custom_call.1} parent=115 // pred_region
          %899 = dma.done %s892, 1024
        $region124: #{tpu_custom_call.1} parent=115 // pred_fallthru
          _
        // Predicated region
        $region125: #{tpu_custom_call.1} parent=115 // pred_check
          %p900 = pneg %p200
        $region126: #{tpu_custom_call.1} parent=115 // pred_check_branch
          %902 = sbr.rel (%p900) target = $region128
        $region127: #{tpu_custom_call.1} parent=115 // pred_region
          %903 = dma.done [#allocation6], 2048
        $region128: #{tpu_custom_call.1} parent=115 // pred_fallthru
          _
        // Predicated region
        $region129: #{tpu_custom_call.1} parent=115 // pred_check
          %p904 = pneg %p221
        $region130: #{tpu_custom_call.1} parent=115 // pred_check_branch
          %906 = sbr.rel (%p904) target = $region132
        $region131: #{tpu_custom_call.1} parent=115 // pred_region
          %907 = dma.done [#allocation9], 4096
        $region132: #{tpu_custom_call.1} parent=115 // pred_fallthru
          _
        // Predicated region
        $region133: #{tpu_custom_call.1} parent=115 // pred_check
          %p908 = pneg %p263
        $region134: #{tpu_custom_call.1} parent=115 // pred_check_branch
          %910 = sbr.rel (%p908) target = $region136
        $region135: #{tpu_custom_call.1} parent=115 // pred_region
          %911 = dma.done [#allocation9], 2048
        $region136: #{tpu_custom_call.1} parent=115 // pred_fallthru
          _
        // Predicated region
        $region137: #{tpu_custom_call.1} parent=115 // pred_check
          %p912 = pneg %p305
        $region138: #{tpu_custom_call.1} parent=115 // pred_check_branch
          %914 = sbr.rel (%p912) target = $region140
        $region139: #{tpu_custom_call.1} parent=115 // pred_region
          %915 = dma.done [#allocation12], 2048
        $region140: #{tpu_custom_call.1} parent=115 // pred_fallthru
          _
        // Predicated region
        $region141: #{tpu_custom_call.1} parent=115 // pred_check
          %p916 = pneg %p347
        $region142: #{tpu_custom_call.1} parent=115 // pred_check_branch
          %918 = sbr.rel (%p916) target = $region144
        $region143: #{tpu_custom_call.1} parent=115 // pred_region
          %919 = dma.done [#allocation12], 8192
        $region144: #{tpu_custom_call.1} parent=115 // pred_fallthru
          _
        // Predicated region
        $region145: #{tpu_custom_call.1} parent=115 // pred_check
          %p920 = pneg %p389
        $region146: #{tpu_custom_call.1} parent=115 // pred_check_branch
          %922 = sbr.rel (%p920) target = $region148
        $region147: #{tpu_custom_call.1} parent=115 // pred_region
          %923 = dma.done [#allocation15], 8192
        $region148: #{tpu_custom_call.1} parent=115 // pred_fallthru
          _
        // Predicated region
        $region149: #{tpu_custom_call.1} parent=115 // pred_check
          %p924 = pneg %p515
        $region150: #{tpu_custom_call.1} parent=115 // pred_check_branch
          %926 = sbr.rel (%p924) target = $region152
        $region151: #{tpu_custom_call.1} parent=115 // pred_region
          %927 = dma.done [#allocation15], 16384
        $region152: #{tpu_custom_call.1} parent=115 // pred_fallthru
          _
        // Predicated region
        $region153: #{tpu_custom_call.1} parent=115 // pred_check
          %p928 = pneg %p557
        $region154: #{tpu_custom_call.1} parent=115 // pred_check_branch
          %930 = sbr.rel (%p928) target = $region156
        $region155: #{tpu_custom_call.1} parent=115 // pred_region
          %931 = dma.done [#allocation18], 16384
        $region156: #{tpu_custom_call.1} parent=115 // pred_fallthru
          _
        %p932 = scmp.lt.s32.totalorder %s54, 3
        %s933 = scalar_select %p932, %s54, 3
        %s934 = smul.addr %s933, 8
        %s935 = scalar_lea.vmem %s0, %s934
        %p936 = pneg %p75
        %p937 = pneg %p72
        %s938 = sand.u32 %s88, 1
        %s939 = scalar_lea.sflag [#allocation3], %s938
        %s940 = sand.u32 %s88, 1
        %s941 = smul.addr %s940, 64
        %s942 = scalar_lea.vmem [#allocation2], %s941
        %p943 = pneg %p101
        %p944 = pneg %p98
        %s945 = sand.u32 %s54, 1
        %s946 = scalar_lea.sflag [#allocation6], %s945
        %s947 = sand.u32 %s114, 1
        %s948 = smul.addr %s947, 64
        %s949 = scalar_lea.vmem [#allocation5], %s948
        %p950 = pneg %p127
        %p951 = pneg %p124
        %p952 = scmp.lt.s32.totalorder %s54, 3
        %s953 = scalar_select %p952, %s54, 3
        %s954 = smul.addr %s953, 8
        %s955 = scalar_lea.vmem %s3, %s954
        %p956 = pneg %p153
        %p957 = pneg %p150
        %p958 = scmp.lt.s32.totalorder %s54, 3
        %s959 = scalar_select %p958, %s54, 3
        %s960 = smul.addr %s959, 8
        %s961 = scalar_lea.vmem %s4, %s960
        %p962 = pneg %p179
        %p963 = pneg %p176
        %p964 = pneg %p200
        %p965 = pneg %p197
        %p966 = pneg %p221
        %p967 = pneg %p218
        %p968 = pneg %p242
        %p969 = pneg %p239
        %p970 = pneg %p263
        %p971 = pneg %p260
        %p972 = pneg %p284
        %p973 = pneg %p281
        %p974 = pneg %p305
        %p975 = pneg %p302
        %p976 = pneg %p326
        %p977 = pneg %p323
        %p978 = pneg %p347
        %p979 = pneg %p344
        %p980 = pneg %p368
        %p981 = pneg %p365
        %p982 = pneg %p389
        %p983 = pneg %p386
        %p984 = pneg %p410
        %p985 = pneg %p407
        %p986 = pneg %p431
        %p987 = pneg %p428
        %p988 = pneg %p452
        %p989 = pneg %p449
        %p990 = pneg %p473
        %p991 = pneg %p470
        %p992 = pneg %p494
        %p993 = pneg %p491
        %p994 = pneg %p515
        %p995 = pneg %p512
        %p996 = pneg %p536
        %p997 = pneg %p533
        %p998 = pneg %p557
        %p999 = pneg %p554
        %p1000 = pneg %p578
        %p1001 = pneg %p575
        %p1002 = pneg %p604
        %p1003 = pneg %p601
        %s1004 = sand.u32 %s591, 1
        %s1005 = scalar_lea.sflag [#allocation4], %s1004
        %s1006 = sand.u32 %s591, 1
        %s1007 = smul.addr %s1006, 8
        %s1008 = scalar_lea.vmem [#allocation19], %s1007
        %p1009 = pneg %p630
        %p1010 = pneg %p627
        %s1011 = sand.u32 %s54, 1
        %s1012 = scalar_lea.sflag [#allocation21], %s1011
        %s1013 = sand.u32 %s617, 1
        %s1014 = smul.addr %s1013, 8
        %s1015 = scalar_lea.vmem [#allocation20], %s1014
        %p1016 = pneg %p656
        %p1017 = pneg %p653
        %s1018 = sand.u32 %s54, 1
        %s1019 = scalar_lea.sflag [#allocation21], %s1018
        %s1020 = sand.u32 %s643, 1
        %s1021 = smul.addr %s1020, 64
        %s1022 = scalar_lea.vmem [#allocation22], %s1021
        %p1023 = scmp.lt.s32.totalorder %s54, 3
        %s1024 = scalar_select %p1023, %s54, 3
        %s1025 = smul.addr %s1024, 8
        %s1026 = scalar_lea.vmem %s0, %s1025
        %s1027 = smul.u32 8, %s54
        %s1028 = smul.u32 8, %s54
        %p1029 = scmp.lt.s32.totalorder %s54, 3
        %s1030 = scalar_select %p1029, %s54, 3
        %s1031 = smul.addr %s1030, 8
        %s1032 = scalar_lea.vmem %s3, %s1031
        %p1033 = scmp.lt.s32.totalorder %s54, 3
        %s1034 = scalar_select %p1033, %s54, 3
        %s1035 = smul.addr %s1034, 8
        %s1036 = scalar_lea.vmem %s4, %s1035
        %v1037 = vld [vmem:[%s895] sm:$0xff]
        %v1038 = vld [vmem:[%s895 + $0x8] sm:$0xff]
        %v1039 = vld [vmem:[%s895 + $0x10] sm:$0xff]
        %v1040 = vld [vmem:[%s895 + $0x18] sm:$0xff]
        %v1041 = vld [vmem:[%s895 + $0x20] sm:$0xff]
        %v1042 = vld [vmem:[%s895 + $0x28] sm:$0xff]
        %v1043 = vld [vmem:[%s895 + $0x30] sm:$0xff]
        %v1044 = vld [vmem:[%s895 + $0x38] sm:$0xff]
        %v1045 = vld [vmem:[%s1026] sm:$0xff]
        %v1046 = vld [vmem:[%s1032] sm:$0xff]
        %v1047 = vld [vmem:[#allocation7] sm:$0xff]
        %v1048 = vld [vmem:[#allocation7 + $0x8] sm:$0xff]
        %v1049 = vld [vmem:[#allocation7 + $0x10] sm:$0xff]
        %v1050 = vld [vmem:[#allocation7 + $0x18] sm:$0xff]
        %v1051 = vld [vmem:[#allocation7 + $0x20] sm:$0xff]
        %v1052 = vld [vmem:[#allocation7 + $0x28] sm:$0xff]
        %v1053 = vld [vmem:[#allocation7 + $0x30] sm:$0xff]
        %v1054 = vld [vmem:[#allocation7 + $0x38] sm:$0xff]
        %v1055 = vld [vmem:[#allocation7 + $0x40] sm:$0xff]
        %v1056 = vld [vmem:[#allocation7 + $0x48] sm:$0xff]
        %v1057 = vld [vmem:[#allocation7 + $0x50] sm:$0xff]
        %v1058 = vld [vmem:[#allocation7 + $0x58] sm:$0xff]
        %v1059 = vld [vmem:[#allocation7 + $0x60] sm:$0xff]
        %v1060 = vld [vmem:[#allocation7 + $0x68] sm:$0xff]
        %v1061 = vld [vmem:[#allocation7 + $0x70] sm:$0xff]
        %v1062 = vld [vmem:[#allocation7 + $0x78] sm:$0xff]
        %1063 = vmatprep.subr.mxu0 0.0
        %1064 = vmatpush1.msra.mxu0 %v1047
        %1065 = vmatprep.subr.mxu0 0.0
        %1066 = vmatpush1.msra.mxu0 %v1048
        %1067 = vmatprep.subr.mxu0 0.0
        %1068 = vmatpush1.msra.mxu0 %v1049
        %1069 = vmatprep.subr.mxu0 0.0
        %1070 = vmatpush1.msra.mxu0 %v1050
        %1071 = vmatprep.subr.mxu0 0.0
        %1072 = vmatpush1.msra.mxu0 %v1051
        %1073 = vmatprep.subr.mxu0 0.0
        %1074 = vmatpush1.msra.mxu0 %v1052
        %1075 = vmatprep.subr.mxu0 0.0
        %1076 = vmatpush1.msra.mxu0 %v1053
        %1077 = vmatprep.subr.mxu0 0.0
        %1078 = vmatpush1.msra.mxu0 %v1054
        %1079 = vmatprep.subr.mxu0 0.0
        %1080 = vmatpush1.msra.mxu0 %v1055
        %1081 = vmatprep.subr.mxu0 0.0
        %1082 = vmatpush1.msra.mxu0 %v1056
        %1083 = vmatprep.subr.mxu0 0.0
        %1084 = vmatpush1.msra.mxu0 %v1057
        %1085 = vmatprep.subr.mxu0 0.0
        %1086 = vmatpush1.msra.mxu0 %v1058
        %1087 = vmatprep.subr.mxu0 0.0
        %1088 = vmatpush1.msra.mxu0 %v1059
        %1089 = vmatprep.subr.mxu0 0.0
        %1090 = vmatpush1.msra.mxu0 %v1060
        %1091 = vmatprep.subr.mxu0 0.0
        %1092 = vmatpush1.msra.mxu0 %v1061
        %1093 = vmatprep.subr.mxu0 0.0
        %1094 = vmatpush1.msra.mxu0 %v1062
        %1095 = vmatprep.subr.mxu0 0.0
        %1096 = vmatpush1.msra.mxu0 0.0
        %1097 = vmatprep.subr.mxu0 0.0
        %1098 = vmatpush1.msra.mxu0 0.0
        %1099 = vmatprep.subr.mxu0 0.0
        %1100 = vmatpush1.msra.mxu0 0.0
        %1101 = vmatprep.subr.mxu0 0.0
        %1102 = vmatpush1.msra.mxu0 0.0
        %1103 = vmatprep.subr.mxu0 0.0
        %1104 = vmatpush1.msra.mxu0 0.0
        %1105 = vmatprep.subr.mxu0 0.0
        %1106 = vmatpush1.msra.mxu0 0.0
        %1107 = vmatprep.subr.mxu0 0.0
        %1108 = vmatpush1.msra.mxu0 0.0
        %1109 = vmatprep.subr.mxu0 0.0
        %1110 = vmatpush1.msra.mxu0 0.0
        %1111 = vmatprep.subr.mxu0 0.0
        %1112 = vmatpush1.msra.mxu0 0.0
        %1113 = vmatprep.subr.mxu0 0.0
        %1114 = vmatpush1.msra.mxu0 0.0
        %1115 = vmatprep.subr.mxu0 0.0
        %1116 = vmatpush1.msra.mxu0 0.0
        %1117 = vmatprep.subr.mxu0 0.0
        %1118 = vmatpush1.msra.mxu0 0.0
        %1119 = vmatprep.subr.mxu0 0.0
        %1120 = vmatpush1.msra.mxu0 0.0
        %1121 = vmatprep.subr.mxu0 0.0
        %1122 = vmatpush1.msra.mxu0 0.0
        %1123 = vmatprep.subr.mxu0 0.0
        %1124 = vmatpush1.msra.mxu0 0.0
        %1125 = vmatprep.subr.mxu0 0.0
        %1126 = vmatpush1.msra.mxu0 0.0
        %1127 = vmatprep.mubr.f32.mxu0 0.0
        %1128 = vmatmul.mubr.f32.gmra.mrb[0].mxu0 %v1045
        %v1129 = vpop.f32.mrb[0].mxu0
        %v1130 = vadd.f32 0.0, %v1129
        %v1131 = vpop.f32.mrb[0].mxu0
        %1132 = vdwg.mxu0
        %v1133 = vld [vmem:[%s886] sm:$0xff]
        %v1134 = vld [vmem:[%s886 + $0x8] sm:$0xff]
        %v1135 = vld [vmem:[%s886 + $0x10] sm:$0xff]
        %v1136 = vld [vmem:[%s886 + $0x18] sm:$0xff]
        %v1137 = vld [vmem:[%s886 + $0x20] sm:$0xff]
        %v1138 = vld [vmem:[%s886 + $0x28] sm:$0xff]
        %v1139 = vld [vmem:[%s886 + $0x30] sm:$0xff]
        %v1140 = vld [vmem:[%s886 + $0x38] sm:$0xff]
        %v1141 = vld [vmem:[#allocation8] sm:$0xff]
        %v1142 = vld [vmem:[#allocation8 + $0x8] sm:$0xff]
        %v1143 = vld [vmem:[#allocation8 + $0x10] sm:$0xff]
        %v1144 = vld [vmem:[#allocation8 + $0x18] sm:$0xff]
        %v1145 = vld [vmem:[#allocation8 + $0x20] sm:$0xff]
        %v1146 = vld [vmem:[#allocation8 + $0x28] sm:$0xff]
        %v1147 = vld [vmem:[#allocation8 + $0x30] sm:$0xff]
        %v1148 = vld [vmem:[#allocation8 + $0x38] sm:$0xff]
        %v1149 = vld [vmem:[#allocation8 + $0x40] sm:$0xff]
        %v1150 = vld [vmem:[#allocation8 + $0x48] sm:$0xff]
        %v1151 = vld [vmem:[#allocation8 + $0x50] sm:$0xff]
        %v1152 = vld [vmem:[#allocation8 + $0x58] sm:$0xff]
        %v1153 = vld [vmem:[#allocation8 + $0x60] sm:$0xff]
        %v1154 = vld [vmem:[#allocation8 + $0x68] sm:$0xff]
        %v1155 = vld [vmem:[#allocation8 + $0x70] sm:$0xff]
        %v1156 = vld [vmem:[#allocation8 + $0x78] sm:$0xff]
        %v1157 = vld [vmem:[#allocation8 + $0x80] sm:$0xff]
        %v1158 = vld [vmem:[#allocation8 + $0x88] sm:$0xff]
        %v1159 = vld [vmem:[#allocation8 + $0x90] sm:$0xff]
        %v1160 = vld [vmem:[#allocation8 + $0x98] sm:$0xff]
        %v1161 = vld [vmem:[#allocation8 + $0xa0] sm:$0xff]
        %v1162 = vld [vmem:[#allocation8 + $0xa8] sm:$0xff]
        %v1163 = vld [vmem:[#allocation8 + $0xb0] sm:$0xff]
        %v1164 = vld [vmem:[#allocation8 + $0xb8] sm:$0xff]
        %v1165 = vld [vmem:[#allocation8 + $0xc0] sm:$0xff]
        %v1166 = vld [vmem:[#allocation8 + $0xc8] sm:$0xff]
        %v1167 = vld [vmem:[#allocation8 + $0xd0] sm:$0xff]
        %v1168 = vld [vmem:[#allocation8 + $0xd8] sm:$0xff]
        %v1169 = vld [vmem:[#allocation8 + $0xe0] sm:$0xff]
        %v1170 = vld [vmem:[#allocation8 + $0xe8] sm:$0xff]
        %v1171 = vld [vmem:[#allocation8 + $0xf0] sm:$0xff]
        %v1172 = vld [vmem:[#allocation8 + $0xf8] sm:$0xff]
        %1173 = vmatprep.subr.mxu0 0.0
        %1174 = vmatpush1.msra.mxu0 %v1141
        %1175 = vmatprep.subr.mxu0 0.0
        %1176 = vmatpush1.msra.mxu0 %v1142
        %1177 = vmatprep.subr.mxu0 0.0
        %1178 = vmatpush1.msra.mxu0 %v1143
        %1179 = vmatprep.subr.mxu0 0.0
        %1180 = vmatpush1.msra.mxu0 %v1144
        %1181 = vmatprep.subr.mxu0 0.0
        %1182 = vmatpush1.msra.mxu0 %v1145
        %1183 = vmatprep.subr.mxu0 0.0
        %1184 = vmatpush1.msra.mxu0 %v1146
        %1185 = vmatprep.subr.mxu0 0.0
        %1186 = vmatpush1.msra.mxu0 %v1147
        %1187 = vmatprep.subr.mxu0 0.0
        %1188 = vmatpush1.msra.mxu0 %v1148
        %1189 = vmatprep.subr.mxu0 0.0
        %1190 = vmatpush1.msra.mxu0 %v1149
        %1191 = vmatprep.subr.mxu0 0.0
        %1192 = vmatpush1.msra.mxu0 %v1150
        %1193 = vmatprep.subr.mxu0 0.0
        %1194 = vmatpush1.msra.mxu0 %v1151
        %1195 = vmatprep.subr.mxu0 0.0
        %1196 = vmatpush1.msra.mxu0 %v1152
        %1197 = vmatprep.subr.mxu0 0.0
        %1198 = vmatpush1.msra.mxu0 %v1153
        %1199 = vmatprep.subr.mxu0 0.0
        %1200 = vmatpush1.msra.mxu0 %v1154
        %1201 = vmatprep.subr.mxu0 0.0
        %1202 = vmatpush1.msra.mxu0 %v1155
        %1203 = vmatprep.subr.mxu0 0.0
        %1204 = vmatpush1.msra.mxu0 %v1156
        %1205 = vmatprep.subr.mxu0 0.0
        %1206 = vmatpush1.msra.mxu0 %v1157
        %1207 = vmatprep.subr.mxu0 0.0
        %1208 = vmatpush1.msra.mxu0 %v1158
        %1209 = vmatprep.subr.mxu0 0.0
        %1210 = vmatpush1.msra.mxu0 %v1159
        %1211 = vmatprep.subr.mxu0 0.0
        %1212 = vmatpush1.msra.mxu0 %v1160
        %1213 = vmatprep.subr.mxu0 0.0
        %1214 = vmatpush1.msra.mxu0 %v1161
        %1215 = vmatprep.subr.mxu0 0.0
        %1216 = vmatpush1.msra.mxu0 %v1162
        %1217 = vmatprep.subr.mxu0 0.0
        %1218 = vmatpush1.msra.mxu0 %v1163
        %1219 = vmatprep.subr.mxu0 0.0
        %1220 = vmatpush1.msra.mxu0 %v1164
        %1221 = vmatprep.subr.mxu0 0.0
        %1222 = vmatpush1.msra.mxu0 %v1165
        %1223 = vmatprep.subr.mxu0 0.0
        %1224 = vmatpush1.msra.mxu0 %v1166
        %1225 = vmatprep.subr.mxu0 0.0
        %1226 = vmatpush1.msra.mxu0 %v1167
        %1227 = vmatprep.subr.mxu0 0.0
        %1228 = vmatpush1.msra.mxu0 %v1168
        %1229 = vmatprep.subr.mxu0 0.0
        %1230 = vmatpush1.msra.mxu0 %v1169
        %1231 = vmatprep.subr.mxu0 0.0
        %1232 = vmatpush1.msra.mxu0 %v1170
        %1233 = vmatprep.subr.mxu0 0.0
        %1234 = vmatpush1.msra.mxu0 %v1171
        %1235 = vmatprep.subr.mxu0 0.0
        %1236 = vmatpush1.msra.mxu0 %v1172
        %1237 = vmatprep.mubr.f32.mxu0 %v1037
        %1238 = vmatmul.mubr.f32.gmra.mrb[0].mxu0 %v1133
        %v1239 = vpop.f32.mrb[0].mxu0
        %v1240 = vadd.f32 0.0, %v1239
        %v1241 = vpop.f32.mrb[0].mxu0
        %1242 = vmatprep.mubr.f32.mxu0 %v1038
        %1243 = vmatmul.mubr.f32.gmra.mrb[0].mxu0 %v1134
        %v1244 = vpop.f32.mrb[0].mxu0
        %v1245 = vadd.f32 0.0, %v1244
        %v1246 = vpop.f32.mrb[0].mxu0
        %1247 = vmatprep.mubr.f32.mxu0 %v1039
        %1248 = vmatmul.mubr.f32.gmra.mrb[0].mxu0 %v1135
        %v1249 = vpop.f32.mrb[0].mxu0
        %v1250 = vadd.f32 0.0, %v1249
        %v1251 = vpop.f32.mrb[0].mxu0
        %1252 = vmatprep.mubr.f32.mxu0 %v1040
        %1253 = vmatmul.mubr.f32.gmra.mrb[0].mxu0 %v1136
        %v1254 = vpop.f32.mrb[0].mxu0
        %v1255 = vadd.f32 0.0, %v1254
        %v1256 = vpop.f32.mrb[0].mxu0
        %1257 = vmatprep.mubr.f32.mxu0 %v1041
        %1258 = vmatmul.mubr.f32.gmra.mrb[0].mxu0 %v1137
        %v1259 = vpop.f32.mrb[0].mxu0
        %v1260 = vadd.f32 0.0, %v1259
        %v1261 = vpop.f32.mrb[0].mxu0
        %1262 = vmatprep.mubr.f32.mxu0 %v1042
        %1263 = vmatmul.mubr.f32.gmra.mrb[0].mxu0 %v1138
        %v1264 = vpop.f32.mrb[0].mxu0
        %v1265 = vadd.f32 0.0, %v1264
        %v1266 = vpop.f32.mrb[0].mxu0
        %1267 = vmatprep.mubr.f32.mxu0 %v1043
        %1268 = vmatmul.mubr.f32.gmra.mrb[0].mxu0 %v1139
        %v1269 = vpop.f32.mrb[0].mxu0
        %v1270 = vadd.f32 0.0, %v1269
        %v1271 = vpop.f32.mrb[0].mxu0
        %1272 = vmatprep.mubr.f32.mxu0 %v1044
        %1273 = vmatmul.mubr.f32.gmra.mrb[0].mxu0 %v1140
        %v1274 = vpop.f32.mrb[0].mxu0
        %v1275 = vadd.f32 0.0, %v1274
        %v1276 = vpop.f32.mrb[0].mxu0
        %1277 = vdwg.mxu0
        %v1279 = vcombine.high %v1130, %v1130
        %v1281 = vunpack.c.l.s4 1966171168
        %v1282 = vunpack.c.0.s8 %v1281
        %v1283 = vlaneseq
        %v1284 = vshrl.u32 %v1283, 7
        %v1285 = vsub.s32 %v1282, %v1284
        %v1286 = vrot.slane %v1130, %v1285
        %v1288 = vunpack.c.l.s4 1966171168
        %v1289 = vunpack.c.0.s8 %v1288
        %v1290 = vlaneseq
        %v1291 = vshrl.u32 %v1290, 7
        %v1292 = vsub.s32 %v1289, %v1291
        %v1293 = vrot.slane %v1279, %v1292
        %v1294 = vcombine.high %v1286, %v1286
        %v1295 = vcombine.high %v1293, %v1293
        %v1297 = vunpack.c.l.s4 1966171168
        %v1298 = vunpack.c.0.s8 %v1297
        %v1299 = vlaneseq
        %v1300 = vshrl.u32 %v1299, 7
        %v1301 = vsub.s32 %v1298, %v1300
        %v1302 = vrot.slane %v1286, %v1301
        %v1304 = vunpack.c.l.s4 1966171168
        %v1305 = vunpack.c.0.s8 %v1304
        %v1306 = vlaneseq
        %v1307 = vshrl.u32 %v1306, 7
        %v1308 = vsub.s32 %v1305, %v1307
        %v1309 = vrot.slane %v1293, %v1308
        %v1311 = vunpack.c.l.s4 1966171168
        %v1312 = vunpack.c.0.s8 %v1311
        %v1313 = vlaneseq
        %v1314 = vshrl.u32 %v1313, 7
        %v1315 = vsub.s32 %v1312, %v1314
        %v1316 = vrot.slane %v1294, %v1315
        %v1318 = vunpack.c.l.s4 1966171168
        %v1319 = vunpack.c.0.s8 %v1318
        %v1320 = vlaneseq
        %v1321 = vshrl.u32 %v1320, 7
        %v1322 = vsub.s32 %v1319, %v1321
        %v1323 = vrot.slane %v1295, %v1322
        %v1324 = vcombine.high %v1302, %v1302
        %v1325 = vcombine.high %v1309, %v1309
        %v1326 = vcombine.high %v1316, %v1316
        %v1327 = vcombine.high %v1323, %v1323
        %v1328 = vlaneseq
        %v1329 = vshrl.u32 %v1328, 7
        %v1330 = vsub.s32 0, %v1329
        %v1331 = vrot.slane %v1302, %v1330
        %v1332 = vlaneseq
        %v1333 = vshrl.u32 %v1332, 7
        %v1334 = vsub.s32 0, %v1333
        %v1335 = vrot.slane %v1316, %v1334
        %v1336 = vlaneseq
        %v1337 = vshrl.u32 %v1336, 7
        %v1338 = vsub.s32 0, %v1337
        %v1339 = vrot.slane %v1324, %v1338
        %v1340 = vlaneseq
        %v1341 = vshrl.u32 %v1340, 7
        %v1342 = vsub.s32 0, %v1341
        %v1343 = vrot.slane %v1326, %v1342
        %v1344 = vlaneseq
        %v1345 = vshrl.u32 %v1344, 7
        %v1346 = vsub.s32 0, %v1345
        %v1347 = vrot.slane %v1309, %v1346
        %v1348 = vlaneseq
        %v1349 = vshrl.u32 %v1348, 7
        %v1350 = vsub.s32 0, %v1349
        %v1351 = vrot.slane %v1323, %v1350
        %v1352 = vlaneseq
        %v1353 = vshrl.u32 %v1352, 7
        %v1354 = vsub.s32 0, %v1353
        %v1355 = vrot.slane %v1325, %v1354
        %v1356 = vlaneseq
        %v1357 = vshrl.u32 %v1356, 7
        %v1358 = vsub.s32 0, %v1357
        %v1359 = vrot.slane %v1327, %v1358
        %v1368 = vadd.f32 %v1240, %v1331
        %v1369 = vadd.f32 %v1245, %v1335
        %v1370 = vadd.f32 %v1250, %v1339
        %v1371 = vadd.f32 %v1255, %v1343
        %v1372 = vadd.f32 %v1260, %v1347
        %v1373 = vadd.f32 %v1265, %v1351
        %v1374 = vadd.f32 %v1270, %v1355
        %v1375 = vadd.f32 %v1275, %v1359
        %v1376 = vld [vmem:[%s7] sm:$0x1]
        %v1378 = vlaneseq
        %v1379 = vshrl.u32 %v1378, 7
        %v1380 = vsub.s32 0, %v1379
        %v1381 = vrot.slane %v1376, %v1380
        %v1383 = vadd.f32 %v1368, %v1381
        %v1384 = vadd.f32 %v1369, %v1381
        %v1385 = vadd.f32 %v1370, %v1381
        %v1386 = vadd.f32 %v1371, %v1381
        %v1387 = vadd.f32 %v1372, %v1381
        %v1388 = vadd.f32 %v1373, %v1381
        %v1389 = vadd.f32 %v1374, %v1381
        %v1390 = vadd.f32 %v1375, %v1381
        %v1391 = vmul.f32 %v1383, 0.5
        %v1392 = vmul.f32 %v1384, 0.5
        %v1393 = vmul.f32 %v1385, 0.5
        %v1394 = vmul.f32 %v1386, 0.5
        %v1395 = vmul.f32 %v1387, 0.5
        %v1396 = vmul.f32 %v1388, 0.5
        %v1397 = vmul.f32 %v1389, 0.5
        %v1398 = vmul.f32 %v1390, 0.5
        %v1399 = vmul.f32 %v1383, 0.70710677
        %v1400 = vmul.f32 %v1384, 0.70710677
        %v1401 = vmul.f32 %v1385, 0.70710677
        %v1402 = vmul.f32 %v1386, 0.70710677
        %v1403 = vmul.f32 %v1387, 0.70710677
        %v1404 = vmul.f32 %v1388, 0.70710677
        %v1405 = vmul.f32 %v1389, 0.70710677
        %v1406 = vmul.f32 %v1390, 0.70710677
        %v1407 = verf.f32.pop %v1399
        %v1408 = verf.f32.pop %v1400
        %v1409 = verf.f32.pop %v1401
        %v1410 = verf.f32.pop %v1402
        %v1411 = verf.f32.pop %v1403
        %v1412 = verf.f32.pop %v1404
        %v1413 = verf.f32.pop %v1405
        %v1414 = verf.f32.pop %v1406
        %v1415 = vadd.f32 %v1407, 1.0
        %v1416 = vadd.f32 %v1408, 1.0
        %v1417 = vadd.f32 %v1409, 1.0
        %v1418 = vadd.f32 %v1410, 1.0
        %v1419 = vadd.f32 %v1411, 1.0
        %v1420 = vadd.f32 %v1412, 1.0
        %v1421 = vadd.f32 %v1413, 1.0
        %v1422 = vadd.f32 %v1414, 1.0
        %v1423 = vmul.f32 %v1391, %v1415
        %v1424 = vmul.f32 %v1392, %v1416
        %v1425 = vmul.f32 %v1393, %v1417
        %v1426 = vmul.f32 %v1394, %v1418
        %v1427 = vmul.f32 %v1395, %v1419
        %v1428 = vmul.f32 %v1396, %v1420
        %v1429 = vmul.f32 %v1397, %v1421
        %v1430 = vmul.f32 %v1398, %v1422
        %v1431 = vld [vmem:[#allocation10] sm:$0xff]
        %v1432 = vld [vmem:[#allocation10 + $0x8] sm:$0xff]
        %v1433 = vld [vmem:[#allocation10 + $0x10] sm:$0xff]
        %v1434 = vld [vmem:[#allocation10 + $0x18] sm:$0xff]
        %v1435 = vld [vmem:[#allocation10 + $0x20] sm:$0xff]
        %v1436 = vld [vmem:[#allocation10 + $0x28] sm:$0xff]
        %v1437 = vld [vmem:[#allocation10 + $0x30] sm:$0xff]
        %v1438 = vld [vmem:[#allocation10 + $0x38] sm:$0xff]
        %v1439 = vld [vmem:[#allocation10 + $0x40] sm:$0xff]
        %v1440 = vld [vmem:[#allocation10 + $0x48] sm:$0xff]
        %v1441 = vld [vmem:[#allocation10 + $0x50] sm:$0xff]
        %v1442 = vld [vmem:[#allocation10 + $0x58] sm:$0xff]
        %v1443 = vld [vmem:[#allocation10 + $0x60] sm:$0xff]
        %v1444 = vld [vmem:[#allocation10 + $0x68] sm:$0xff]
        %v1445 = vld [vmem:[#allocation10 + $0x70] sm:$0xff]
        %v1446 = vld [vmem:[#allocation10 + $0x78] sm:$0xff]
        %v1447 = vld [vmem:[%s9] sm:$0x1]
        %v1449 = vlaneseq
        %v1450 = vshrl.u32 %v1449, 7
        %v1451 = vsub.s32 0, %v1450
        %v1452 = vrot.slane %v1447, %v1451
        %1454 = vmatprep.subr.mxu0 0.0
        %1455 = vmatpush1.msra.mxu0 %v1431
        %1456 = vmatprep.subr.mxu0 0.0
        %1457 = vmatpush1.msra.mxu0 %v1432
        %1458 = vmatprep.subr.mxu0 0.0
        %1459 = vmatpush1.msra.mxu0 %v1433
        %1460 = vmatprep.subr.mxu0 0.0
        %1461 = vmatpush1.msra.mxu0 %v1434
        %1462 = vmatprep.subr.mxu0 0.0
        %1463 = vmatpush1.msra.mxu0 %v1435
        %1464 = vmatprep.subr.mxu0 0.0
        %1465 = vmatpush1.msra.mxu0 %v1436
        %1466 = vmatprep.subr.mxu0 0.0
        %1467 = vmatpush1.msra.mxu0 %v1437
        %1468 = vmatprep.subr.mxu0 0.0
        %1469 = vmatpush1.msra.mxu0 %v1438
        %1470 = vmatprep.subr.mxu0 0.0
        %1471 = vmatpush1.msra.mxu0 %v1439
        %1472 = vmatprep.subr.mxu0 0.0
        %1473 = vmatpush1.msra.mxu0 %v1440
        %1474 = vmatprep.subr.mxu0 0.0
        %1475 = vmatpush1.msra.mxu0 %v1441
        %1476 = vmatprep.subr.mxu0 0.0
        %1477 = vmatpush1.msra.mxu0 %v1442
        %1478 = vmatprep.subr.mxu0 0.0
        %1479 = vmatpush1.msra.mxu0 %v1443
        %1480 = vmatprep.subr.mxu0 0.0
        %1481 = vmatpush1.msra.mxu0 %v1444
        %1482 = vmatprep.subr.mxu0 0.0
        %1483 = vmatpush1.msra.mxu0 %v1445
        %1484 = vmatprep.subr.mxu0 0.0
        %1485 = vmatpush1.msra.mxu0 %v1446
        %1486 = vmatprep.subr.mxu0 0.0
        %1487 = vmatpush1.msra.mxu0 0.0
        %1488 = vmatprep.subr.mxu0 0.0
        %1489 = vmatpush1.msra.mxu0 0.0
        %1490 = vmatprep.subr.mxu0 0.0
        %1491 = vmatpush1.msra.mxu0 0.0
        %1492 = vmatprep.subr.mxu0 0.0
        %1493 = vmatpush1.msra.mxu0 0.0
        %1494 = vmatprep.subr.mxu0 0.0
        %1495 = vmatpush1.msra.mxu0 0.0
        %1496 = vmatprep.subr.mxu0 0.0
        %1497 = vmatpush1.msra.mxu0 0.0
        %1498 = vmatprep.subr.mxu0 0.0
        %1499 = vmatpush1.msra.mxu0 0.0
        %1500 = vmatprep.subr.mxu0 0.0
        %1501 = vmatpush1.msra.mxu0 0.0
        %1502 = vmatprep.subr.mxu0 0.0
        %1503 = vmatpush1.msra.mxu0 0.0
        %1504 = vmatprep.subr.mxu0 0.0
        %1505 = vmatpush1.msra.mxu0 0.0
        %1506 = vmatprep.subr.mxu0 0.0
        %1507 = vmatpush1.msra.mxu0 0.0
        %1508 = vmatprep.subr.mxu0 0.0
        %1509 = vmatpush1.msra.mxu0 0.0
        %1510 = vmatprep.subr.mxu0 0.0
        %1511 = vmatpush1.msra.mxu0 0.0
        %1512 = vmatprep.subr.mxu0 0.0
        %1513 = vmatpush1.msra.mxu0 0.0
        %1514 = vmatprep.subr.mxu0 0.0
        %1515 = vmatpush1.msra.mxu0 0.0
        %1516 = vmatprep.subr.mxu0 0.0
        %1517 = vmatpush1.msra.mxu0 0.0
        %1518 = vmatprep.mubr.f32.mxu0 0.0
        %1519 = vmatmul.mubr.f32.gmra.mrb[0].mxu0 %v1423
        %v1520 = vpop.f32.mrb[0].mxu0
        %v1521 = vadd.f32 %v1452, %v1520
        %v1522 = vpop.f32.mrb[0].mxu0
        %1523 = vmatprep.mubr.f32.mxu0 0.0
        %1524 = vmatmul.mubr.f32.gmra.mrb[0].mxu0 %v1424
        %v1525 = vpop.f32.mrb[0].mxu0
        %v1526 = vadd.f32 %v1452, %v1525
        %v1527 = vpop.f32.mrb[0].mxu0
        %1528 = vmatprep.mubr.f32.mxu0 0.0
        %1529 = vmatmul.mubr.f32.gmra.mrb[0].mxu0 %v1425
        %v1530 = vpop.f32.mrb[0].mxu0
        %v1531 = vadd.f32 %v1452, %v1530
        %v1532 = vpop.f32.mrb[0].mxu0
        %1533 = vmatprep.mubr.f32.mxu0 0.0
        %1534 = vmatmul.mubr.f32.gmra.mrb[0].mxu0 %v1426
        %v1535 = vpop.f32.mrb[0].mxu0
        %v1536 = vadd.f32 %v1452, %v1535
        %v1537 = vpop.f32.mrb[0].mxu0
        %1538 = vmatprep.mubr.f32.mxu0 0.0
        %1539 = vmatmul.mubr.f32.gmra.mrb[0].mxu0 %v1427
        %v1540 = vpop.f32.mrb[0].mxu0
        %v1541 = vadd.f32 %v1452, %v1540
        %v1542 = vpop.f32.mrb[0].mxu0
        %1543 = vmatprep.mubr.f32.mxu0 0.0
        %1544 = vmatmul.mubr.f32.gmra.mrb[0].mxu0 %v1428
        %v1545 = vpop.f32.mrb[0].mxu0
        %v1546 = vadd.f32 %v1452, %v1545
        %v1547 = vpop.f32.mrb[0].mxu0
        %1548 = vmatprep.mubr.f32.mxu0 0.0
        %1549 = vmatmul.mubr.f32.gmra.mrb[0].mxu0 %v1429
        %v1550 = vpop.f32.mrb[0].mxu0
        %v1551 = vadd.f32 %v1452, %v1550
        %v1552 = vpop.f32.mrb[0].mxu0
        %1553 = vmatprep.mubr.f32.mxu0 0.0
        %1554 = vmatmul.mubr.f32.gmra.mrb[0].mxu0 %v1430
        %v1555 = vpop.f32.mrb[0].mxu0
        %v1556 = vadd.f32 %v1452, %v1555
        %v1557 = vpop.f32.mrb[0].mxu0
        %1558 = vdwg.mxu0
        %v1559 = vmul.f32 %v1521, 0.5
        %v1560 = vmul.f32 %v1526, 0.5
        %v1561 = vmul.f32 %v1531, 0.5
        %v1562 = vmul.f32 %v1536, 0.5
        %v1563 = vmul.f32 %v1541, 0.5
        %v1564 = vmul.f32 %v1546, 0.5
        %v1565 = vmul.f32 %v1551, 0.5
        %v1566 = vmul.f32 %v1556, 0.5
        %v1567 = vmul.f32 %v1521, 0.70710677
        %v1568 = vmul.f32 %v1526, 0.70710677
        %v1569 = vmul.f32 %v1531, 0.70710677
        %v1570 = vmul.f32 %v1536, 0.70710677
        %v1571 = vmul.f32 %v1541, 0.70710677
        %v1572 = vmul.f32 %v1546, 0.70710677
        %v1573 = vmul.f32 %v1551, 0.70710677
        %v1574 = vmul.f32 %v1556, 0.70710677
        %v1575 = verf.f32.pop %v1567
        %v1576 = verf.f32.pop %v1568
        %v1577 = verf.f32.pop %v1569
        %v1578 = verf.f32.pop %v1570
        %v1579 = verf.f32.pop %v1571
        %v1580 = verf.f32.pop %v1572
        %v1581 = verf.f32.pop %v1573
        %v1582 = verf.f32.pop %v1574
        %v1583 = vadd.f32 %v1575, 1.0
        %v1584 = vadd.f32 %v1576, 1.0
        %v1585 = vadd.f32 %v1577, 1.0
        %v1586 = vadd.f32 %v1578, 1.0
        %v1587 = vadd.f32 %v1579, 1.0
        %v1588 = vadd.f32 %v1580, 1.0
        %v1589 = vadd.f32 %v1581, 1.0
        %v1590 = vadd.f32 %v1582, 1.0
        %v1591 = vmul.f32 %v1559, %v1583
        %v1592 = vmul.f32 %v1560, %v1584
        %v1593 = vmul.f32 %v1561, %v1585
        %v1594 = vmul.f32 %v1562, %v1586
        %v1595 = vmul.f32 %v1563, %v1587
        %v1596 = vmul.f32 %v1564, %v1588
        %v1597 = vmul.f32 %v1565, %v1589
        %v1598 = vmul.f32 %v1566, %v1590
        %v1599 = vlaneseq
        %v1600 = vshrl.u32 %v1599, 7
        %v1601 = vsub.s32 0, %v1600
        %v1602 = vrot.slane %v1046, %v1601
        %1604 = vbcast.lane.b32.xlu0 %v1602, 256
        %v1605 = vpop.permute.xlu0 %1604
        %v1606 = vlaneseq
        %v1607 = vshrl.u32 %v1606, 7
        %v1608 = vsub.s32 1, %v1607
        %v1609 = vrot.slane %v1046, %v1608
        %1611 = vbcast.lane.b32.xlu0 %v1609, 256
        %v1612 = vpop.permute.xlu0 %1611
        %v1613 = vlaneseq
        %v1614 = vshrl.u32 %v1613, 7
        %v1615 = vsub.s32 2, %v1614
        %v1616 = vrot.slane %v1046, %v1615
        %1618 = vbcast.lane.b32.xlu0 %v1616, 256
        %v1619 = vpop.permute.xlu0 %1618
        %v1620 = vlaneseq
        %v1621 = vshrl.u32 %v1620, 7
        %v1622 = vsub.s32 3, %v1621
        %v1623 = vrot.slane %v1046, %v1622
        %1625 = vbcast.lane.b32.xlu0 %v1623, 256
        %v1626 = vpop.permute.xlu0 %1625
        %v1627 = vlaneseq
        %v1628 = vshrl.u32 %v1627, 7
        %v1629 = vsub.s32 4, %v1628
        %v1630 = vrot.slane %v1046, %v1629
        %1632 = vbcast.lane.b32.xlu0 %v1630, 256
        %v1633 = vpop.permute.xlu0 %1632
        %v1634 = vlaneseq
        %v1635 = vshrl.u32 %v1634, 7
        %v1636 = vsub.s32 5, %v1635
        %v1637 = vrot.slane %v1046, %v1636
        %1639 = vbcast.lane.b32.xlu0 %v1637, 256
        %v1640 = vpop.permute.xlu0 %1639
        %v1641 = vlaneseq
        %v1642 = vshrl.u32 %v1641, 7
        %v1643 = vsub.s32 6, %v1642
        %v1644 = vrot.slane %v1046, %v1643
        %1646 = vbcast.lane.b32.xlu0 %v1644, 256
        %v1647 = vpop.permute.xlu0 %1646
        %v1648 = vlaneseq
        %v1649 = vshrl.u32 %v1648, 7
        %v1650 = vsub.s32 7, %v1649
        %v1651 = vrot.slane %v1046, %v1650
        %1653 = vbcast.lane.b32.xlu0 %v1651, 256
        %v1654 = vpop.permute.xlu0 %1653
        %v1655 = vmul.f32 %v1591, %v1605
        %v1656 = vmul.f32 %v1592, %v1612
        %v1657 = vmul.f32 %v1593, %v1619
        %v1658 = vmul.f32 %v1594, %v1626
        %v1659 = vmul.f32 %v1595, %v1633
        %v1660 = vmul.f32 %v1596, %v1640
        %v1661 = vmul.f32 %v1597, %v1647
        %v1662 = vmul.f32 %v1598, %v1654
        %v1663 = vrot.slane %v1655, 4
        %v1664 = vadd.f32 %v1655, %v1663
        %v1665 = vrot.slane %v1664, 2
        %v1666 = vadd.f32 %v1664, %v1665
        %v1667 = vrot.slane %v1666, 1
        %v1668 = vadd.f32 %v1666, %v1667
        %v1669 = vrot.slane %v1656, 4
        %v1670 = vadd.f32 %v1656, %v1669
        %v1671 = vrot.slane %v1670, 2
        %v1672 = vadd.f32 %v1670, %v1671
        %v1673 = vrot.slane %v1672, 1
        %v1674 = vadd.f32 %v1672, %v1673
        %v1675 = vrot.slane %v1657, 4
        %v1676 = vadd.f32 %v1657, %v1675
        %v1677 = vrot.slane %v1676, 2
        %v1678 = vadd.f32 %v1676, %v1677
        %v1679 = vrot.slane %v1678, 1
        %v1680 = vadd.f32 %v1678, %v1679
        %v1681 = vrot.slane %v1658, 4
        %v1682 = vadd.f32 %v1658, %v1681
        %v1683 = vrot.slane %v1682, 2
        %v1684 = vadd.f32 %v1682, %v1683
        %v1685 = vrot.slane %v1684, 1
        %v1686 = vadd.f32 %v1684, %v1685
        %v1687 = vrot.slane %v1659, 4
        %v1688 = vadd.f32 %v1659, %v1687
        %v1689 = vrot.slane %v1688, 2
        %v1690 = vadd.f32 %v1688, %v1689
        %v1691 = vrot.slane %v1690, 1
        %v1692 = vadd.f32 %v1690, %v1691
        %v1693 = vrot.slane %v1660, 4
        %v1694 = vadd.f32 %v1660, %v1693
        %v1695 = vrot.slane %v1694, 2
        %v1696 = vadd.f32 %v1694, %v1695
        %v1697 = vrot.slane %v1696, 1
        %v1698 = vadd.f32 %v1696, %v1697
        %v1699 = vrot.slane %v1661, 4
        %v1700 = vadd.f32 %v1661, %v1699
        %v1701 = vrot.slane %v1700, 2
        %v1702 = vadd.f32 %v1700, %v1701
        %v1703 = vrot.slane %v1702, 1
        %v1704 = vadd.f32 %v1702, %v1703
        %v1705 = vrot.slane %v1662, 4
        %v1706 = vadd.f32 %v1662, %v1705
        %v1707 = vrot.slane %v1706, 2
        %v1708 = vadd.f32 %v1706, %v1707
        %v1709 = vrot.slane %v1708, 1
        %v1710 = vadd.f32 %v1708, %v1709
        %vm1711 = vcmask 64512
        %v1712 = vsel %vm1711, %v1046, 0.0
        %1713 = vadd.xlane.f32.xlu0 %v1712
        %v1714 = vpop.xlane.xlu0 %1713
        %v1715 = vld [vmem:[#allocation11] sm:$0xff]
        %v1716 = vld [vmem:[#allocation11 + $0x8] sm:$0xff]
        %v1717 = vld [vmem:[#allocation11 + $0x10] sm:$0xff]
        %v1718 = vld [vmem:[#allocation11 + $0x18] sm:$0xff]
        %v1719 = vld [vmem:[#allocation11 + $0x20] sm:$0xff]
        %v1720 = vld [vmem:[#allocation11 + $0x28] sm:$0xff]
        %v1721 = vld [vmem:[#allocation11 + $0x30] sm:$0xff]
        %v1722 = vld [vmem:[#allocation11 + $0x38] sm:$0xff]
        %v1723 = vld [vmem:[#allocation11 + $0x40] sm:$0xff]
        %v1724 = vld [vmem:[#allocation11 + $0x48] sm:$0xff]
        %v1725 = vld [vmem:[#allocation11 + $0x50] sm:$0xff]
        %v1726 = vld [vmem:[#allocation11 + $0x58] sm:$0xff]
        %v1727 = vld [vmem:[#allocation11 + $0x60] sm:$0xff]
        %v1728 = vld [vmem:[#allocation11 + $0x68] sm:$0xff]
        %v1729 = vld [vmem:[#allocation11 + $0x70] sm:$0xff]
        %v1730 = vld [vmem:[#allocation11 + $0x78] sm:$0xff]
        %v1731 = vld [vmem:[%s11] sm:$0x1]
        %v1733 = vlaneseq
        %v1734 = vshrl.u32 %v1733, 7
        %v1735 = vsub.s32 0, %v1734
        %v1736 = vrot.slane %v1731, %v1735
        %v1738 = vmul.f32 %v1714, %v1736
        %vm1747 = vcmask 1041409
        %v1748 = vsel %vm1747, %v1674, %v1668
        %vm1749 = vcmask 1042434
        %v1750 = vsel %vm1749, %v1680, %v1748
        %vm1751 = vcmask 1043459
        %v1752 = vsel %vm1751, %v1686, %v1750
        %vm1753 = vcmask 1044484
        %v1754 = vsel %vm1753, %v1692, %v1752
        %vm1755 = vcmask 1045509
        %v1756 = vsel %vm1755, %v1698, %v1754
        %vm1757 = vcmask 1046534
        %v1758 = vsel %vm1757, %v1704, %v1756
        %vm1759 = vcmask 1047559
        %v1760 = vsel %vm1759, %v1710, %v1758
        %1762 = vmatprep.subr.mxu0 0.0
        %1763 = vmatpush1.msra.mxu0 %v1715
        %1764 = vmatprep.subr.mxu0 0.0
        %1765 = vmatpush1.msra.mxu0 %v1716
        %1766 = vmatprep.subr.mxu0 0.0
        %1767 = vmatpush1.msra.mxu0 %v1717
        %1768 = vmatprep.subr.mxu0 0.0
        %1769 = vmatpush1.msra.mxu0 %v1718
        %1770 = vmatprep.subr.mxu0 0.0
        %1771 = vmatpush1.msra.mxu0 %v1719
        %1772 = vmatprep.subr.mxu0 0.0
        %1773 = vmatpush1.msra.mxu0 %v1720
        %1774 = vmatprep.subr.mxu0 0.0
        %1775 = vmatpush1.msra.mxu0 %v1721
        %1776 = vmatprep.subr.mxu0 0.0
        %1777 = vmatpush1.msra.mxu0 %v1722
        %1778 = vmatprep.subr.mxu0 0.0
        %1779 = vmatpush1.msra.mxu0 %v1723
        %1780 = vmatprep.subr.mxu0 0.0
        %1781 = vmatpush1.msra.mxu0 %v1724
        %1782 = vmatprep.subr.mxu0 0.0
        %1783 = vmatpush1.msra.mxu0 %v1725
        %1784 = vmatprep.subr.mxu0 0.0
        %1785 = vmatpush1.msra.mxu0 %v1726
        %1786 = vmatprep.subr.mxu0 0.0
        %1787 = vmatpush1.msra.mxu0 %v1727
        %1788 = vmatprep.subr.mxu0 0.0
        %1789 = vmatpush1.msra.mxu0 %v1728
        %1790 = vmatprep.subr.mxu0 0.0
        %1791 = vmatpush1.msra.mxu0 %v1729
        %1792 = vmatprep.subr.mxu0 0.0
        %1793 = vmatpush1.msra.mxu0 %v1730
        %1794 = vmatprep.subr.mxu0 0.0
        %1795 = vmatpush1.msra.mxu0 0.0
        %1796 = vmatprep.subr.mxu0 0.0
        %1797 = vmatpush1.msra.mxu0 0.0
        %1798 = vmatprep.subr.mxu0 0.0
        %1799 = vmatpush1.msra.mxu0 0.0
        %1800 = vmatprep.subr.mxu0 0.0
        %1801 = vmatpush1.msra.mxu0 0.0
        %1802 = vmatprep.subr.mxu0 0.0
        %1803 = vmatpush1.msra.mxu0 0.0
        %1804 = vmatprep.subr.mxu0 0.0
        %1805 = vmatpush1.msra.mxu0 0.0
        %1806 = vmatprep.subr.mxu0 0.0
        %1807 = vmatpush1.msra.mxu0 0.0
        %1808 = vmatprep.subr.mxu0 0.0
        %1809 = vmatpush1.msra.mxu0 0.0
        %1810 = vmatprep.subr.mxu0 0.0
        %1811 = vmatpush1.msra.mxu0 0.0
        %1812 = vmatprep.subr.mxu0 0.0
        %1813 = vmatpush1.msra.mxu0 0.0
        %1814 = vmatprep.subr.mxu0 0.0
        %1815 = vmatpush1.msra.mxu0 0.0
        %1816 = vmatprep.subr.mxu0 0.0
        %1817 = vmatpush1.msra.mxu0 0.0
        %1818 = vmatprep.subr.mxu0 0.0
        %1819 = vmatpush1.msra.mxu0 0.0
        %1820 = vmatprep.subr.mxu0 0.0
        %1821 = vmatpush1.msra.mxu0 0.0
        %1822 = vmatprep.subr.mxu0 0.0
        %1823 = vmatpush1.msra.mxu0 0.0
        %1824 = vmatprep.subr.mxu0 0.0
        %1825 = vmatpush1.msra.mxu0 0.0
        %1826 = vmatprep.mubr.f32.mxu0 0.0
        %1827 = vmatmul.mubr.f32.gmra.mrb[0].mxu0 %v1760
        %v1828 = vpop.f32.mrb[0].mxu0
        %v1829 = vadd.f32 %v1738, %v1828
        %v1830 = vpop.f32.mrb[0].mxu0
        %1831 = vdwg.mxu0
        %v1832 = vmul.f32 %v1829, 0.033333335
        %v1833 = vadd.f32 %v1045, %v1832
        %v1834 = vld [vmem:[%s16] sm:$0x1]
        %v1835 = vld [vmem:[%s17] sm:$0x1]
        %1836 = vadd.xlane.f32.xlu0 %v1833
        %v1837 = vpop.xlane.xlu0 %1836
        %v1838 = vrcp.pop 128.0
        %v1839 = vmul.f32 %v1837, %v1838
        %v1840 = vsub.f32 %v1833, %v1839
        %v1841 = vmul.f32 %v1840, %v1840
        %1842 = vadd.xlane.f32.xlu0 %v1841
        %v1843 = vpop.xlane.xlu0 %1842
        %v1844 = vmul.f32 %v1843, %v1838
        %v1845 = vadd.f32 %v1844, 1e-05
        %v1846 = vrsqrt.pop %v1845
        %v1847 = vmul.f32 %v1840, %v1846
        %v1849 = vlaneseq
        %v1850 = vshrl.u32 %v1849, 7
        %v1851 = vsub.s32 0, %v1850
        %v1852 = vrot.slane %v1834, %v1851
        %v1854 = vmul.f32 %v1847, %v1852
        %v1856 = vlaneseq
        %v1857 = vshrl.u32 %v1856, 7
        %v1858 = vsub.s32 0, %v1857
        %v1859 = vrot.slane %v1835, %v1858
        %v1861 = vadd.f32 %v1854, %v1859
        %v1862 = vld [vmem:[#allocation13] sm:$0xff]
        %v1863 = vld [vmem:[#allocation13 + $0x8] sm:$0xff]
        %v1864 = vld [vmem:[#allocation13 + $0x10] sm:$0xff]
        %v1865 = vld [vmem:[#allocation13 + $0x18] sm:$0xff]
        %v1866 = vld [vmem:[#allocation13 + $0x20] sm:$0xff]
        %v1867 = vld [vmem:[#allocation13 + $0x28] sm:$0xff]
        %v1868 = vld [vmem:[#allocation13 + $0x30] sm:$0xff]
        %v1869 = vld [vmem:[#allocation13 + $0x38] sm:$0xff]
        %v1870 = vld [vmem:[#allocation13 + $0x40] sm:$0xff]
        %v1871 = vld [vmem:[#allocation13 + $0x48] sm:$0xff]
        %v1872 = vld [vmem:[#allocation13 + $0x50] sm:$0xff]
        %v1873 = vld [vmem:[#allocation13 + $0x58] sm:$0xff]
        %v1874 = vld [vmem:[#allocation13 + $0x60] sm:$0xff]
        %v1875 = vld [vmem:[#allocation13 + $0x68] sm:$0xff]
        %v1876 = vld [vmem:[#allocation13 + $0x70] sm:$0xff]
        %v1877 = vld [vmem:[#allocation13 + $0x78] sm:$0xff]
        %v1878 = vld [vmem:[#allocation13 + $0x80] sm:$0xff]
        %v1879 = vld [vmem:[#allocation13 + $0x88] sm:$0xff]
        %v1880 = vld [vmem:[#allocation13 + $0x90] sm:$0xff]
        %v1881 = vld [vmem:[#allocation13 + $0x98] sm:$0xff]
        %v1882 = vld [vmem:[#allocation13 + $0xa0] sm:$0xff]
        %v1883 = vld [vmem:[#allocation13 + $0xa8] sm:$0xff]
        %v1884 = vld [vmem:[#allocation13 + $0xb0] sm:$0xff]
        %v1885 = vld [vmem:[#allocation13 + $0xb8] sm:$0xff]
        %v1886 = vld [vmem:[#allocation13 + $0xc0] sm:$0xff]
        %v1887 = vld [vmem:[#allocation13 + $0xc8] sm:$0xff]
        %v1888 = vld [vmem:[#allocation13 + $0xd0] sm:$0xff]
        %v1889 = vld [vmem:[#allocation13 + $0xd8] sm:$0xff]
        %v1890 = vld [vmem:[#allocation13 + $0xe0] sm:$0xff]
        %v1891 = vld [vmem:[#allocation13 + $0xe8] sm:$0xff]
        %v1892 = vld [vmem:[#allocation13 + $0xf0] sm:$0xff]
        %v1893 = vld [vmem:[#allocation13 + $0xf8] sm:$0xff]
        %v1894 = vld [vmem:[#allocation13 + $0x100] sm:$0xff]
        %v1895 = vld [vmem:[#allocation13 + $0x108] sm:$0xff]
        %v1896 = vld [vmem:[#allocation13 + $0x110] sm:$0xff]
        %v1897 = vld [vmem:[#allocation13 + $0x118] sm:$0xff]
        %v1898 = vld [vmem:[#allocation13 + $0x120] sm:$0xff]
        %v1899 = vld [vmem:[#allocation13 + $0x128] sm:$0xff]
        %v1900 = vld [vmem:[#allocation13 + $0x130] sm:$0xff]
        %v1901 = vld [vmem:[#allocation13 + $0x138] sm:$0xff]
        %v1902 = vld [vmem:[#allocation13 + $0x140] sm:$0xff]
        %v1903 = vld [vmem:[#allocation13 + $0x148] sm:$0xff]
        %v1904 = vld [vmem:[#allocation13 + $0x150] sm:$0xff]
        %v1905 = vld [vmem:[#allocation13 + $0x158] sm:$0xff]
        %v1906 = vld [vmem:[#allocation13 + $0x160] sm:$0xff]
        %v1907 = vld [vmem:[#allocation13 + $0x168] sm:$0xff]
        %v1908 = vld [vmem:[#allocation13 + $0x170] sm:$0xff]
        %v1909 = vld [vmem:[#allocation13 + $0x178] sm:$0xff]
        %v1910 = vld [vmem:[#allocation13 + $0x180] sm:$0xff]
        %v1911 = vld [vmem:[#allocation13 + $0x188] sm:$0xff]
        %v1912 = vld [vmem:[#allocation13 + $0x190] sm:$0xff]
        %v1913 = vld [vmem:[#allocation13 + $0x198] sm:$0xff]
        %v1914 = vld [vmem:[#allocation13 + $0x1a0] sm:$0xff]
        %v1915 = vld [vmem:[#allocation13 + $0x1a8] sm:$0xff]
        %v1916 = vld [vmem:[#allocation13 + $0x1b0] sm:$0xff]
        %v1917 = vld [vmem:[#allocation13 + $0x1b8] sm:$0xff]
        %v1918 = vld [vmem:[#allocation13 + $0x1c0] sm:$0xff]
        %v1919 = vld [vmem:[#allocation13 + $0x1c8] sm:$0xff]
        %v1920 = vld [vmem:[#allocation13 + $0x1d0] sm:$0xff]
        %v1921 = vld [vmem:[#allocation13 + $0x1d8] sm:$0xff]
        %v1922 = vld [vmem:[#allocation13 + $0x1e0] sm:$0xff]
        %v1923 = vld [vmem:[#allocation13 + $0x1e8] sm:$0xff]
        %v1924 = vld [vmem:[#allocation13 + $0x1f0] sm:$0xff]
        %v1925 = vld [vmem:[#allocation13 + $0x1f8] sm:$0xff]
        %v1926 = vld [vmem:[%s13] sm:$0xf]
        %v1928 = vlaneseq
        %v1929 = vshrl.u32 %v1928, 7
        %v1930 = vsub.s32 0, %v1929
        %v1931 = vrot.slane %v1926, %v1930
        %v1932 = vlaneseq
        %v1933 = vshrl.u32 %v1932, 7
        %v1934 = vsub.s32 1, %v1933
        %v1935 = vrot.slane %v1926, %v1934
        %v1936 = vlaneseq
        %v1937 = vshrl.u32 %v1936, 7
        %v1938 = vsub.s32 2, %v1937
        %v1939 = vrot.slane %v1926, %v1938
        %v1940 = vlaneseq
        %v1941 = vshrl.u32 %v1940, 7
        %v1942 = vsub.s32 3, %v1941
        %v1943 = vrot.slane %v1926, %v1942
        %1948 = vmatprep.subr.mxu0 %v1863
        %1949 = vmatpush1.msra.mxu0 %v1862
        %1950 = vmatprep.subr.mxu0 %v1867
        %1951 = vmatpush1.msra.mxu0 %v1866
        %1952 = vmatprep.subr.mxu0 %v1871
        %1953 = vmatpush1.msra.mxu0 %v1870
        %1954 = vmatprep.subr.mxu0 %v1875
        %1955 = vmatpush1.msra.mxu0 %v1874
        %1956 = vmatprep.subr.mxu0 %v1879
        %1957 = vmatpush1.msra.mxu0 %v1878
        %1958 = vmatprep.subr.mxu0 %v1883
        %1959 = vmatpush1.msra.mxu0 %v1882
        %1960 = vmatprep.subr.mxu0 %v1887
        %1961 = vmatpush1.msra.mxu0 %v1886
        %1962 = vmatprep.subr.mxu0 %v1891
        %1963 = vmatpush1.msra.mxu0 %v1890
        %1964 = vmatprep.subr.mxu0 %v1895
        %1965 = vmatpush1.msra.mxu0 %v1894
        %1966 = vmatprep.subr.mxu0 %v1899
        %1967 = vmatpush1.msra.mxu0 %v1898
        %1968 = vmatprep.subr.mxu0 %v1903
        %1969 = vmatpush1.msra.mxu0 %v1902
        %1970 = vmatprep.subr.mxu0 %v1907
        %1971 = vmatpush1.msra.mxu0 %v1906
        %1972 = vmatprep.subr.mxu0 %v1911
        %1973 = vmatpush1.msra.mxu0 %v1910
        %1974 = vmatprep.subr.mxu0 %v1915
        %1975 = vmatpush1.msra.mxu0 %v1914
        %1976 = vmatprep.subr.mxu0 %v1919
        %1977 = vmatpush1.msra.mxu0 %v1918
        %1978 = vmatprep.subr.mxu0 %v1923
        %1979 = vmatpush1.msra.mxu0 %v1922
        %1980 = vmatprep.subr.mxu0 0.0
        %1981 = vmatpush1.msra.mxu0 0.0
        %1982 = vmatprep.subr.mxu0 0.0
        %1983 = vmatpush1.msra.mxu0 0.0
        %1984 = vmatprep.subr.mxu0 0.0
        %1985 = vmatpush1.msra.mxu0 0.0
        %1986 = vmatprep.subr.mxu0 0.0
        %1987 = vmatpush1.msra.mxu0 0.0
        %1988 = vmatprep.subr.mxu0 0.0
        %1989 = vmatpush1.msra.mxu0 0.0
        %1990 = vmatprep.subr.mxu0 0.0
        %1991 = vmatpush1.msra.mxu0 0.0
        %1992 = vmatprep.subr.mxu0 0.0
        %1993 = vmatpush1.msra.mxu0 0.0
        %1994 = vmatprep.subr.mxu0 0.0
        %1995 = vmatpush1.msra.mxu0 0.0
        %1996 = vmatprep.subr.mxu0 0.0
        %1997 = vmatpush1.msra.mxu0 0.0
        %1998 = vmatprep.subr.mxu0 0.0
        %1999 = vmatpush1.msra.mxu0 0.0
        %2000 = vmatprep.subr.mxu0 0.0
        %2001 = vmatpush1.msra.mxu0 0.0
        %2002 = vmatprep.subr.mxu0 0.0
        %2003 = vmatpush1.msra.mxu0 0.0
        %2004 = vmatprep.subr.mxu0 0.0
        %2005 = vmatpush1.msra.mxu0 0.0
        %2006 = vmatprep.subr.mxu0 0.0
        %2007 = vmatpush1.msra.mxu0 0.0
        %2008 = vmatprep.subr.mxu0 0.0
        %2009 = vmatpush1.msra.mxu0 0.0
        %2010 = vmatprep.subr.mxu0 0.0
        %2011 = vmatpush1.msra.mxu0 0.0
        %2012 = vmatprep.mubr.f32.mxu0 0.0
        %2013 = vmatmul.mubr.f32.gmra.mrb[0].mxu0 %v1861
        %v2014 = vpop.f32.mrb[0].mxu0
        %v2015 = vadd.f32 %v1931, %v2014
        %v2016 = vpop.f32.mrb[0].mxu0
        %v2017 = vadd.f32 %v1935, %v2016
        %2018 = vdwg.mxu0
        %2019 = vmatprep.subr.mxu0 %v1865
        %2020 = vmatpush1.msra.mxu0 %v1864
        %2021 = vmatprep.subr.mxu0 %v1869
        %2022 = vmatpush1.msra.mxu0 %v1868
        %2023 = vmatprep.subr.mxu0 %v1873
        %2024 = vmatpush1.msra.mxu0 %v1872
        %2025 = vmatprep.subr.mxu0 %v1877
        %2026 = vmatpush1.msra.mxu0 %v1876
        %2027 = vmatprep.subr.mxu0 %v1881
        %2028 = vmatpush1.msra.mxu0 %v1880
        %2029 = vmatprep.subr.mxu0 %v1885
        %2030 = vmatpush1.msra.mxu0 %v1884
        %2031 = vmatprep.subr.mxu0 %v1889
        %2032 = vmatpush1.msra.mxu0 %v1888
        %2033 = vmatprep.subr.mxu0 %v1893
        %2034 = vmatpush1.msra.mxu0 %v1892
        %2035 = vmatprep.subr.mxu0 %v1897
        %2036 = vmatpush1.msra.mxu0 %v1896
        %2037 = vmatprep.subr.mxu0 %v1901
        %2038 = vmatpush1.msra.mxu0 %v1900
        %2039 = vmatprep.subr.mxu0 %v1905
        %2040 = vmatpush1.msra.mxu0 %v1904
        %2041 = vmatprep.subr.mxu0 %v1909
        %2042 = vmatpush1.msra.mxu0 %v1908
        %2043 = vmatprep.subr.mxu0 %v1913
        %2044 = vmatpush1.msra.mxu0 %v1912
        %2045 = vmatprep.subr.mxu0 %v1917
        %2046 = vmatpush1.msra.mxu0 %v1916
        %2047 = vmatprep.subr.mxu0 %v1921
        %2048 = vmatpush1.msra.mxu0 %v1920
        %2049 = vmatprep.subr.mxu0 %v1925
        %2050 = vmatpush1.msra.mxu0 %v1924
        %2051 = vmatprep.subr.mxu0 0.0
        %2052 = vmatpush1.msra.mxu0 0.0
        %2053 = vmatprep.subr.mxu0 0.0
        %2054 = vmatpush1.msra.mxu0 0.0
        %2055 = vmatprep.subr.mxu0 0.0
        %2056 = vmatpush1.msra.mxu0 0.0
        %2057 = vmatprep.subr.mxu0 0.0
        %2058 = vmatpush1.msra.mxu0 0.0
        %2059 = vmatprep.subr.mxu0 0.0
        %2060 = vmatpush1.msra.mxu0 0.0
        %2061 = vmatprep.subr.mxu0 0.0
        %2062 = vmatpush1.msra.mxu0 0.0
        %2063 = vmatprep.subr.mxu0 0.0
        %2064 = vmatpush1.msra.mxu0 0.0
        %2065 = vmatprep.subr.mxu0 0.0
        %2066 = vmatpush1.msra.mxu0 0.0
        %2067 = vmatprep.subr.mxu0 0.0
        %2068 = vmatpush1.msra.mxu0 0.0
        %2069 = vmatprep.subr.mxu0 0.0
        %2070 = vmatpush1.msra.mxu0 0.0
        %2071 = vmatprep.subr.mxu0 0.0
        %2072 = vmatpush1.msra.mxu0 0.0
        %2073 = vmatprep.subr.mxu0 0.0
        %2074 = vmatpush1.msra.mxu0 0.0
        %2075 = vmatprep.subr.mxu0 0.0
        %2076 = vmatpush1.msra.mxu0 0.0
        %2077 = vmatprep.subr.mxu0 0.0
        %2078 = vmatpush1.msra.mxu0 0.0
        %2079 = vmatprep.subr.mxu0 0.0
        %2080 = vmatpush1.msra.mxu0 0.0
        %2081 = vmatprep.subr.mxu0 0.0
        %2082 = vmatpush1.msra.mxu0 0.0
        %2083 = vmatprep.mubr.f32.mxu0 0.0
        %2084 = vmatmul.mubr.f32.gmra.mrb[0].mxu0 %v1861
        %v2085 = vpop.f32.mrb[0].mxu0
        %v2086 = vadd.f32 %v1939, %v2085
        %v2087 = vpop.f32.mrb[0].mxu0
        %v2088 = vadd.f32 %v1943, %v2087
        %2089 = vdwg.mxu0
        %v2090 = vmul.f32 %v2015, 0.5
        %v2091 = vmul.f32 %v2017, 0.5
        %v2092 = vmul.f32 %v2086, 0.5
        %v2093 = vmul.f32 %v2088, 0.5
        %v2094 = vmul.f32 %v2015, 0.70710677
        %v2095 = vmul.f32 %v2017, 0.70710677
        %v2096 = vmul.f32 %v2086, 0.70710677
        %v2097 = vmul.f32 %v2088, 0.70710677
        %v2098 = verf.f32.pop %v2094
        %v2099 = verf.f32.pop %v2095
        %v2100 = verf.f32.pop %v2096
        %v2101 = verf.f32.pop %v2097
        %v2102 = vadd.f32 %v2098, 1.0
        %v2103 = vadd.f32 %v2099, 1.0
        %v2104 = vadd.f32 %v2100, 1.0
        %v2105 = vadd.f32 %v2101, 1.0
        %v2106 = vmul.f32 %v2090, %v2102
        %v2107 = vmul.f32 %v2091, %v2103
        %v2108 = vmul.f32 %v2092, %v2104
        %v2109 = vmul.f32 %v2093, %v2105
        %v2110 = vld [vmem:[#allocation14] sm:$0xff]
        %v2111 = vld [vmem:[#allocation14 + $0x8] sm:$0xff]
        %v2112 = vld [vmem:[#allocation14 + $0x10] sm:$0xff]
        %v2113 = vld [vmem:[#allocation14 + $0x18] sm:$0xff]
        %v2114 = vld [vmem:[#allocation14 + $0x20] sm:$0xff]
        %v2115 = vld [vmem:[#allocation14 + $0x28] sm:$0xff]
        %v2116 = vld [vmem:[#allocation14 + $0x30] sm:$0xff]
        %v2117 = vld [vmem:[#allocation14 + $0x38] sm:$0xff]
        %v2118 = vld [vmem:[#allocation14 + $0x40] sm:$0xff]
        %v2119 = vld [vmem:[#allocation14 + $0x48] sm:$0xff]
        %v2120 = vld [vmem:[#allocation14 + $0x50] sm:$0xff]
        %v2121 = vld [vmem:[#allocation14 + $0x58] sm:$0xff]
        %v2122 = vld [vmem:[#allocation14 + $0x60] sm:$0xff]
        %v2123 = vld [vmem:[#allocation14 + $0x68] sm:$0xff]
        %v2124 = vld [vmem:[#allocation14 + $0x70] sm:$0xff]
        %v2125 = vld [vmem:[#allocation14 + $0x78] sm:$0xff]
        %v2126 = vld [vmem:[#allocation14 + $0x80] sm:$0xff]
        %v2127 = vld [vmem:[#allocation14 + $0x88] sm:$0xff]
        %v2128 = vld [vmem:[#allocation14 + $0x90] sm:$0xff]
        %v2129 = vld [vmem:[#allocation14 + $0x98] sm:$0xff]
        %v2130 = vld [vmem:[#allocation14 + $0xa0] sm:$0xff]
        %v2131 = vld [vmem:[#allocation14 + $0xa8] sm:$0xff]
        %v2132 = vld [vmem:[#allocation14 + $0xb0] sm:$0xff]
        %v2133 = vld [vmem:[#allocation14 + $0xb8] sm:$0xff]
        %v2134 = vld [vmem:[#allocation14 + $0xc0] sm:$0xff]
        %v2135 = vld [vmem:[#allocation14 + $0xc8] sm:$0xff]
        %v2136 = vld [vmem:[#allocation14 + $0xd0] sm:$0xff]
        %v2137 = vld [vmem:[#allocation14 + $0xd8] sm:$0xff]
        %v2138 = vld [vmem:[#allocation14 + $0xe0] sm:$0xff]
        %v2139 = vld [vmem:[#allocation14 + $0xe8] sm:$0xff]
        %v2140 = vld [vmem:[#allocation14 + $0xf0] sm:$0xff]
        %v2141 = vld [vmem:[#allocation14 + $0xf8] sm:$0xff]
        %v2142 = vld [vmem:[#allocation14 + $0x100] sm:$0xff]
        %v2143 = vld [vmem:[#allocation14 + $0x108] sm:$0xff]
        %v2144 = vld [vmem:[#allocation14 + $0x110] sm:$0xff]
        %v2145 = vld [vmem:[#allocation14 + $0x118] sm:$0xff]
        %v2146 = vld [vmem:[#allocation14 + $0x120] sm:$0xff]
        %v2147 = vld [vmem:[#allocation14 + $0x128] sm:$0xff]
        %v2148 = vld [vmem:[#allocation14 + $0x130] sm:$0xff]
        %v2149 = vld [vmem:[#allocation14 + $0x138] sm:$0xff]
        %v2150 = vld [vmem:[#allocation14 + $0x140] sm:$0xff]
        %v2151 = vld [vmem:[#allocation14 + $0x148] sm:$0xff]
        %v2152 = vld [vmem:[#allocation14 + $0x150] sm:$0xff]
        %v2153 = vld [vmem:[#allocation14 + $0x158] sm:$0xff]
        %v2154 = vld [vmem:[#allocation14 + $0x160] sm:$0xff]
        %v2155 = vld [vmem:[#allocation14 + $0x168] sm:$0xff]
        %v2156 = vld [vmem:[#allocation14 + $0x170] sm:$0xff]
        %v2157 = vld [vmem:[#allocation14 + $0x178] sm:$0xff]
        %v2158 = vld [vmem:[#allocation14 + $0x180] sm:$0xff]
        %v2159 = vld [vmem:[#allocation14 + $0x188] sm:$0xff]
        %v2160 = vld [vmem:[#allocation14 + $0x190] sm:$0xff]
        %v2161 = vld [vmem:[#allocation14 + $0x198] sm:$0xff]
        %v2162 = vld [vmem:[#allocation14 + $0x1a0] sm:$0xff]
        %v2163 = vld [vmem:[#allocation14 + $0x1a8] sm:$0xff]
        %v2164 = vld [vmem:[#allocation14 + $0x1b0] sm:$0xff]
        %v2165 = vld [vmem:[#allocation14 + $0x1b8] sm:$0xff]
        %v2166 = vld [vmem:[#allocation14 + $0x1c0] sm:$0xff]
        %v2167 = vld [vmem:[#allocation14 + $0x1c8] sm:$0xff]
        %v2168 = vld [vmem:[#allocation14 + $0x1d0] sm:$0xff]
        %v2169 = vld [vmem:[#allocation14 + $0x1d8] sm:$0xff]
        %v2170 = vld [vmem:[#allocation14 + $0x1e0] sm:$0xff]
        %v2171 = vld [vmem:[#allocation14 + $0x1e8] sm:$0xff]
        %v2172 = vld [vmem:[#allocation14 + $0x1f0] sm:$0xff]
        %v2173 = vld [vmem:[#allocation14 + $0x1f8] sm:$0xff]
        %2174 = vmatprep.subr.mxu0 0.0
        %2175 = vmatpush1.msra.mxu0 %v2110
        %2176 = vmatprep.subr.mxu0 0.0
        %2177 = vmatpush1.msra.mxu0 %v2111
        %2178 = vmatprep.subr.mxu0 0.0
        %2179 = vmatpush1.msra.mxu0 %v2112
        %2180 = vmatprep.subr.mxu0 0.0
        %2181 = vmatpush1.msra.mxu0 %v2113
        %2182 = vmatprep.subr.mxu0 0.0
        %2183 = vmatpush1.msra.mxu0 %v2114
        %2184 = vmatprep.subr.mxu0 0.0
        %2185 = vmatpush1.msra.mxu0 %v2115
        %2186 = vmatprep.subr.mxu0 0.0
        %2187 = vmatpush1.msra.mxu0 %v2116
        %2188 = vmatprep.subr.mxu0 0.0
        %2189 = vmatpush1.msra.mxu0 %v2117
        %2190 = vmatprep.subr.mxu0 0.0
        %2191 = vmatpush1.msra.mxu0 %v2118
        %2192 = vmatprep.subr.mxu0 0.0
        %2193 = vmatpush1.msra.mxu0 %v2119
        %2194 = vmatprep.subr.mxu0 0.0
        %2195 = vmatpush1.msra.mxu0 %v2120
        %2196 = vmatprep.subr.mxu0 0.0
        %2197 = vmatpush1.msra.mxu0 %v2121
        %2198 = vmatprep.subr.mxu0 0.0
        %2199 = vmatpush1.msra.mxu0 %v2122
        %2200 = vmatprep.subr.mxu0 0.0
        %2201 = vmatpush1.msra.mxu0 %v2123
        %2202 = vmatprep.subr.mxu0 0.0
        %2203 = vmatpush1.msra.mxu0 %v2124
        %2204 = vmatprep.subr.mxu0 0.0
        %2205 = vmatpush1.msra.mxu0 %v2125
        %2206 = vmatprep.subr.mxu0 0.0
        %2207 = vmatpush1.msra.mxu0 %v2126
        %2208 = vmatprep.subr.mxu0 0.0
        %2209 = vmatpush1.msra.mxu0 %v2127
        %2210 = vmatprep.subr.mxu0 0.0
        %2211 = vmatpush1.msra.mxu0 %v2128
        %2212 = vmatprep.subr.mxu0 0.0
        %2213 = vmatpush1.msra.mxu0 %v2129
        %2214 = vmatprep.subr.mxu0 0.0
        %2215 = vmatpush1.msra.mxu0 %v2130
        %2216 = vmatprep.subr.mxu0 0.0
        %2217 = vmatpush1.msra.mxu0 %v2131
        %2218 = vmatprep.subr.mxu0 0.0
        %2219 = vmatpush1.msra.mxu0 %v2132
        %2220 = vmatprep.subr.mxu0 0.0
        %2221 = vmatpush1.msra.mxu0 %v2133
        %2222 = vmatprep.subr.mxu0 0.0
        %2223 = vmatpush1.msra.mxu0 %v2134
        %2224 = vmatprep.subr.mxu0 0.0
        %2225 = vmatpush1.msra.mxu0 %v2135
        %2226 = vmatprep.subr.mxu0 0.0
        %2227 = vmatpush1.msra.mxu0 %v2136
        %2228 = vmatprep.subr.mxu0 0.0
        %2229 = vmatpush1.msra.mxu0 %v2137
        %2230 = vmatprep.subr.mxu0 0.0
        %2231 = vmatpush1.msra.mxu0 %v2138
        %2232 = vmatprep.subr.mxu0 0.0
        %2233 = vmatpush1.msra.mxu0 %v2139
        %2234 = vmatprep.subr.mxu0 0.0
        %2235 = vmatpush1.msra.mxu0 %v2140
        %2236 = vmatprep.subr.mxu0 0.0
        %2237 = vmatpush1.msra.mxu0 %v2141
        %2238 = vmatprep.mubr.f32.mxu0 %v2107
        %2239 = vmatmul.mubr.f32.gmra.mrb[0].mxu0 %v2106
        %v2240 = vpop.f32.mrb[0].mxu0
        %v2241 = vadd.f32 0.0, %v2240
        %v2242 = vpop.f32.mrb[0].mxu0
        %2243 = vdwg.mxu0
        %2244 = vmatprep.subr.mxu0 0.0
        %2245 = vmatpush1.msra.mxu0 %v2142
        %2246 = vmatprep.subr.mxu0 0.0
        %2247 = vmatpush1.msra.mxu0 %v2143
        %2248 = vmatprep.subr.mxu0 0.0
        %2249 = vmatpush1.msra.mxu0 %v2144
        %2250 = vmatprep.subr.mxu0 0.0
        %2251 = vmatpush1.msra.mxu0 %v2145
        %2252 = vmatprep.subr.mxu0 0.0
        %2253 = vmatpush1.msra.mxu0 %v2146
        %2254 = vmatprep.subr.mxu0 0.0
        %2255 = vmatpush1.msra.mxu0 %v2147
        %2256 = vmatprep.subr.mxu0 0.0
        %2257 = vmatpush1.msra.mxu0 %v2148
        %2258 = vmatprep.subr.mxu0 0.0
        %2259 = vmatpush1.msra.mxu0 %v2149
        %2260 = vmatprep.subr.mxu0 0.0
        %2261 = vmatpush1.msra.mxu0 %v2150
        %2262 = vmatprep.subr.mxu0 0.0
        %2263 = vmatpush1.msra.mxu0 %v2151
        %2264 = vmatprep.subr.mxu0 0.0
        %2265 = vmatpush1.msra.mxu0 %v2152
        %2266 = vmatprep.subr.mxu0 0.0
        %2267 = vmatpush1.msra.mxu0 %v2153
        %2268 = vmatprep.subr.mxu0 0.0
        %2269 = vmatpush1.msra.mxu0 %v2154
        %2270 = vmatprep.subr.mxu0 0.0
        %2271 = vmatpush1.msra.mxu0 %v2155
        %2272 = vmatprep.subr.mxu0 0.0
        %2273 = vmatpush1.msra.mxu0 %v2156
        %2274 = vmatprep.subr.mxu0 0.0
        %2275 = vmatpush1.msra.mxu0 %v2157
        %2276 = vmatprep.subr.mxu0 0.0
        %2277 = vmatpush1.msra.mxu0 %v2158
        %2278 = vmatprep.subr.mxu0 0.0
        %2279 = vmatpush1.msra.mxu0 %v2159
        %2280 = vmatprep.subr.mxu0 0.0
        %2281 = vmatpush1.msra.mxu0 %v2160
        %2282 = vmatprep.subr.mxu0 0.0
        %2283 = vmatpush1.msra.mxu0 %v2161
        %2284 = vmatprep.subr.mxu0 0.0
        %2285 = vmatpush1.msra.mxu0 %v2162
        %2286 = vmatprep.subr.mxu0 0.0
        %2287 = vmatpush1.msra.mxu0 %v2163
        %2288 = vmatprep.subr.mxu0 0.0
        %2289 = vmatpush1.msra.mxu0 %v2164
        %2290 = vmatprep.subr.mxu0 0.0
        %2291 = vmatpush1.msra.mxu0 %v2165
        %2292 = vmatprep.subr.mxu0 0.0
        %2293 = vmatpush1.msra.mxu0 %v2166
        %2294 = vmatprep.subr.mxu0 0.0
        %2295 = vmatpush1.msra.mxu0 %v2167
        %2296 = vmatprep.subr.mxu0 0.0
        %2297 = vmatpush1.msra.mxu0 %v2168
        %2298 = vmatprep.subr.mxu0 0.0
        %2299 = vmatpush1.msra.mxu0 %v2169
        %2300 = vmatprep.subr.mxu0 0.0
        %2301 = vmatpush1.msra.mxu0 %v2170
        %2302 = vmatprep.subr.mxu0 0.0
        %2303 = vmatpush1.msra.mxu0 %v2171
        %2304 = vmatprep.subr.mxu0 0.0
        %2305 = vmatpush1.msra.mxu0 %v2172
        %2306 = vmatprep.subr.mxu0 0.0
        %2307 = vmatpush1.msra.mxu0 %v2173
        %2308 = vmatprep.mubr.f32.mxu0 %v2109
        %2309 = vmatmul.mubr.f32.gmra.mrb[0].mxu0 %v2108
        %v2310 = vpop.f32.mrb[0].mxu0
        %v2311 = vadd.f32 %v2241, %v2310
        %v2312 = vpop.f32.mrb[0].mxu0
        %2313 = vdwg.mxu0
        %v2314 = vadd.f32 %v1861, %v2311
        %v2315 = vld [vmem:[%s15] sm:$0x1]
        %v2317 = vlaneseq
        %v2318 = vshrl.u32 %v2317, 7
        %v2319 = vsub.s32 0, %v2318
        %v2320 = vrot.slane %v2315, %v2319
        %v2322 = vadd.f32 %v2314, %v2320
        %v2323 = vld [vmem:[%s18] sm:$0x1]
        %v2324 = vld [vmem:[%s19] sm:$0x1]
        %2325 = vadd.xlane.f32.xlu0 %v2322
        %v2326 = vpop.xlane.xlu0 %2325
        %v2327 = vmul.f32 %v2326, %v1838
        %v2328 = vsub.f32 %v2322, %v2327
        %v2329 = vmul.f32 %v2328, %v2328
        %2330 = vadd.xlane.f32.xlu0 %v2329
        %v2331 = vpop.xlane.xlu0 %2330
        %v2332 = vmul.f32 %v2331, %v1838
        %v2333 = vadd.f32 %v2332, 1e-05
        %v2334 = vrsqrt.pop %v2333
        %v2335 = vmul.f32 %v2328, %v2334
        %v2337 = vlaneseq
        %v2338 = vshrl.u32 %v2337, 7
        %v2339 = vsub.s32 0, %v2338
        %v2340 = vrot.slane %v2323, %v2339
        %v2342 = vmul.f32 %v2335, %v2340
        %v2344 = vlaneseq
        %v2345 = vshrl.u32 %v2344, 7
        %v2346 = vsub.s32 0, %v2345
        %v2347 = vrot.slane %v2324, %v2346
        %v2349 = vadd.f32 %v2342, %v2347
        %v2350 = vld [vmem:[%s1036] sm:$0xff]
        %2352 = vset.pattern.permute.xlu0 0
        %2353 = vperm.xlu0 %2352, %v2350
        %v2354 = vpop.permute.xlu0 %2353
        %v2356 = vmul.f32 %v2354, %v2349
        %2357 = vst [vmem:[%s1015] sm:$0xff] %v2356
        %v2358 = vld [vmem:[%s23] sm:$0x1]
        %v2360 = vlaneseq
        %v2361 = vshrl.u32 %v2360, 7
        %v2362 = vsub.s32 0, %v2361
        %v2363 = vrot.slane %v2358, %v2362
        %v2365 = vsub.f32 %v2356, %v2363
        %v2366 = vld [vmem:[#allocation16] sm:$0xff]
        %v2367 = vld [vmem:[#allocation16 + $0x8] sm:$0xff]
        %v2368 = vld [vmem:[#allocation16 + $0x10] sm:$0xff]
        %v2369 = vld [vmem:[#allocation16 + $0x18] sm:$0xff]
        %v2370 = vld [vmem:[#allocation16 + $0x20] sm:$0xff]
        %v2371 = vld [vmem:[#allocation16 + $0x28] sm:$0xff]
        %v2372 = vld [vmem:[#allocation16 + $0x30] sm:$0xff]
        %v2373 = vld [vmem:[#allocation16 + $0x38] sm:$0xff]
        %v2374 = vld [vmem:[#allocation16 + $0x40] sm:$0xff]
        %v2375 = vld [vmem:[#allocation16 + $0x48] sm:$0xff]
        %v2376 = vld [vmem:[#allocation16 + $0x50] sm:$0xff]
        %v2377 = vld [vmem:[#allocation16 + $0x58] sm:$0xff]
        %v2378 = vld [vmem:[#allocation16 + $0x60] sm:$0xff]
        %v2379 = vld [vmem:[#allocation16 + $0x68] sm:$0xff]
        %v2380 = vld [vmem:[#allocation16 + $0x70] sm:$0xff]
        %v2381 = vld [vmem:[#allocation16 + $0x78] sm:$0xff]
        %v2382 = vld [vmem:[#allocation16 + $0x80] sm:$0xff]
        %v2383 = vld [vmem:[#allocation16 + $0x88] sm:$0xff]
        %v2384 = vld [vmem:[#allocation16 + $0x90] sm:$0xff]
        %v2385 = vld [vmem:[#allocation16 + $0x98] sm:$0xff]
        %v2386 = vld [vmem:[#allocation16 + $0xa0] sm:$0xff]
        %v2387 = vld [vmem:[#allocation16 + $0xa8] sm:$0xff]
        %v2388 = vld [vmem:[#allocation16 + $0xb0] sm:$0xff]
        %v2389 = vld [vmem:[#allocation16 + $0xb8] sm:$0xff]
        %v2390 = vld [vmem:[#allocation16 + $0xc0] sm:$0xff]
        %v2391 = vld [vmem:[#allocation16 + $0xc8] sm:$0xff]
        %v2392 = vld [vmem:[#allocation16 + $0xd0] sm:$0xff]
        %v2393 = vld [vmem:[#allocation16 + $0xd8] sm:$0xff]
        %v2394 = vld [vmem:[#allocation16 + $0xe0] sm:$0xff]
        %v2395 = vld [vmem:[#allocation16 + $0xe8] sm:$0xff]
        %v2396 = vld [vmem:[#allocation16 + $0xf0] sm:$0xff]
        %v2397 = vld [vmem:[#allocation16 + $0xf8] sm:$0xff]
        %v2398 = vld [vmem:[#allocation16 + $0x100] sm:$0xff]
        %v2399 = vld [vmem:[#allocation16 + $0x108] sm:$0xff]
        %v2400 = vld [vmem:[#allocation16 + $0x110] sm:$0xff]
        %v2401 = vld [vmem:[#allocation16 + $0x118] sm:$0xff]
        %v2402 = vld [vmem:[#allocation16 + $0x120] sm:$0xff]
        %v2403 = vld [vmem:[#allocation16 + $0x128] sm:$0xff]
        %v2404 = vld [vmem:[#allocation16 + $0x130] sm:$0xff]
        %v2405 = vld [vmem:[#allocation16 + $0x138] sm:$0xff]
        %v2406 = vld [vmem:[#allocation16 + $0x140] sm:$0xff]
        %v2407 = vld [vmem:[#allocation16 + $0x148] sm:$0xff]
        %v2408 = vld [vmem:[#allocation16 + $0x150] sm:$0xff]
        %v2409 = vld [vmem:[#allocation16 + $0x158] sm:$0xff]
        %v2410 = vld [vmem:[#allocation16 + $0x160] sm:$0xff]
        %v2411 = vld [vmem:[#allocation16 + $0x168] sm:$0xff]
        %v2412 = vld [vmem:[#allocation16 + $0x170] sm:$0xff]
        %v2413 = vld [vmem:[#allocation16 + $0x178] sm:$0xff]
        %v2414 = vld [vmem:[#allocation16 + $0x180] sm:$0xff]
        %v2415 = vld [vmem:[#allocation16 + $0x188] sm:$0xff]
        %v2416 = vld [vmem:[#allocation16 + $0x190] sm:$0xff]
        %v2417 = vld [vmem:[#allocation16 + $0x198] sm:$0xff]
        %v2418 = vld [vmem:[#allocation16 + $0x1a0] sm:$0xff]
        %v2419 = vld [vmem:[#allocation16 + $0x1a8] sm:$0xff]
        %v2420 = vld [vmem:[#allocation16 + $0x1b0] sm:$0xff]
        %v2421 = vld [vmem:[#allocation16 + $0x1b8] sm:$0xff]
        %v2422 = vld [vmem:[#allocation16 + $0x1c0] sm:$0xff]
        %v2423 = vld [vmem:[#allocation16 + $0x1c8] sm:$0xff]
        %v2424 = vld [vmem:[#allocation16 + $0x1d0] sm:$0xff]
        %v2425 = vld [vmem:[#allocation16 + $0x1d8] sm:$0xff]
        %v2426 = vld [vmem:[#allocation16 + $0x1e0] sm:$0xff]
        %v2427 = vld [vmem:[#allocation16 + $0x1e8] sm:$0xff]
        %v2428 = vld [vmem:[#allocation16 + $0x1f0] sm:$0xff]
        %v2429 = vld [vmem:[#allocation16 + $0x1f8] sm:$0xff]
        %v2430 = vld [vmem:[#allocation16 + $0x200] sm:$0xff]
        %v2431 = vld [vmem:[#allocation16 + $0x208] sm:$0xff]
        %v2432 = vld [vmem:[#allocation16 + $0x210] sm:$0xff]
        %v2433 = vld [vmem:[#allocation16 + $0x218] sm:$0xff]
        %v2434 = vld [vmem:[#allocation16 + $0x220] sm:$0xff]
        %v2435 = vld [vmem:[#allocation16 + $0x228] sm:$0xff]
        %v2436 = vld [vmem:[#allocation16 + $0x230] sm:$0xff]
        %v2437 = vld [vmem:[#allocation16 + $0x238] sm:$0xff]
        %v2438 = vld [vmem:[#allocation16 + $0x240] sm:$0xff]
        %v2439 = vld [vmem:[#allocation16 + $0x248] sm:$0xff]
        %v2440 = vld [vmem:[#allocation16 + $0x250] sm:$0xff]
        %v2441 = vld [vmem:[#allocation16 + $0x258] sm:$0xff]
        %v2442 = vld [vmem:[#allocation16 + $0x260] sm:$0xff]
        %v2443 = vld [vmem:[#allocation16 + $0x268] sm:$0xff]
        %v2444 = vld [vmem:[#allocation16 + $0x270] sm:$0xff]
        %v2445 = vld [vmem:[#allocation16 + $0x278] sm:$0xff]
        %v2446 = vld [vmem:[#allocation16 + $0x280] sm:$0xff]
        %v2447 = vld [vmem:[#allocation16 + $0x288] sm:$0xff]
        %v2448 = vld [vmem:[#allocation16 + $0x290] sm:$0xff]
        %v2449 = vld [vmem:[#allocation16 + $0x298] sm:$0xff]
        %v2450 = vld [vmem:[#allocation16 + $0x2a0] sm:$0xff]
        %v2451 = vld [vmem:[#allocation16 + $0x2a8] sm:$0xff]
        %v2452 = vld [vmem:[#allocation16 + $0x2b0] sm:$0xff]
        %v2453 = vld [vmem:[#allocation16 + $0x2b8] sm:$0xff]
        %v2454 = vld [vmem:[#allocation16 + $0x2c0] sm:$0xff]
        %v2455 = vld [vmem:[#allocation16 + $0x2c8] sm:$0xff]
        %v2456 = vld [vmem:[#allocation16 + $0x2d0] sm:$0xff]
        %v2457 = vld [vmem:[#allocation16 + $0x2d8] sm:$0xff]
        %v2458 = vld [vmem:[#allocation16 + $0x2e0] sm:$0xff]
        %v2459 = vld [vmem:[#allocation16 + $0x2e8] sm:$0xff]
        %v2460 = vld [vmem:[#allocation16 + $0x2f0] sm:$0xff]
        %v2461 = vld [vmem:[#allocation16 + $0x2f8] sm:$0xff]
        %v2462 = vld [vmem:[#allocation16 + $0x300] sm:$0xff]
        %v2463 = vld [vmem:[#allocation16 + $0x308] sm:$0xff]
        %v2464 = vld [vmem:[#allocation16 + $0x310] sm:$0xff]
        %v2465 = vld [vmem:[#allocation16 + $0x318] sm:$0xff]
        %v2466 = vld [vmem:[#allocation16 + $0x320] sm:$0xff]
        %v2467 = vld [vmem:[#allocation16 + $0x328] sm:$0xff]
        %v2468 = vld [vmem:[#allocation16 + $0x330] sm:$0xff]
        %v2469 = vld [vmem:[#allocation16 + $0x338] sm:$0xff]
        %v2470 = vld [vmem:[#allocation16 + $0x340] sm:$0xff]
        %v2471 = vld [vmem:[#allocation16 + $0x348] sm:$0xff]
        %v2472 = vld [vmem:[#allocation16 + $0x350] sm:$0xff]
        %v2473 = vld [vmem:[#allocation16 + $0x358] sm:$0xff]
        %v2474 = vld [vmem:[#allocation16 + $0x360] sm:$0xff]
        %v2475 = vld [vmem:[#allocation16 + $0x368] sm:$0xff]
        %v2476 = vld [vmem:[#allocation16 + $0x370] sm:$0xff]
        %v2477 = vld [vmem:[#allocation16 + $0x378] sm:$0xff]
        %v2478 = vld [vmem:[#allocation16 + $0x380] sm:$0xff]
        %v2479 = vld [vmem:[#allocation16 + $0x388] sm:$0xff]
        %v2480 = vld [vmem:[#allocation16 + $0x390] sm:$0xff]
        %v2481 = vld [vmem:[#allocation16 + $0x398] sm:$0xff]
        %v2482 = vld [vmem:[#allocation16 + $0x3a0] sm:$0xff]
        %v2483 = vld [vmem:[#allocation16 + $0x3a8] sm:$0xff]
        %v2484 = vld [vmem:[#allocation16 + $0x3b0] sm:$0xff]
        %v2485 = vld [vmem:[#allocation16 + $0x3b8] sm:$0xff]
        %v2486 = vld [vmem:[#allocation16 + $0x3c0] sm:$0xff]
        %v2487 = vld [vmem:[#allocation16 + $0x3c8] sm:$0xff]
        %v2488 = vld [vmem:[#allocation16 + $0x3d0] sm:$0xff]
        %v2489 = vld [vmem:[#allocation16 + $0x3d8] sm:$0xff]
        %v2490 = vld [vmem:[#allocation16 + $0x3e0] sm:$0xff]
        %v2491 = vld [vmem:[#allocation16 + $0x3e8] sm:$0xff]
        %v2492 = vld [vmem:[#allocation16 + $0x3f0] sm:$0xff]
        %v2493 = vld [vmem:[#allocation16 + $0x3f8] sm:$0xff]
        %v2494 = vld [vmem:[%s21] sm:$0xff]
        %v2496 = vlaneseq
        %v2497 = vshrl.u32 %v2496, 7
        %v2498 = vsub.s32 0, %v2497
        %v2499 = vrot.slane %v2494, %v2498
        %v2500 = vlaneseq
        %v2501 = vshrl.u32 %v2500, 7
        %v2502 = vsub.s32 1, %v2501
        %v2503 = vrot.slane %v2494, %v2502
        %v2504 = vlaneseq
        %v2505 = vshrl.u32 %v2504, 7
        %v2506 = vsub.s32 2, %v2505
        %v2507 = vrot.slane %v2494, %v2506
        %v2508 = vlaneseq
        %v2509 = vshrl.u32 %v2508, 7
        %v2510 = vsub.s32 3, %v2509
        %v2511 = vrot.slane %v2494, %v2510
        %v2512 = vlaneseq
        %v2513 = vshrl.u32 %v2512, 7
        %v2514 = vsub.s32 4, %v2513
        %v2515 = vrot.slane %v2494, %v2514
        %v2516 = vlaneseq
        %v2517 = vshrl.u32 %v2516, 7
        %v2518 = vsub.s32 5, %v2517
        %v2519 = vrot.slane %v2494, %v2518
        %v2520 = vlaneseq
        %v2521 = vshrl.u32 %v2520, 7
        %v2522 = vsub.s32 6, %v2521
        %v2523 = vrot.slane %v2494, %v2522
        %v2524 = vlaneseq
        %v2525 = vshrl.u32 %v2524, 7
        %v2526 = vsub.s32 7, %v2525
        %v2527 = vrot.slane %v2494, %v2526
        %2536 = vmatprep.subr.mxu0 %v2367
        %2537 = vmatpush1.msra.mxu0 %v2366
        %2538 = vmatprep.subr.mxu0 %v2375
        %2539 = vmatpush1.msra.mxu0 %v2374
        %2540 = vmatprep.subr.mxu0 %v2383
        %2541 = vmatpush1.msra.mxu0 %v2382
        %2542 = vmatprep.subr.mxu0 %v2391
        %2543 = vmatpush1.msra.mxu0 %v2390
        %2544 = vmatprep.subr.mxu0 %v2399
        %2545 = vmatpush1.msra.mxu0 %v2398
        %2546 = vmatprep.subr.mxu0 %v2407
        %2547 = vmatpush1.msra.mxu0 %v2406
        %2548 = vmatprep.subr.mxu0 %v2415
        %2549 = vmatpush1.msra.mxu0 %v2414
        %2550 = vmatprep.subr.mxu0 %v2423
        %2551 = vmatpush1.msra.mxu0 %v2422
        %2552 = vmatprep.subr.mxu0 %v2431
        %2553 = vmatpush1.msra.mxu0 %v2430
        %2554 = vmatprep.subr.mxu0 %v2439
        %2555 = vmatpush1.msra.mxu0 %v2438
        %2556 = vmatprep.subr.mxu0 %v2447
        %2557 = vmatpush1.msra.mxu0 %v2446
        %2558 = vmatprep.subr.mxu0 %v2455
        %2559 = vmatpush1.msra.mxu0 %v2454
        %2560 = vmatprep.subr.mxu0 %v2463
        %2561 = vmatpush1.msra.mxu0 %v2462
        %2562 = vmatprep.subr.mxu0 %v2471
        %2563 = vmatpush1.msra.mxu0 %v2470
        %2564 = vmatprep.subr.mxu0 %v2479
        %2565 = vmatpush1.msra.mxu0 %v2478
        %2566 = vmatprep.subr.mxu0 %v2487
        %2567 = vmatpush1.msra.mxu0 %v2486
        %2568 = vmatprep.subr.mxu0 0.0
        %2569 = vmatpush1.msra.mxu0 0.0
        %2570 = vmatprep.subr.mxu0 0.0
        %2571 = vmatpush1.msra.mxu0 0.0
        %2572 = vmatprep.subr.mxu0 0.0
        %2573 = vmatpush1.msra.mxu0 0.0
        %2574 = vmatprep.subr.mxu0 0.0
        %2575 = vmatpush1.msra.mxu0 0.0
        %2576 = vmatprep.subr.mxu0 0.0
        %2577 = vmatpush1.msra.mxu0 0.0
        %2578 = vmatprep.subr.mxu0 0.0
        %2579 = vmatpush1.msra.mxu0 0.0
        %2580 = vmatprep.subr.mxu0 0.0
        %2581 = vmatpush1.msra.mxu0 0.0
        %2582 = vmatprep.subr.mxu0 0.0
        %2583 = vmatpush1.msra.mxu0 0.0
        %2584 = vmatprep.subr.mxu0 0.0
        %2585 = vmatpush1.msra.mxu0 0.0
        %2586 = vmatprep.subr.mxu0 0.0
        %2587 = vmatpush1.msra.mxu0 0.0
        %2588 = vmatprep.subr.mxu0 0.0
        %2589 = vmatpush1.msra.mxu0 0.0
        %2590 = vmatprep.subr.mxu0 0.0
        %2591 = vmatpush1.msra.mxu0 0.0
        %2592 = vmatprep.subr.mxu0 0.0
        %2593 = vmatpush1.msra.mxu0 0.0
        %2594 = vmatprep.subr.mxu0 0.0
        %2595 = vmatpush1.msra.mxu0 0.0
        %2596 = vmatprep.subr.mxu0 0.0
        %2597 = vmatpush1.msra.mxu0 0.0
        %2598 = vmatprep.subr.mxu0 0.0
        %2599 = vmatpush1.msra.mxu0 0.0
        %2600 = vmatprep.mubr.f32.mxu0 0.0
        %2601 = vmatmul.mubr.f32.gmra.mrb[0].mxu0 %v2365
        %v2602 = vpop.f32.mrb[0].mxu0
        %v2603 = vadd.f32 %v2499, %v2602
        %v2604 = vpop.f32.mrb[0].mxu0
        %v2605 = vadd.f32 %v2503, %v2604
        %2606 = vdwg.mxu0
        %2607 = vmatprep.subr.mxu0 %v2369
        %2608 = vmatpush1.msra.mxu0 %v2368
        %2609 = vmatprep.subr.mxu0 %v2377
        %2610 = vmatpush1.msra.mxu0 %v2376
        %2611 = vmatprep.subr.mxu0 %v2385
        %2612 = vmatpush1.msra.mxu0 %v2384
        %2613 = vmatprep.subr.mxu0 %v2393
        %2614 = vmatpush1.msra.mxu0 %v2392
        %2615 = vmatprep.subr.mxu0 %v2401
        %2616 = vmatpush1.msra.mxu0 %v2400
        %2617 = vmatprep.subr.mxu0 %v2409
        %2618 = vmatpush1.msra.mxu0 %v2408
        %2619 = vmatprep.subr.mxu0 %v2417
        %2620 = vmatpush1.msra.mxu0 %v2416
        %2621 = vmatprep.subr.mxu0 %v2425
        %2622 = vmatpush1.msra.mxu0 %v2424
        %2623 = vmatprep.subr.mxu0 %v2433
        %2624 = vmatpush1.msra.mxu0 %v2432
        %2625 = vmatprep.subr.mxu0 %v2441
        %2626 = vmatpush1.msra.mxu0 %v2440
        %2627 = vmatprep.subr.mxu0 %v2449
        %2628 = vmatpush1.msra.mxu0 %v2448
        %2629 = vmatprep.subr.mxu0 %v2457
        %2630 = vmatpush1.msra.mxu0 %v2456
        %2631 = vmatprep.subr.mxu0 %v2465
        %2632 = vmatpush1.msra.mxu0 %v2464
        %2633 = vmatprep.subr.mxu0 %v2473
        %2634 = vmatpush1.msra.mxu0 %v2472
        %2635 = vmatprep.subr.mxu0 %v2481
        %2636 = vmatpush1.msra.mxu0 %v2480
        %2637 = vmatprep.subr.mxu0 %v2489
        %2638 = vmatpush1.msra.mxu0 %v2488
        %2639 = vmatprep.subr.mxu0 0.0
        %2640 = vmatpush1.msra.mxu0 0.0
        %2641 = vmatprep.subr.mxu0 0.0
        %2642 = vmatpush1.msra.mxu0 0.0
        %2643 = vmatprep.subr.mxu0 0.0
        %2644 = vmatpush1.msra.mxu0 0.0
        %2645 = vmatprep.subr.mxu0 0.0
        %2646 = vmatpush1.msra.mxu0 0.0
        %2647 = vmatprep.subr.mxu0 0.0
        %2648 = vmatpush1.msra.mxu0 0.0
        %2649 = vmatprep.subr.mxu0 0.0
        %2650 = vmatpush1.msra.mxu0 0.0
        %2651 = vmatprep.subr.mxu0 0.0
        %2652 = vmatpush1.msra.mxu0 0.0
        %2653 = vmatprep.subr.mxu0 0.0
        %2654 = vmatpush1.msra.mxu0 0.0
        %2655 = vmatprep.subr.mxu0 0.0
        %2656 = vmatpush1.msra.mxu0 0.0
        %2657 = vmatprep.subr.mxu0 0.0
        %2658 = vmatpush1.msra.mxu0 0.0
        %2659 = vmatprep.subr.mxu0 0.0
        %2660 = vmatpush1.msra.mxu0 0.0
        %2661 = vmatprep.subr.mxu0 0.0
        %2662 = vmatpush1.msra.mxu0 0.0
        %2663 = vmatprep.subr.mxu0 0.0
        %2664 = vmatpush1.msra.mxu0 0.0
        %2665 = vmatprep.subr.mxu0 0.0
        %2666 = vmatpush1.msra.mxu0 0.0
        %2667 = vmatprep.subr.mxu0 0.0
        %2668 = vmatpush1.msra.mxu0 0.0
        %2669 = vmatprep.subr.mxu0 0.0
        %2670 = vmatpush1.msra.mxu0 0.0
        %2671 = vmatprep.mubr.f32.mxu0 0.0
        %2672 = vmatmul.mubr.f32.gmra.mrb[0].mxu0 %v2365
        %v2673 = vpop.f32.mrb[0].mxu0
        %v2674 = vadd.f32 %v2507, %v2673
        %v2675 = vpop.f32.mrb[0].mxu0
        %v2676 = vadd.f32 %v2511, %v2675
        %2677 = vdwg.mxu0
        %2678 = vmatprep.subr.mxu0 %v2371
        %2679 = vmatpush1.msra.mxu0 %v2370
        %2680 = vmatprep.subr.mxu0 %v2379
        %2681 = vmatpush1.msra.mxu0 %v2378
        %2682 = vmatprep.subr.mxu0 %v2387
        %2683 = vmatpush1.msra.mxu0 %v2386
        %2684 = vmatprep.subr.mxu0 %v2395
        %2685 = vmatpush1.msra.mxu0 %v2394
        %2686 = vmatprep.subr.mxu0 %v2403
        %2687 = vmatpush1.msra.mxu0 %v2402
        %2688 = vmatprep.subr.mxu0 %v2411
        %2689 = vmatpush1.msra.mxu0 %v2410
        %2690 = vmatprep.subr.mxu0 %v2419
        %2691 = vmatpush1.msra.mxu0 %v2418
        %2692 = vmatprep.subr.mxu0 %v2427
        %2693 = vmatpush1.msra.mxu0 %v2426
        %2694 = vmatprep.subr.mxu0 %v2435
        %2695 = vmatpush1.msra.mxu0 %v2434
        %2696 = vmatprep.subr.mxu0 %v2443
        %2697 = vmatpush1.msra.mxu0 %v2442
        %2698 = vmatprep.subr.mxu0 %v2451
        %2699 = vmatpush1.msra.mxu0 %v2450
        %2700 = vmatprep.subr.mxu0 %v2459
        %2701 = vmatpush1.msra.mxu0 %v2458
        %2702 = vmatprep.subr.mxu0 %v2467
        %2703 = vmatpush1.msra.mxu0 %v2466
        %2704 = vmatprep.subr.mxu0 %v2475
        %2705 = vmatpush1.msra.mxu0 %v2474
        %2706 = vmatprep.subr.mxu0 %v2483
        %2707 = vmatpush1.msra.mxu0 %v2482
        %2708 = vmatprep.subr.mxu0 %v2491
        %2709 = vmatpush1.msra.mxu0 %v2490
        %2710 = vmatprep.subr.mxu0 0.0
        %2711 = vmatpush1.msra.mxu0 0.0
        %2712 = vmatprep.subr.mxu0 0.0
        %2713 = vmatpush1.msra.mxu0 0.0
        %2714 = vmatprep.subr.mxu0 0.0
        %2715 = vmatpush1.msra.mxu0 0.0
        %2716 = vmatprep.subr.mxu0 0.0
        %2717 = vmatpush1.msra.mxu0 0.0
        %2718 = vmatprep.subr.mxu0 0.0
        %2719 = vmatpush1.msra.mxu0 0.0
        %2720 = vmatprep.subr.mxu0 0.0
        %2721 = vmatpush1.msra.mxu0 0.0
        %2722 = vmatprep.subr.mxu0 0.0
        %2723 = vmatpush1.msra.mxu0 0.0
        %2724 = vmatprep.subr.mxu0 0.0
        %2725 = vmatpush1.msra.mxu0 0.0
        %2726 = vmatprep.subr.mxu0 0.0
        %2727 = vmatpush1.msra.mxu0 0.0
        %2728 = vmatprep.subr.mxu0 0.0
        %2729 = vmatpush1.msra.mxu0 0.0
        %2730 = vmatprep.subr.mxu0 0.0
        %2731 = vmatpush1.msra.mxu0 0.0
        %2732 = vmatprep.subr.mxu0 0.0
        %2733 = vmatpush1.msra.mxu0 0.0
        %2734 = vmatprep.subr.mxu0 0.0
        %2735 = vmatpush1.msra.mxu0 0.0
        %2736 = vmatprep.subr.mxu0 0.0
        %2737 = vmatpush1.msra.mxu0 0.0
        %2738 = vmatprep.subr.mxu0 0.0
        %2739 = vmatpush1.msra.mxu0 0.0
        %2740 = vmatprep.subr.mxu0 0.0
        %2741 = vmatpush1.msra.mxu0 0.0
        %2742 = vmatprep.mubr.f32.mxu0 0.0
        %2743 = vmatmul.mubr.f32.gmra.mrb[0].mxu0 %v2365
        %v2744 = vpop.f32.mrb[0].mxu0
        %v2745 = vadd.f32 %v2515, %v2744
        %v2746 = vpop.f32.mrb[0].mxu0
        %v2747 = vadd.f32 %v2519, %v2746
        %2748 = vdwg.mxu0
        %2749 = vmatprep.subr.mxu0 %v2373
        %2750 = vmatpush1.msra.mxu0 %v2372
        %2751 = vmatprep.subr.mxu0 %v2381
        %2752 = vmatpush1.msra.mxu0 %v2380
        %2753 = vmatprep.subr.mxu0 %v2389
        %2754 = vmatpush1.msra.mxu0 %v2388
        %2755 = vmatprep.subr.mxu0 %v2397
        %2756 = vmatpush1.msra.mxu0 %v2396
        %2757 = vmatprep.subr.mxu0 %v2405
        %2758 = vmatpush1.msra.mxu0 %v2404
        %2759 = vmatprep.subr.mxu0 %v2413
        %2760 = vmatpush1.msra.mxu0 %v2412
        %2761 = vmatprep.subr.mxu0 %v2421
        %2762 = vmatpush1.msra.mxu0 %v2420
        %2763 = vmatprep.subr.mxu0 %v2429
        %2764 = vmatpush1.msra.mxu0 %v2428
        %2765 = vmatprep.subr.mxu0 %v2437
        %2766 = vmatpush1.msra.mxu0 %v2436
        %2767 = vmatprep.subr.mxu0 %v2445
        %2768 = vmatpush1.msra.mxu0 %v2444
        %2769 = vmatprep.subr.mxu0 %v2453
        %2770 = vmatpush1.msra.mxu0 %v2452
        %2771 = vmatprep.subr.mxu0 %v2461
        %2772 = vmatpush1.msra.mxu0 %v2460
        %2773 = vmatprep.subr.mxu0 %v2469
        %2774 = vmatpush1.msra.mxu0 %v2468
        %2775 = vmatprep.subr.mxu0 %v2477
        %2776 = vmatpush1.msra.mxu0 %v2476
        %2777 = vmatprep.subr.mxu0 %v2485
        %2778 = vmatpush1.msra.mxu0 %v2484
        %2779 = vmatprep.subr.mxu0 %v2493
        %2780 = vmatpush1.msra.mxu0 %v2492
        %2781 = vmatprep.subr.mxu0 0.0
        %2782 = vmatpush1.msra.mxu0 0.0
        %2783 = vmatprep.subr.mxu0 0.0
        %2784 = vmatpush1.msra.mxu0 0.0
        %2785 = vmatprep.subr.mxu0 0.0
        %2786 = vmatpush1.msra.mxu0 0.0
        %2787 = vmatprep.subr.mxu0 0.0
        %2788 = vmatpush1.msra.mxu0 0.0
        %2789 = vmatprep.subr.mxu0 0.0
        %2790 = vmatpush1.msra.mxu0 0.0
        %2791 = vmatprep.subr.mxu0 0.0
        %2792 = vmatpush1.msra.mxu0 0.0
        %2793 = vmatprep.subr.mxu0 0.0
        %2794 = vmatpush1.msra.mxu0 0.0
        %2795 = vmatprep.subr.mxu0 0.0
        %2796 = vmatpush1.msra.mxu0 0.0
        %2797 = vmatprep.subr.mxu0 0.0
        %2798 = vmatpush1.msra.mxu0 0.0
        %2799 = vmatprep.subr.mxu0 0.0
        %2800 = vmatpush1.msra.mxu0 0.0
        %2801 = vmatprep.subr.mxu0 0.0
        %2802 = vmatpush1.msra.mxu0 0.0
        %2803 = vmatprep.subr.mxu0 0.0
        %2804 = vmatpush1.msra.mxu0 0.0
        %2805 = vmatprep.subr.mxu0 0.0
        %2806 = vmatpush1.msra.mxu0 0.0
        %2807 = vmatprep.subr.mxu0 0.0
        %2808 = vmatpush1.msra.mxu0 0.0
        %2809 = vmatprep.subr.mxu0 0.0
        %2810 = vmatpush1.msra.mxu0 0.0
        %2811 = vmatprep.subr.mxu0 0.0
        %2812 = vmatpush1.msra.mxu0 0.0
        %2813 = vmatprep.mubr.f32.mxu0 0.0
        %2814 = vmatmul.mubr.f32.gmra.mrb[0].mxu0 %v2365
        %v2815 = vpop.f32.mrb[0].mxu0
        %v2816 = vadd.f32 %v2523, %v2815
        %v2817 = vpop.f32.mrb[0].mxu0
        %v2818 = vadd.f32 %v2527, %v2817
        %2819 = vdwg.mxu0
        %v2820 = vmax.f32 %v2603, 0.0
        %v2821 = vmax.f32 %v2605, 0.0
        %v2822 = vmax.f32 %v2674, 0.0
        %v2823 = vmax.f32 %v2676, 0.0
        %v2824 = vmax.f32 %v2745, 0.0
        %v2825 = vmax.f32 %v2747, 0.0
        %v2826 = vmax.f32 %v2816, 0.0
        %v2827 = vmax.f32 %v2818, 0.0
        %2828 = vst [vmem:[%s1022] sm:$0xff] %v2820
        %2829 = vst [vmem:[%s1022 + $0x8] sm:$0xff] %v2821
        %2830 = vst [vmem:[%s1022 + $0x10] sm:$0xff] %v2822
        %2831 = vst [vmem:[%s1022 + $0x18] sm:$0xff] %v2823
        %2832 = vst [vmem:[%s1022 + $0x20] sm:$0xff] %v2824
        %2833 = vst [vmem:[%s1022 + $0x28] sm:$0xff] %v2825
        %2834 = vst [vmem:[%s1022 + $0x30] sm:$0xff] %v2826
        %2835 = vst [vmem:[%s1022 + $0x38] sm:$0xff] %v2827
        %v2836 = vld [vmem:[#allocation17] sm:$0xff]
        %v2837 = vld [vmem:[#allocation17 + $0x8] sm:$0xff]
        %v2838 = vld [vmem:[#allocation17 + $0x10] sm:$0xff]
        %v2839 = vld [vmem:[#allocation17 + $0x18] sm:$0xff]
        %v2840 = vld [vmem:[#allocation17 + $0x20] sm:$0xff]
        %v2841 = vld [vmem:[#allocation17 + $0x28] sm:$0xff]
        %v2842 = vld [vmem:[#allocation17 + $0x30] sm:$0xff]
        %v2843 = vld [vmem:[#allocation17 + $0x38] sm:$0xff]
        %v2844 = vld [vmem:[#allocation17 + $0x40] sm:$0xff]
        %v2845 = vld [vmem:[#allocation17 + $0x48] sm:$0xff]
        %v2846 = vld [vmem:[#allocation17 + $0x50] sm:$0xff]
        %v2847 = vld [vmem:[#allocation17 + $0x58] sm:$0xff]
        %v2848 = vld [vmem:[#allocation17 + $0x60] sm:$0xff]
        %v2849 = vld [vmem:[#allocation17 + $0x68] sm:$0xff]
        %v2850 = vld [vmem:[#allocation17 + $0x70] sm:$0xff]
        %v2851 = vld [vmem:[#allocation17 + $0x78] sm:$0xff]
        %v2852 = vld [vmem:[#allocation17 + $0x80] sm:$0xff]
        %v2853 = vld [vmem:[#allocation17 + $0x88] sm:$0xff]
        %v2854 = vld [vmem:[#allocation17 + $0x90] sm:$0xff]
        %v2855 = vld [vmem:[#allocation17 + $0x98] sm:$0xff]
        %v2856 = vld [vmem:[#allocation17 + $0xa0] sm:$0xff]
        %v2857 = vld [vmem:[#allocation17 + $0xa8] sm:$0xff]
        %v2858 = vld [vmem:[#allocation17 + $0xb0] sm:$0xff]
        %v2859 = vld [vmem:[#allocation17 + $0xb8] sm:$0xff]
        %v2860 = vld [vmem:[#allocation17 + $0xc0] sm:$0xff]
        %v2861 = vld [vmem:[#allocation17 + $0xc8] sm:$0xff]
        %v2862 = vld [vmem:[#allocation17 + $0xd0] sm:$0xff]
        %v2863 = vld [vmem:[#allocation17 + $0xd8] sm:$0xff]
        %v2864 = vld [vmem:[#allocation17 + $0xe0] sm:$0xff]
        %v2865 = vld [vmem:[#allocation17 + $0xe8] sm:$0xff]
        %v2866 = vld [vmem:[#allocation17 + $0xf0] sm:$0xff]
        %v2867 = vld [vmem:[#allocation17 + $0xf8] sm:$0xff]
        %v2868 = vld [vmem:[#allocation17 + $0x100] sm:$0xff]
        %v2869 = vld [vmem:[#allocation17 + $0x108] sm:$0xff]
        %v2870 = vld [vmem:[#allocation17 + $0x110] sm:$0xff]
        %v2871 = vld [vmem:[#allocation17 + $0x118] sm:$0xff]
        %v2872 = vld [vmem:[#allocation17 + $0x120] sm:$0xff]
        %v2873 = vld [vmem:[#allocation17 + $0x128] sm:$0xff]
        %v2874 = vld [vmem:[#allocation17 + $0x130] sm:$0xff]
        %v2875 = vld [vmem:[#allocation17 + $0x138] sm:$0xff]
        %v2876 = vld [vmem:[#allocation17 + $0x140] sm:$0xff]
        %v2877 = vld [vmem:[#allocation17 + $0x148] sm:$0xff]
        %v2878 = vld [vmem:[#allocation17 + $0x150] sm:$0xff]
        %v2879 = vld [vmem:[#allocation17 + $0x158] sm:$0xff]
        %v2880 = vld [vmem:[#allocation17 + $0x160] sm:$0xff]
        %v2881 = vld [vmem:[#allocation17 + $0x168] sm:$0xff]
        %v2882 = vld [vmem:[#allocation17 + $0x170] sm:$0xff]
        %v2883 = vld [vmem:[#allocation17 + $0x178] sm:$0xff]
        %v2884 = vld [vmem:[#allocation17 + $0x180] sm:$0xff]
        %v2885 = vld [vmem:[#allocation17 + $0x188] sm:$0xff]
        %v2886 = vld [vmem:[#allocation17 + $0x190] sm:$0xff]
        %v2887 = vld [vmem:[#allocation17 + $0x198] sm:$0xff]
        %v2888 = vld [vmem:[#allocation17 + $0x1a0] sm:$0xff]
        %v2889 = vld [vmem:[#allocation17 + $0x1a8] sm:$0xff]
        %v2890 = vld [vmem:[#allocation17 + $0x1b0] sm:$0xff]
        %v2891 = vld [vmem:[#allocation17 + $0x1b8] sm:$0xff]
        %v2892 = vld [vmem:[#allocation17 + $0x1c0] sm:$0xff]
        %v2893 = vld [vmem:[#allocation17 + $0x1c8] sm:$0xff]
        %v2894 = vld [vmem:[#allocation17 + $0x1d0] sm:$0xff]
        %v2895 = vld [vmem:[#allocation17 + $0x1d8] sm:$0xff]
        %v2896 = vld [vmem:[#allocation17 + $0x1e0] sm:$0xff]
        %v2897 = vld [vmem:[#allocation17 + $0x1e8] sm:$0xff]
        %v2898 = vld [vmem:[#allocation17 + $0x1f0] sm:$0xff]
        %v2899 = vld [vmem:[#allocation17 + $0x1f8] sm:$0xff]
        %v2900 = vld [vmem:[#allocation17 + $0x200] sm:$0xff]
        %v2901 = vld [vmem:[#allocation17 + $0x208] sm:$0xff]
        %v2902 = vld [vmem:[#allocation17 + $0x210] sm:$0xff]
        %v2903 = vld [vmem:[#allocation17 + $0x218] sm:$0xff]
        %v2904 = vld [vmem:[#allocation17 + $0x220] sm:$0xff]
        %v2905 = vld [vmem:[#allocation17 + $0x228] sm:$0xff]
        %v2906 = vld [vmem:[#allocation17 + $0x230] sm:$0xff]
        %v2907 = vld [vmem:[#allocation17 + $0x238] sm:$0xff]
        %v2908 = vld [vmem:[#allocation17 + $0x240] sm:$0xff]
        %v2909 = vld [vmem:[#allocation17 + $0x248] sm:$0xff]
        %v2910 = vld [vmem:[#allocation17 + $0x250] sm:$0xff]
        %v2911 = vld [vmem:[#allocation17 + $0x258] sm:$0xff]
        %v2912 = vld [vmem:[#allocation17 + $0x260] sm:$0xff]
        %v2913 = vld [vmem:[#allocation17 + $0x268] sm:$0xff]
        %v2914 = vld [vmem:[#allocation17 + $0x270] sm:$0xff]
        %v2915 = vld [vmem:[#allocation17 + $0x278] sm:$0xff]
        %v2916 = vld [vmem:[#allocation17 + $0x280] sm:$0xff]
        %v2917 = vld [vmem:[#allocation17 + $0x288] sm:$0xff]
        %v2918 = vld [vmem:[#allocation17 + $0x290] sm:$0xff]
        %v2919 = vld [vmem:[#allocation17 + $0x298] sm:$0xff]
        %v2920 = vld [vmem:[#allocation17 + $0x2a0] sm:$0xff]
        %v2921 = vld [vmem:[#allocation17 + $0x2a8] sm:$0xff]
        %v2922 = vld [vmem:[#allocation17 + $0x2b0] sm:$0xff]
        %v2923 = vld [vmem:[#allocation17 + $0x2b8] sm:$0xff]
        %v2924 = vld [vmem:[#allocation17 + $0x2c0] sm:$0xff]
        %v2925 = vld [vmem:[#allocation17 + $0x2c8] sm:$0xff]
        %v2926 = vld [vmem:[#allocation17 + $0x2d0] sm:$0xff]
        %v2927 = vld [vmem:[#allocation17 + $0x2d8] sm:$0xff]
        %v2928 = vld [vmem:[#allocation17 + $0x2e0] sm:$0xff]
        %v2929 = vld [vmem:[#allocation17 + $0x2e8] sm:$0xff]
        %v2930 = vld [vmem:[#allocation17 + $0x2f0] sm:$0xff]
        %v2931 = vld [vmem:[#allocation17 + $0x2f8] sm:$0xff]
        %v2932 = vld [vmem:[#allocation17 + $0x300] sm:$0xff]
        %v2933 = vld [vmem:[#allocation17 + $0x308] sm:$0xff]
        %v2934 = vld [vmem:[#allocation17 + $0x310] sm:$0xff]
        %v2935 = vld [vmem:[#allocation17 + $0x318] sm:$0xff]
        %v2936 = vld [vmem:[#allocation17 + $0x320] sm:$0xff]
        %v2937 = vld [vmem:[#allocation17 + $0x328] sm:$0xff]
        %v2938 = vld [vmem:[#allocation17 + $0x330] sm:$0xff]
        %v2939 = vld [vmem:[#allocation17 + $0x338] sm:$0xff]
        %v2940 = vld [vmem:[#allocation17 + $0x340] sm:$0xff]
        %v2941 = vld [vmem:[#allocation17 + $0x348] sm:$0xff]
        %v2942 = vld [vmem:[#allocation17 + $0x350] sm:$0xff]
        %v2943 = vld [vmem:[#allocation17 + $0x358] sm:$0xff]
        %v2944 = vld [vmem:[#allocation17 + $0x360] sm:$0xff]
        %v2945 = vld [vmem:[#allocation17 + $0x368] sm:$0xff]
        %v2946 = vld [vmem:[#allocation17 + $0x370] sm:$0xff]
        %v2947 = vld [vmem:[#allocation17 + $0x378] sm:$0xff]
        %v2948 = vld [vmem:[#allocation17 + $0x380] sm:$0xff]
        %v2949 = vld [vmem:[#allocation17 + $0x388] sm:$0xff]
        %v2950 = vld [vmem:[#allocation17 + $0x390] sm:$0xff]
        %v2951 = vld [vmem:[#allocation17 + $0x398] sm:$0xff]
        %v2952 = vld [vmem:[#allocation17 + $0x3a0] sm:$0xff]
        %v2953 = vld [vmem:[#allocation17 + $0x3a8] sm:$0xff]
        %v2954 = vld [vmem:[#allocation17 + $0x3b0] sm:$0xff]
        %v2955 = vld [vmem:[#allocation17 + $0x3b8] sm:$0xff]
        %v2956 = vld [vmem:[#allocation17 + $0x3c0] sm:$0xff]
        %v2957 = vld [vmem:[#allocation17 + $0x3c8] sm:$0xff]
        %v2958 = vld [vmem:[#allocation17 + $0x3d0] sm:$0xff]
        %v2959 = vld [vmem:[#allocation17 + $0x3d8] sm:$0xff]
        %v2960 = vld [vmem:[#allocation17 + $0x3e0] sm:$0xff]
        %v2961 = vld [vmem:[#allocation17 + $0x3e8] sm:$0xff]
        %v2962 = vld [vmem:[#allocation17 + $0x3f0] sm:$0xff]
        %v2963 = vld [vmem:[#allocation17 + $0x3f8] sm:$0xff]
        %v2964 = vld [vmem:[%s23] sm:$0x1]
        %v2966 = vlaneseq
        %v2967 = vshrl.u32 %v2966, 7
        %v2968 = vsub.s32 0, %v2967
        %v2969 = vrot.slane %v2964, %v2968
        %2971 = vmatprep.subr.mxu0 0.0
        %2972 = vmatpush1.msra.mxu0 %v2836
        %2973 = vmatprep.subr.mxu0 0.0
        %2974 = vmatpush1.msra.mxu0 %v2837
        %2975 = vmatprep.subr.mxu0 0.0
        %2976 = vmatpush1.msra.mxu0 %v2838
        %2977 = vmatprep.subr.mxu0 0.0
        %2978 = vmatpush1.msra.mxu0 %v2839
        %2979 = vmatprep.subr.mxu0 0.0
        %2980 = vmatpush1.msra.mxu0 %v2840
        %2981 = vmatprep.subr.mxu0 0.0
        %2982 = vmatpush1.msra.mxu0 %v2841
        %2983 = vmatprep.subr.mxu0 0.0
        %2984 = vmatpush1.msra.mxu0 %v2842
        %2985 = vmatprep.subr.mxu0 0.0
        %2986 = vmatpush1.msra.mxu0 %v2843
        %2987 = vmatprep.subr.mxu0 0.0
        %2988 = vmatpush1.msra.mxu0 %v2844
        %2989 = vmatprep.subr.mxu0 0.0
        %2990 = vmatpush1.msra.mxu0 %v2845
        %2991 = vmatprep.subr.mxu0 0.0
        %2992 = vmatpush1.msra.mxu0 %v2846
        %2993 = vmatprep.subr.mxu0 0.0
        %2994 = vmatpush1.msra.mxu0 %v2847
        %2995 = vmatprep.subr.mxu0 0.0
        %2996 = vmatpush1.msra.mxu0 %v2848
        %2997 = vmatprep.subr.mxu0 0.0
        %2998 = vmatpush1.msra.mxu0 %v2849
        %2999 = vmatprep.subr.mxu0 0.0
        %3000 = vmatpush1.msra.mxu0 %v2850
        %3001 = vmatprep.subr.mxu0 0.0
        %3002 = vmatpush1.msra.mxu0 %v2851
        %3003 = vmatprep.subr.mxu0 0.0
        %3004 = vmatpush1.msra.mxu0 %v2852
        %3005 = vmatprep.subr.mxu0 0.0
        %3006 = vmatpush1.msra.mxu0 %v2853
        %3007 = vmatprep.subr.mxu0 0.0
        %3008 = vmatpush1.msra.mxu0 %v2854
        %3009 = vmatprep.subr.mxu0 0.0
        %3010 = vmatpush1.msra.mxu0 %v2855
        %3011 = vmatprep.subr.mxu0 0.0
        %3012 = vmatpush1.msra.mxu0 %v2856
        %3013 = vmatprep.subr.mxu0 0.0
        %3014 = vmatpush1.msra.mxu0 %v2857
        %3015 = vmatprep.subr.mxu0 0.0
        %3016 = vmatpush1.msra.mxu0 %v2858
        %3017 = vmatprep.subr.mxu0 0.0
        %3018 = vmatpush1.msra.mxu0 %v2859
        %3019 = vmatprep.subr.mxu0 0.0
        %3020 = vmatpush1.msra.mxu0 %v2860
        %3021 = vmatprep.subr.mxu0 0.0
        %3022 = vmatpush1.msra.mxu0 %v2861
        %3023 = vmatprep.subr.mxu0 0.0
        %3024 = vmatpush1.msra.mxu0 %v2862
        %3025 = vmatprep.subr.mxu0 0.0
        %3026 = vmatpush1.msra.mxu0 %v2863
        %3027 = vmatprep.subr.mxu0 0.0
        %3028 = vmatpush1.msra.mxu0 %v2864
        %3029 = vmatprep.subr.mxu0 0.0
        %3030 = vmatpush1.msra.mxu0 %v2865
        %3031 = vmatprep.subr.mxu0 0.0
        %3032 = vmatpush1.msra.mxu0 %v2866
        %3033 = vmatprep.subr.mxu0 0.0
        %3034 = vmatpush1.msra.mxu0 %v2867
        %3035 = vmatprep.mubr.f32.mxu0 %v2821
        %3036 = vmatmul.mubr.f32.gmra.mrb[0].mxu0 %v2820
        %v3037 = vpop.f32.mrb[0].mxu0
        %v3038 = vadd.f32 %v2969, %v3037
        %v3039 = vpop.f32.mrb[0].mxu0
        %3040 = vdwg.mxu0
        %3041 = vmatprep.subr.mxu0 0.0
        %3042 = vmatpush1.msra.mxu0 %v2868
        %3043 = vmatprep.subr.mxu0 0.0
        %3044 = vmatpush1.msra.mxu0 %v2869
        %3045 = vmatprep.subr.mxu0 0.0
        %3046 = vmatpush1.msra.mxu0 %v2870
        %3047 = vmatprep.subr.mxu0 0.0
        %3048 = vmatpush1.msra.mxu0 %v2871
        %3049 = vmatprep.subr.mxu0 0.0
        %3050 = vmatpush1.msra.mxu0 %v2872
        %3051 = vmatprep.subr.mxu0 0.0
        %3052 = vmatpush1.msra.mxu0 %v2873
        %3053 = vmatprep.subr.mxu0 0.0
        %3054 = vmatpush1.msra.mxu0 %v2874
        %3055 = vmatprep.subr.mxu0 0.0
        %3056 = vmatpush1.msra.mxu0 %v2875
        %3057 = vmatprep.subr.mxu0 0.0
        %3058 = vmatpush1.msra.mxu0 %v2876
        %3059 = vmatprep.subr.mxu0 0.0
        %3060 = vmatpush1.msra.mxu0 %v2877
        %3061 = vmatprep.subr.mxu0 0.0
        %3062 = vmatpush1.msra.mxu0 %v2878
        %3063 = vmatprep.subr.mxu0 0.0
        %3064 = vmatpush1.msra.mxu0 %v2879
        %3065 = vmatprep.subr.mxu0 0.0
        %3066 = vmatpush1.msra.mxu0 %v2880
        %3067 = vmatprep.subr.mxu0 0.0
        %3068 = vmatpush1.msra.mxu0 %v2881
        %3069 = vmatprep.subr.mxu0 0.0
        %3070 = vmatpush1.msra.mxu0 %v2882
        %3071 = vmatprep.subr.mxu0 0.0
        %3072 = vmatpush1.msra.mxu0 %v2883
        %3073 = vmatprep.subr.mxu0 0.0
        %3074 = vmatpush1.msra.mxu0 %v2884
        %3075 = vmatprep.subr.mxu0 0.0
        %3076 = vmatpush1.msra.mxu0 %v2885
        %3077 = vmatprep.subr.mxu0 0.0
        %3078 = vmatpush1.msra.mxu0 %v2886
        %3079 = vmatprep.subr.mxu0 0.0
        %3080 = vmatpush1.msra.mxu0 %v2887
        %3081 = vmatprep.subr.mxu0 0.0
        %3082 = vmatpush1.msra.mxu0 %v2888
        %3083 = vmatprep.subr.mxu0 0.0
        %3084 = vmatpush1.msra.mxu0 %v2889
        %3085 = vmatprep.subr.mxu0 0.0
        %3086 = vmatpush1.msra.mxu0 %v2890
        %3087 = vmatprep.subr.mxu0 0.0
        %3088 = vmatpush1.msra.mxu0 %v2891
        %3089 = vmatprep.subr.mxu0 0.0
        %3090 = vmatpush1.msra.mxu0 %v2892
        %3091 = vmatprep.subr.mxu0 0.0
        %3092 = vmatpush1.msra.mxu0 %v2893
        %3093 = vmatprep.subr.mxu0 0.0
        %3094 = vmatpush1.msra.mxu0 %v2894
        %3095 = vmatprep.subr.mxu0 0.0
        %3096 = vmatpush1.msra.mxu0 %v2895
        %3097 = vmatprep.subr.mxu0 0.0
        %3098 = vmatpush1.msra.mxu0 %v2896
        %3099 = vmatprep.subr.mxu0 0.0
        %3100 = vmatpush1.msra.mxu0 %v2897
        %3101 = vmatprep.subr.mxu0 0.0
        %3102 = vmatpush1.msra.mxu0 %v2898
        %3103 = vmatprep.subr.mxu0 0.0
        %3104 = vmatpush1.msra.mxu0 %v2899
        %3105 = vmatprep.mubr.f32.mxu0 %v2823
        %3106 = vmatmul.mubr.f32.gmra.mrb[0].mxu0 %v2822
        %v3107 = vpop.f32.mrb[0].mxu0
        %v3108 = vadd.f32 %v3038, %v3107
        %v3109 = vpop.f32.mrb[0].mxu0
        %3110 = vdwg.mxu0
        %3111 = vmatprep.subr.mxu0 0.0
        %3112 = vmatpush1.msra.mxu0 %v2900
        %3113 = vmatprep.subr.mxu0 0.0
        %3114 = vmatpush1.msra.mxu0 %v2901
        %3115 = vmatprep.subr.mxu0 0.0
        %3116 = vmatpush1.msra.mxu0 %v2902
        %3117 = vmatprep.subr.mxu0 0.0
        %3118 = vmatpush1.msra.mxu0 %v2903
        %3119 = vmatprep.subr.mxu0 0.0
        %3120 = vmatpush1.msra.mxu0 %v2904
        %3121 = vmatprep.subr.mxu0 0.0
        %3122 = vmatpush1.msra.mxu0 %v2905
        %3123 = vmatprep.subr.mxu0 0.0
        %3124 = vmatpush1.msra.mxu0 %v2906
        %3125 = vmatprep.subr.mxu0 0.0
        %3126 = vmatpush1.msra.mxu0 %v2907
        %3127 = vmatprep.subr.mxu0 0.0
        %3128 = vmatpush1.msra.mxu0 %v2908
        %3129 = vmatprep.subr.mxu0 0.0
        %3130 = vmatpush1.msra.mxu0 %v2909
        %3131 = vmatprep.subr.mxu0 0.0
        %3132 = vmatpush1.msra.mxu0 %v2910
        %3133 = vmatprep.subr.mxu0 0.0
        %3134 = vmatpush1.msra.mxu0 %v2911
        %3135 = vmatprep.subr.mxu0 0.0
        %3136 = vmatpush1.msra.mxu0 %v2912
        %3137 = vmatprep.subr.mxu0 0.0
        %3138 = vmatpush1.msra.mxu0 %v2913
        %3139 = vmatprep.subr.mxu0 0.0
        %3140 = vmatpush1.msra.mxu0 %v2914
        %3141 = vmatprep.subr.mxu0 0.0
        %3142 = vmatpush1.msra.mxu0 %v2915
        %3143 = vmatprep.subr.mxu0 0.0
        %3144 = vmatpush1.msra.mxu0 %v2916
        %3145 = vmatprep.subr.mxu0 0.0
        %3146 = vmatpush1.msra.mxu0 %v2917
        %3147 = vmatprep.subr.mxu0 0.0
        %3148 = vmatpush1.msra.mxu0 %v2918
        %3149 = vmatprep.subr.mxu0 0.0
        %3150 = vmatpush1.msra.mxu0 %v2919
        %3151 = vmatprep.subr.mxu0 0.0
        %3152 = vmatpush1.msra.mxu0 %v2920
        %3153 = vmatprep.subr.mxu0 0.0
        %3154 = vmatpush1.msra.mxu0 %v2921
        %3155 = vmatprep.subr.mxu0 0.0
        %3156 = vmatpush1.msra.mxu0 %v2922
        %3157 = vmatprep.subr.mxu0 0.0
        %3158 = vmatpush1.msra.mxu0 %v2923
        %3159 = vmatprep.subr.mxu0 0.0
        %3160 = vmatpush1.msra.mxu0 %v2924
        %3161 = vmatprep.subr.mxu0 0.0
        %3162 = vmatpush1.msra.mxu0 %v2925
        %3163 = vmatprep.subr.mxu0 0.0
        %3164 = vmatpush1.msra.mxu0 %v2926
        %3165 = vmatprep.subr.mxu0 0.0
        %3166 = vmatpush1.msra.mxu0 %v2927
        %3167 = vmatprep.subr.mxu0 0.0
        %3168 = vmatpush1.msra.mxu0 %v2928
        %3169 = vmatprep.subr.mxu0 0.0
        %3170 = vmatpush1.msra.mxu0 %v2929
        %3171 = vmatprep.subr.mxu0 0.0
        %3172 = vmatpush1.msra.mxu0 %v2930
        %3173 = vmatprep.subr.mxu0 0.0
        %3174 = vmatpush1.msra.mxu0 %v2931
        %3175 = vmatprep.mubr.f32.mxu0 %v2825
        %3176 = vmatmul.mubr.f32.gmra.mrb[0].mxu0 %v2824
        %v3177 = vpop.f32.mrb[0].mxu0
        %v3178 = vadd.f32 %v3108, %v3177
        %v3179 = vpop.f32.mrb[0].mxu0
        %3180 = vdwg.mxu0
        %3181 = vmatprep.subr.mxu0 0.0
        %3182 = vmatpush1.msra.mxu0 %v2932
        %3183 = vmatprep.subr.mxu0 0.0
        %3184 = vmatpush1.msra.mxu0 %v2933
        %3185 = vmatprep.subr.mxu0 0.0
        %3186 = vmatpush1.msra.mxu0 %v2934
        %3187 = vmatprep.subr.mxu0 0.0
        %3188 = vmatpush1.msra.mxu0 %v2935
        %3189 = vmatprep.subr.mxu0 0.0
        %3190 = vmatpush1.msra.mxu0 %v2936
        %3191 = vmatprep.subr.mxu0 0.0
        %3192 = vmatpush1.msra.mxu0 %v2937
        %3193 = vmatprep.subr.mxu0 0.0
        %3194 = vmatpush1.msra.mxu0 %v2938
        %3195 = vmatprep.subr.mxu0 0.0
        %3196 = vmatpush1.msra.mxu0 %v2939
        %3197 = vmatprep.subr.mxu0 0.0
        %3198 = vmatpush1.msra.mxu0 %v2940
        %3199 = vmatprep.subr.mxu0 0.0
        %3200 = vmatpush1.msra.mxu0 %v2941
        %3201 = vmatprep.subr.mxu0 0.0
        %3202 = vmatpush1.msra.mxu0 %v2942
        %3203 = vmatprep.subr.mxu0 0.0
        %3204 = vmatpush1.msra.mxu0 %v2943
        %3205 = vmatprep.subr.mxu0 0.0
        %3206 = vmatpush1.msra.mxu0 %v2944
        %3207 = vmatprep.subr.mxu0 0.0
        %3208 = vmatpush1.msra.mxu0 %v2945
        %3209 = vmatprep.subr.mxu0 0.0
        %3210 = vmatpush1.msra.mxu0 %v2946
        %3211 = vmatprep.subr.mxu0 0.0
        %3212 = vmatpush1.msra.mxu0 %v2947
        %3213 = vmatprep.subr.mxu0 0.0
        %3214 = vmatpush1.msra.mxu0 %v2948
        %3215 = vmatprep.subr.mxu0 0.0
        %3216 = vmatpush1.msra.mxu0 %v2949
        %3217 = vmatprep.subr.mxu0 0.0
        %3218 = vmatpush1.msra.mxu0 %v2950
        %3219 = vmatprep.subr.mxu0 0.0
        %3220 = vmatpush1.msra.mxu0 %v2951
        %3221 = vmatprep.subr.mxu0 0.0
        %3222 = vmatpush1.msra.mxu0 %v2952
        %3223 = vmatprep.subr.mxu0 0.0
        %3224 = vmatpush1.msra.mxu0 %v2953
        %3225 = vmatprep.subr.mxu0 0.0
        %3226 = vmatpush1.msra.mxu0 %v2954
        %3227 = vmatprep.subr.mxu0 0.0
        %3228 = vmatpush1.msra.mxu0 %v2955
        %3229 = vmatprep.subr.mxu0 0.0
        %3230 = vmatpush1.msra.mxu0 %v2956
        %3231 = vmatprep.subr.mxu0 0.0
        %3232 = vmatpush1.msra.mxu0 %v2957
        %3233 = vmatprep.subr.mxu0 0.0
        %3234 = vmatpush1.msra.mxu0 %v2958
        %3235 = vmatprep.subr.mxu0 0.0
        %3236 = vmatpush1.msra.mxu0 %v2959
        %3237 = vmatprep.subr.mxu0 0.0
        %3238 = vmatpush1.msra.mxu0 %v2960
        %3239 = vmatprep.subr.mxu0 0.0
        %3240 = vmatpush1.msra.mxu0 %v2961
        %3241 = vmatprep.subr.mxu0 0.0
        %3242 = vmatpush1.msra.mxu0 %v2962
        %3243 = vmatprep.subr.mxu0 0.0
        %3244 = vmatpush1.msra.mxu0 %v2963
        %3245 = vmatprep.mubr.f32.mxu0 %v2827
        %3246 = vmatmul.mubr.f32.gmra.mrb[0].mxu0 %v2826
        %v3247 = vpop.f32.mrb[0].mxu0
        %v3248 = vadd.f32 %v3178, %v3247
        %v3249 = vpop.f32.mrb[0].mxu0
        %3250 = vdwg.mxu0
        %3251 = vst [vmem:[%s1008] sm:$0xff] %v3248
        %s3252 = sand.u32 %s591, 1
        %s3253 = scalar_lea.sflag [#allocation4], %s3252
        %s3254 = sand.u32 %s591, 1
        %s3255 = smul.addr %s3254, 8
        %s3256 = scalar_lea.vmem [#allocation19], %s3255
        %s3257 = sand.u32 %s54, 1
        %s3258 = scalar_lea.sflag [#allocation21], %s3257
        %s3259 = sand.u32 %s617, 1
        %s3260 = smul.addr %s3259, 8
        %s3261 = scalar_lea.vmem [#allocation20], %s3260
        %s3262 = sand.u32 %s54, 1
        %s3263 = scalar_lea.sflag [#allocation21], %s3262
        %s3264 = sand.u32 %s643, 1
        %s3265 = smul.addr %s3264, 64
        %s3266 = scalar_lea.vmem [#allocation22], %s3265
        // Predicated region
        $region157: #{tpu_custom_call.1} parent=115 // pred_check
          %p3267 = pneg %p601
        $region158: #{tpu_custom_call.1} parent=115 // pred_check_branch
          %3269 = sbr.rel (%p3267) target = $region160
        $region159: #{tpu_custom_call.1} parent=115 // pred_region
          %s3271 = ssub.s32 128, 128
          %3272 = vsyncadd %s3253, %s3271
          %s3273 = smul.addr %s54, 128
          %s3274 = scalar_lea.hbm %s24, %s3273
          %s3276 = sshll.u32 %s3256, 4
          %s3277 = int_to_ptr.vmem [resolvable:$true] %s3276
          %3279 = dma.vmem_to_hbm [thread:$0]  %s3277, 128, %s3274, %s3253
        $region160: #{tpu_custom_call.1} parent=115 // pred_fallthru
          _
        // Predicated region
        $region161: #{tpu_custom_call.1} parent=115 // pred_check
          %p3280 = pneg %p627
        $region162: #{tpu_custom_call.1} parent=115 // pred_check_branch
          %3282 = sbr.rel (%p3280) target = $region164
        $region163: #{tpu_custom_call.1} parent=115 // pred_region
          %s3284 = ssub.s32 128, 128
          %3285 = vsyncadd %s3258, %s3284
          %s3286 = smul.addr %s54, 128
          %s3287 = scalar_lea.hbm %s25, %s3286
          %s3289 = sshll.u32 %s3261, 4
          %s3290 = int_to_ptr.vmem [resolvable:$true] %s3289
          %3292 = dma.vmem_to_hbm [thread:$0]  %s3290, 128, %s3287, %s3258
        $region164: #{tpu_custom_call.1} parent=115 // pred_fallthru
          _
        // Predicated region
        $region165: #{tpu_custom_call.1} parent=115 // pred_check
          %p3293 = pneg %p653
        $region166: #{tpu_custom_call.1} parent=115 // pred_check_branch
          %3295 = sbr.rel (%p3293) target = $region168
        $region167: #{tpu_custom_call.1} parent=115 // pred_region
          %s3297 = ssub.s32 1024, 1024
          %3298 = vsyncadd %s3263, %s3297
          %s3299 = smul.addr %s54, 8
          %s3300 = smul.addr %s3299, 128
          %s3301 = scalar_lea.hbm %s26, %s3300
          %s3303 = sshll.u32 %s3266, 4
          %s3304 = int_to_ptr.vmem [resolvable:$true] %s3303
          %3306 = dma.vmem_to_hbm [thread:$0]  %s3304, 1024, %s3301, %s3263
        $region168: #{tpu_custom_call.1} parent=115 // pred_fallthru
          _
      $region116: #{tpu_custom_call.1} parent=5 // pred_fallthru
        _
      %p3307 = scmp.le.s32.totalorder 2, %s49
      // Predicated region
      $region169: #{tpu_custom_call.1} parent=5 // pred_check
        %p3308 = pneg %p3307
      $region170: #{tpu_custom_call.1} parent=5 // pred_check_branch
        %3310 = sbr.rel (%p3308) target = $region172
      $region171: #{tpu_custom_call.1} parent=5 // pred_region
        %s3311 = ssub.s32 %s49, 2
        // Predicated region
        $region173: #{tpu_custom_call.1} parent=171 // pred_check
          %p3312 = pneg %p607
        $region174: #{tpu_custom_call.1} parent=171 // pred_check_branch
          %3314 = sbr.rel (%p3312) target = $region176
        $region175: #{tpu_custom_call.1} parent=171 // pred_region
          %s3315 = sand.u32 %s592, 1
          %s3316 = scalar_lea.sflag [#allocation4], %s3315
          %s3317 = sand.u32 %s592, 1
          %s3318 = smul.addr %s3317, 8
          %s3319 = scalar_lea.vmem [#allocation19], %s3318
          %3320 = dma.done %s3316, 128
        $region176: #{tpu_custom_call.1} parent=171 // pred_fallthru
          _
        // Predicated region
        $region177: #{tpu_custom_call.1} parent=171 // pred_check
          %p3321 = pneg %p633
        $region178: #{tpu_custom_call.1} parent=171 // pred_check_branch
          %3323 = sbr.rel (%p3321) target = $region180
        $region179: #{tpu_custom_call.1} parent=171 // pred_region
          %s3324 = sand.u32 %s55, 1
          %s3325 = scalar_lea.sflag [#allocation21], %s3324
          %s3326 = sand.u32 %s618, 1
          %s3327 = smul.addr %s3326, 8
          %s3328 = scalar_lea.vmem [#allocation20], %s3327
          %3329 = dma.done %s3325, 128
        $region180: #{tpu_custom_call.1} parent=171 // pred_fallthru
          _
        // Predicated region
        $region181: #{tpu_custom_call.1} parent=171 // pred_check
          %p3330 = pneg %p659
        $region182: #{tpu_custom_call.1} parent=171 // pred_check_branch
          %3332 = sbr.rel (%p3330) target = $region184
        $region183: #{tpu_custom_call.1} parent=171 // pred_region
          %s3333 = sand.u32 %s55, 1
          %s3334 = scalar_lea.sflag [#allocation21], %s3333
          %s3335 = sand.u32 %s644, 1
          %s3336 = smul.addr %s3335, 64
          %s3337 = scalar_lea.vmem [#allocation22], %s3336
          %3338 = dma.done %s3334, 1024
        $region184: #{tpu_custom_call.1} parent=171 // pred_fallthru
          _
      $region172: #{tpu_custom_call.1} parent=5 // pred_fallthru
        _
    $region6: #{tpu_custom_call.1} parent=1 // loop_footer
      %s53 = sadd.s32 1, %s49
    $region7: #{tpu_custom_call.1} parent=1 // loop_footer_branch
      %48 = sbr.rel target = $region3
    $region8: #{tpu_custom_call.1} parent=1 // loop_exit
      _
    %3339 = vsyncpa [#allocation3], 1
    %s3340 = scalar_lea.sflag [#allocation3], 1
    %3341 = vsyncpa %s3340, 1
    %3342 = vsyncpa [#allocation6], 1
    %s3343 = scalar_lea.sflag [#allocation6], 1
    %3344 = vsyncpa %s3343, 1
    %3345 = vsyncpa [#allocation9], 1
    %3346 = vsyncpa [#allocation12], 1
    %3347 = vsyncpa [#allocation15], 1
    %3348 = vsyncpa [#allocation18], 1
    %3349 = vsyncpa [#allocation4], 1
    %s3350 = scalar_lea.sflag [#allocation4], 1
    %3351 = vsyncpa %s3350, 1
    %3352 = vsyncpa [#allocation21], 1
    %s3353 = scalar_lea.sflag [#allocation21], 1
    %3354 = vsyncpa %s3353, 1

</llo_original>
